<compile_context>
chip_gen: v7x
topology: tpu7x:2x2x1
jax: 0.10.0
libtpu: 0.0.40
codegen_flags: <defaults>
</compile_context>

<pallas_src>
import functools

import jax
import jax.numpy as jnp
from jax.experimental import pallas as pl
from jax.experimental.pallas import tpu as pltpu

EPS = 1e-5
LANES = 128
ROW_TARGET = 2048                      # ~1 MB f32 output block at 128 lanes
VMEM_LIMIT = 48 * 1024 * 1024          # safe on v5e/v6e (128 MiB) and v7x (64 MiB)


def _round_up(n, m):
    return (n + m - 1) // m * m


def _divisor(n, target):
    """Largest divisor of n that is <= target (>= 1)."""
    t = max(1, min(n, target))
    while n % t:
        t -= 1
    return t


def _row_tile(m, target=ROW_TARGET):
    """Row tile for an (M, C) grid.

    Prefers a multiple of 8 that divides m (no partial tail block); otherwise
    caps at `target` rounded down to 8 and relies on Pallas masking the last
    (partial) block of a cdiv grid.  Never returns the whole array for large
    non-divisible m (perf-review fix).
    """
    if m <= target:
        return m
    for t in range(min(target, m) // 8 * 8, 7, -8):
        if m % t == 0:
            return t
    return max(8, min(target, m) // 8 * 8)


# ----------------------------------------------------------------------------
# Kernel 1: strided 1x1 conv(s) as one MXU matmul + packed BN statistics.
#           When `fused`, the weight is [w_conv1 | w_downsample] along Cout and
#           the two results go to separate lane-dense bf16 outputs.
# ----------------------------------------------------------------------------
def _conv1x1_kernel(x_ref, w_ref, *out_refs, fused):
    if fused:
        y1_ref, sc_ref, st_ref = out_refs
    else:
        y1_ref, st_ref = out_refs
        sc_ref = None
    _, th, _, wo, cin = x_ref.shape
    c = y1_ref.shape[-1]

    x = x_ref[...].reshape(th * wo, cin)                          # bf16
    y = jnp.dot(x, w_ref[...], preferred_element_type=jnp.float32)

    y1_ref[...] = y[:, :c].reshape(1, th, wo, c).astype(y1_ref.dtype)
    if fused:
        sc_ref[...] = y[:, c:].reshape(1, th, wo, c).astype(sc_ref.dtype)

    # Packed per-tile BN statistics: row 0 = sum, row 1 = sum of squares (f32).
    st_ref[0, 0, 0:1, :] = jnp.sum(y, axis=0, keepdims=True)
    st_ref[0, 0, 1:2, :] = jnp.sum(y * y, axis=0, keepdims=True)


def conv1x1_strided(x_pad, w, stride, ho, wo, c_out, fused):
    """x_pad: (N, ho*stride, wo*stride, cin) bf16;  w: (cin, c_out or 2*c_out) bf16."""
    n, _, _, cin = x_pad.shape
    wtot = w.shape[1]
    # Free reshape that folds the stride into the block index map:
    #   element (b, i, a, j, p*cin + c) == x_pad[b, i*stride + a, j*stride + p, c]
    # The BlockSpec only ever selects a == 0 and the first `cin` lanes (p == 0),
    # i.e. exactly the strided sample — no HBM copy of the subsampled tensor.
    x5 = x_pad.reshape(n, ho, stride, wo, stride * cin)

    th = _divisor(ho, max(1, ROW_TARGET // max(wo, 1)))
    nt = ho // th

    out_shape = [jax.ShapeDtypeStruct((n, ho, wo, c_out), jnp.bfloat16)]
    out_specs = [pl.BlockSpec((1, th, wo, c_out), lambda i, j: (i, j, 0, 0))]
    if fused:
        out_shape.append(jax.ShapeDtypeStruct((n, ho, wo, c_out), jnp.bfloat16))
        out_specs.append(pl.BlockSpec((1, th, wo, c_out), lambda i, j: (i, j, 0, 0)))
    out_shape.append(jax.ShapeDtypeStruct((n, nt, 2, wtot), jnp.float32))
    out_specs.append(pl.BlockSpec((1, 1, 2, wtot), lambda i, j: (i, j, 0, 0)))

    return pl.pallas_call(
        functools.partial(_conv1x1_kernel, fused=fused),
        out_shape=tuple(out_shape),
        grid=(n, nt),
        in_specs=[
            pl.BlockSpec((1, th, 1, wo, cin), lambda i, j: (i, j, 0, 0, 0)),
            pl.BlockSpec((cin, wtot), lambda i, j: (0, 0)),
        ],
        out_specs=tuple(out_specs),
        # TODO(synk): switch to pltpu.CORE_PARALLEL on the batch axis if v7x
        #             profiling shows the second TensorCore idle.
        compiler_params=pltpu.CompilerParams(
            dimension_semantics=("parallel", "parallel"),
            vmem_limit_bytes=VMEM_LIMIT),
    )(x5, w)


# ----------------------------------------------------------------------------
# Kernel 2: fused bn1 -> relu -> conv2 (3x3, stride 1, pad 1) as 9 accumulated
#           shifted-view matmuls (no im2col scratch) + packed BN2 statistics.
# ----------------------------------------------------------------------------
def _bn_relu_conv3x3_kernel(y1_ref, s1_ref, b1_ref, w2_ref,
                            y2_ref, st_ref, apad_ref, acc_ref):
    hp2, wp2, c = apad_ref.shape
    h, w = hp2 - 2, wp2 - 2

    # Zero only the 1-wide border; the interior is fully overwritten below.
    apad_ref[0:1, :, :] = jnp.zeros((1, wp2, c), jnp.float32)
    apad_ref[h + 1:h + 2, :, :] = jnp.zeros((1, wp2, c), jnp.float32)
    apad_ref[:, 0:1, :] = jnp.zeros((hp2, 1, c), jnp.float32)
    apad_ref[:, w + 1:w + 2, :] = jnp.zeros((hp2, 1, c), jnp.float32)

    # bn1 + relu into the padded interior (f32).
    a = jnp.maximum(y1_ref[0].astype(jnp.float32) * s1_ref[...] + b1_ref[...], 0.0)
    apad_ref[1:h + 1, 1:w + 1, :] = a

    # 3x3 conv = 9 accumulated K=C matmuls over shifted views (MXU, f32 acc).
    acc_ref[...] = jnp.zeros_like(acc_ref)
    for kh in range(3):
        for kw in range(3):
            patch = apad_ref[kh:kh + h, kw:kw + w, :].reshape(h * w, c)
            acc_ref[...] += jnp.dot(patch.astype(jnp.bfloat16),
                                    w2_ref[kh, kw, :, :],
                                    preferred_element_type=jnp.float32)

    y2 = acc_ref[...]
    y2_ref[0] = y2.reshape(h, w, c).astype(y2_ref.dtype)
    st_ref[0, 0:1, :] = jnp.sum(y2, axis=0, keepdims=True)
    st_ref[0, 1:2, :] = jnp.sum(y2 * y2, axis=0, keepdims=True)


def bn_relu_conv3x3(y1, s1, b1, w2):
    n, h, w, c = y1.shape
    # TODO(synk): for very large H*W, tile spatially (grid (N, H//th) with a
    #             1-row halo) to shrink the per-step VMEM footprint on v7x.
    return pl.pallas_call(
        _bn_relu_conv3x3_kernel,
        out_shape=(jax.ShapeDtypeStruct((n, h, w, c), jnp.bfloat16),
                   jax.ShapeDtypeStruct((n, 2, c), jnp.float32)),
        grid=(n,),
        in_specs=[
            pl.BlockSpec((1, h, w, c), lambda i: (i, 0, 0, 0)),
            pl.BlockSpec((1, c), lambda i: (0, 0)),
            pl.BlockSpec((1, c), lambda i: (0, 0)),
            pl.BlockSpec((3, 3, c, c), lambda i: (0, 0, 0, 0)),
        ],
        out_specs=(pl.BlockSpec((1, h, w, c), lambda i: (i, 0, 0, 0)),
                   pl.BlockSpec((1, 2, c), lambda i: (i, 0, 0))),
        scratch_shapes=[pltpu.VMEM((h + 2, w + 2, c), jnp.float32),
                        pltpu.VMEM((h * w, c), jnp.float32)],
        compiler_params=pltpu.CompilerParams(
            dimension_semantics=("parallel",),
            vmem_limit_bytes=VMEM_LIMIT),
    )(y1, s1, b1, w2)


# ----------------------------------------------------------------------------
# Kernel 3: fused bn2 -> relu -> (+ shortcut affine), flat lane-dense (M, C).
# ----------------------------------------------------------------------------
def _bn_relu_add_kernel(y2_ref, sc_ref, s2_ref, b2_ref, ss_ref, bs_ref, o_ref):
    main = jnp.maximum(
        y2_ref[...].astype(jnp.float32) * s2_ref[...] + b2_ref[...], 0.0)
    sc = sc_ref[...].astype(jnp.float32)
    o_ref[...] = main + sc * ss_ref[...] + bs_ref[...]


def bn_relu_add(y2f, scf, s2, b2, ss, bs):
    m, c = y2f.shape
    tm = _row_tile(m)
    return pl.pallas_call(
        _bn_relu_add_kernel,
        out_shape=jax.ShapeDtypeStruct((m, c), jnp.float32),
        grid=(pl.cdiv(m, tm),),
        in_specs=[
            pl.BlockSpec((tm, c), lambda i: (i, 0)),
            pl.BlockSpec((tm, c), lambda i: (i, 0)),
            pl.BlockSpec((1, c), lambda i: (0, 0)),
            pl.BlockSpec((1, c), lambda i: (0, 0)),
            pl.BlockSpec((1, c), lambda i: (0, 0)),
            pl.BlockSpec((1, c), lambda i: (0, 0)),
        ],
        out_specs=pl.BlockSpec((tm, c), lambda i: (i, 0)),
        compiler_params=pltpu.CompilerParams(
            dimension_semantics=("parallel",),
            vmem_limit_bytes=VMEM_LIMIT),
    )(y2f, scf, s2, b2, ss, bs)


# ----------------------------------------------------------------------------
# Fold packed per-tile [sum; sumsq] stats into per-channel BN scale/bias (tiny JAX)
# ----------------------------------------------------------------------------
def _fold_bn(stats, count, gamma, beta, eps=EPS):
    c = stats.shape[-1]
    flat = stats.reshape(-1, 2, c)
    s = jnp.sum(flat[:, 0, :], axis=0)
    q = jnp.sum(flat[:, 1, :], axis=0)
    mean = s / count
    # TODO(synk): E[x^2]-E[x]^2 in f32 is cancellation-prone at very large M;
    #             use a shifted / two-pass variance at production scale.
    var = jnp.maximum(q / count - mean * mean, 0.0)   # biased, like train-mode BN
    scale = gamma / jnp.sqrt(var + eps)
    bias = beta - mean * scale
    return scale.reshape(1, c), bias.reshape(1, c)


def _pad_vec(v, c):
    return jnp.pad(v.astype(jnp.float32), (0, c - v.shape[0]))


def _pad_mat(w, r, c):
    return jnp.pad(w, ((0, r - w.shape[0]), (0, c - w.shape[1]))).astype(jnp.bfloat16)


# ----------------------------------------------------------------------------
# Full BasicBlock forward
# ----------------------------------------------------------------------------
@functools.partial(jax.jit, static_argnames=("stride", "down_sample"))
def basic_block_forward(x_nchw, params, stride, down_sample):
    n, cin, h, w = x_nchw.shape
    cout = params["conv1_w"].shape[0]
    cpi = _round_up(cin, LANES)
    cpo = _round_up(cout, LANES)

    # NCHW -> NHWC, channel-pad to the lane width, bf16 activations for the MXU.
    x_nhwc = jnp.transpose(x_nchw, (0, 2, 3, 1))
    x_pad = jnp.pad(x_nhwc, ((0, 0), (0, 0), (0, 0), (0, cpi - cin))
                    ).astype(jnp.bfloat16)

    ho = (h - 1) // stride + 1
    wo = (w - 1) // stride + 1
    m = n * ho * wo

    # conv1/down weights (Cout, Cin, 1, 1) -> (cpi, cpo); conv2 (O, I, 3, 3) -> (3,3,cpo,cpo)
    w1 = _pad_mat(jnp.transpose(params["conv1_w"][:, :, 0, 0], (1, 0)), cpi, cpo)
    w2 = jnp.transpose(params["conv2_w"], (2, 3, 1, 0))
    w2 = jnp.pad(w2, ((0, 0), (0, 0), (0, cpo - cout), (0, cpo - cout))
                 ).astype(jnp.bfloat16)
    g1, be1 = _pad_vec(params["bn1_g"], cpo), _pad_vec(params["bn1_b"], cpo)
    g2, be2 = _pad_vec(params["bn2_g"], cpo), _pad_vec(params["bn2_b"], cpo)

    # Pad H/W up to a multiple of the stride (no-op when already divisible);
    # the padded rows/cols are never sampled by the strided 1x1 conv.
    hs, ws = ho * stride, wo * stride
    x_in = x_pad
    if (hs, ws) != (h, w):
        x_in = jnp.pad(x_pad, ((0, 0), (0, hs - h), (0, ws - w), (0, 0)))

    if down_sample:
        wd = _pad_mat(jnp.transpose(params["down_conv_w"][:, :, 0, 0], (1, 0)),
                      cpi, cpo)
        y1, sc, st = conv1x1_strided(x_in, jnp.concatenate([w1, wd], axis=1),
                                     stride, ho, wo, cpo, fused=True)
        s1, b1 = _fold_bn(st[..., :cpo], m, g1, be1)
        ssc, bsc = _fold_bn(st[..., cpo:], m,
                            _pad_vec(params["down_bn_g"], cpo),
                            _pad_vec(params["down_bn_b"], cpo))
        sc_flat = sc.reshape(m, cpo)
    else:
        assert stride == 1 and cin == cout, (
            "identity shortcut requires stride == 1 and in_channels == out_channels")
        y1, st = conv1x1_strided(x_in, w1, stride, ho, wo, cpo, fused=False)
        s1, b1 = _fold_bn(st, m, g1, be1)
        sc_flat = x_pad.reshape(m, cpi)      # bf16 identity shortcut (~1e-3 rel err)
        ssc = jnp.ones((1, cpo), jnp.float32)
        bsc = jnp.zeros((1, cpo), jnp.float32)

    y2, st2 = bn_relu_conv3x3(y1, s1, b1, w2)
    s2, b2 = _fold_bn(st2, m, g2, be2)

    out = bn_relu_add(y2.reshape(m, cpo), sc_flat, s2, b2, ssc, bsc)   # (M, cpo) f32
    out = out.reshape(n, ho, wo, cpo)[..., :cout]
    return jnp.transpose(out, (0, 3, 1, 2))                            # -> NCHW


# ----------------------------------------------------------------------------
# Pure-JAX reference (NCHW, f32 lax conv) for the correctness check
# ----------------------------------------------------------------------------
def reference_forward(x, params, stride, down_sample, eps=EPS):
    def conv(x, w, s, pad):
        return jax.lax.conv_general_dilated(
            x, w, (s, s), pad, dimension_numbers=("NCHW", "OIHW", "NCHW"))

    def bn(y, g, b):
        mean = jnp.mean(y, axis=(0, 2, 3), keepdims=True)
        var = jnp.var(y, axis=(0, 2, 3), keepdims=True)
        return ((y - mean) / jnp.sqrt(var + eps) * g.reshape(1, -1, 1, 1)
                + b.reshape(1, -1, 1, 1))

    y = jax.nn.relu(bn(conv(x, params["conv1_w"], stride, "VALID"),
                       params["bn1_g"], params["bn1_b"]))
    y = jax.nn.relu(bn(conv(y, params["conv2_w"], 1, ((1, 1), (1, 1))),
                       params["bn2_g"], params["bn2_b"]))
    if down_sample:
        sc = bn(conv(x, params["down_conv_w"], stride, "VALID"),
                params["down_bn_g"], params["down_bn_b"])
    else:
        sc = x
    return y + sc


if __name__ == "__main__":
    # BasicBlock(in_channels=4, out_channels=8, stride=2, down_sample=True)
    IN_C, OUT_C, STRIDE, DOWN = 4, 8, 2, True
    N, H, W = 2, 16, 16

    key = jax.random.PRNGKey(0)
    keys = jax.random.split(key, 9)
    params = {
        "conv1_w": 0.2 * jax.random.normal(keys[0], (OUT_C, IN_C, 1, 1), jnp.float32),
        "bn1_g": 1.0 + 0.1 * jax.random.normal(keys[1], (OUT_C,), jnp.float32),
        "bn1_b": 0.1 * jax.random.normal(keys[2], (OUT_C,), jnp.float32),
        "conv2_w": 0.1 * jax.random.normal(keys[3], (OUT_C, OUT_C, 3, 3), jnp.float32),
        "bn2_g": 1.0 + 0.1 * jax.random.normal(keys[4], (OUT_C,), jnp.float32),
        "bn2_b": 0.1 * jax.random.normal(keys[5], (OUT_C,), jnp.float32),
        "down_conv_w": 0.2 * jax.random.normal(keys[6], (OUT_C, IN_C, 1, 1), jnp.float32),
        "down_bn_g": 1.0 + 0.1 * jax.random.normal(keys[7], (OUT_C,), jnp.float32),
        "down_bn_b": jnp.zeros((OUT_C,), jnp.float32),
    }
    x = jax.random.normal(keys[8], (N, IN_C, H, W), jnp.float32)

    out = jax.block_until_ready(basic_block_forward(x, params, STRIDE, DOWN))

    ref = reference_forward(x, params, STRIDE, DOWN)
    assert out.shape == ref.shape == (N, OUT_C, H // STRIDE, W // STRIDE), out.shape
    # bf16 activations / MXU operands with f32 accumulation -> loosened tolerance.
    err = float(jnp.max(jnp.abs(out - ref)))
    assert jnp.allclose(out, ref, rtol=5e-2, atol=5e-2), err

    print("KERNEL_OK")
</pallas_src>

<mosaic_0001>
module attributes {stable_mosaic.version = 11 : i64} {
  func.func @_conv1x1_kernel(%arg0: i32, %arg1: i32, %arg2: memref<1x8x1x8x128xbf16, #tpu.memory_space<vmem>>, %arg3: memref<128x256xbf16, #tpu.memory_space<vmem>>, %arg4: memref<1x8x8x128xbf16, #tpu.memory_space<vmem>>, %arg5: memref<1x8x8x128xbf16, #tpu.memory_space<vmem>>, %arg6: memref<1x1x2x256xf32, #tpu.memory_space<vmem>>) attributes {dimension_semantics = [#tpu.dimension_semantics<parallel>, #tpu.dimension_semantics<parallel>], iteration_bounds = array<i64: 2, 1>, scalar_prefetch = 0 : i64, scratch_operands = 0 : i64, tpu.core_type = #tpu.core_type<tc>, window_params = [{transform_indices = @transform_0, window_bounds = array<i64: 1, 8, 1, 8, 128>}, {pipeline_mode = #tpu.pipeline_mode<synchronous>, transform_indices = @transform_1, window_bounds = array<i64: 128, 256>}, {transform_indices = @transform_2, window_bounds = array<i64: 1, 8, 8, 128>}, {transform_indices = @transform_3, window_bounds = array<i64: 1, 8, 8, 128>}, {transform_indices = @transform_4, window_bounds = array<i64: 1, 1, 2, 256>}]} {
    %c0 = arith.constant 0 : index
    %c0_0 = arith.constant 0 : index
    %c0_1 = arith.constant 0 : index
    %c0_2 = arith.constant 0 : index
    %c0_3 = arith.constant 0 : index
    %0 = vector.load %arg2[%c0, %c0_0, %c0_1, %c0_2, %c0_3] : memref<1x8x1x8x128xbf16, #tpu.memory_space<vmem>>, vector<1x8x1x8x128xbf16>
    %1 = vector.shape_cast %0 : vector<1x8x1x8x128xbf16> to vector<64x128xbf16>
    %c0_4 = arith.constant 0 : index
    %c0_5 = arith.constant 0 : index
    %2 = vector.load %arg3[%c0_4, %c0_5] : memref<128x256xbf16, #tpu.memory_space<vmem>>, vector<128x256xbf16>
    %cst = arith.constant dense<0.000000e+00> : vector<64x256xf32>
    %3 = tpu.matmul %1, %2, %cst {dimension_numbers = #tpu.dot_dimension_numbers<[1], [0], [0], [1], [0, 0, 1, 1], [], []>} : vector<64x128xbf16>, vector<128x256xbf16>, vector<64x256xf32> -> vector<64x256xf32>
    %4 = vector.extract_strided_slice %3 {offsets = [0, 0], sizes = [64, 128], strides = [1, 1]} : vector<64x256xf32> to vector<64x128xf32>
    %5 = vector.shape_cast %4 : vector<64x128xf32> to vector<1x8x8x128xf32>
    %6 = arith.truncf %5 : vector<1x8x8x128xf32> to vector<1x8x8x128xbf16>
    %c0_6 = arith.constant 0 : index
    %c0_7 = arith.constant 0 : index
    %c0_8 = arith.constant 0 : index
    %c0_9 = arith.constant 0 : index
    %7 = vector.load %arg4[%c0_6, %c0_7, %c0_8, %c0_9] : memref<1x8x8x128xbf16, #tpu.memory_space<vmem>>, vector<1x8x8x128xbf16>
    tpu.vector_store %arg4[%c0_6, %c0_7, %c0_8, %c0_9], %6 {strides = array<i32>} : memref<1x8x8x128xbf16, #tpu.memory_space<vmem>>, vector<1x8x8x128xbf16>,
    %8 = vector.extract_strided_slice %3 {offsets = [0, 128], sizes = [64, 128], strides = [1, 1]} : vector<64x256xf32> to vector<64x128xf32>
    %9 = vector.shape_cast %8 : vector<64x128xf32> to vector<1x8x8x128xf32>
    %10 = arith.truncf %9 : vector<1x8x8x128xf32> to vector<1x8x8x128xbf16>
    %c0_10 = arith.constant 0 : index
    %c0_11 = arith.constant 0 : index
    %c0_12 = arith.constant 0 : index
    %c0_13 = arith.constant 0 : index
    %11 = vector.load %arg5[%c0_10, %c0_11, %c0_12, %c0_13] : memref<1x8x8x128xbf16, #tpu.memory_space<vmem>>, vector<1x8x8x128xbf16>
    tpu.vector_store %arg5[%c0_10, %c0_11, %c0_12, %c0_13], %10 {strides = array<i32>} : memref<1x8x8x128xbf16, #tpu.memory_space<vmem>>, vector<1x8x8x128xbf16>,
    %cst_14 = arith.constant dense<0.000000e+00> : vector<256xf32>
    %12 = vector.multi_reduction <add>, %3, %cst_14 [0] : vector<64x256xf32> to vector<256xf32>
    %13 = vector.shape_cast %12 : vector<256xf32> to vector<1x256xf32>
    %c0_15 = arith.constant 0 : index
    %c0_16 = arith.constant 0 : index
    %c0_17 = arith.constant 0 : index
    %c0_18 = arith.constant 0 : index
    %14 = vector.load %arg6[%c0_15, %c0_16, %c0_17, %c0_18] : memref<1x1x2x256xf32, #tpu.memory_space<vmem>>, vector<1x1x1x256xf32>
    %15 = vector.shape_cast %14 : vector<1x1x1x256xf32> to vector<1x256xf32>
    %16 = vector.shape_cast %13 : vector<1x256xf32> to vector<1x1x1x256xf32>
    tpu.vector_store %arg6[%c0_15, %c0_16, %c0_17, %c0_18], %16 {strides = array<i32>} : memref<1x1x2x256xf32, #tpu.memory_space<vmem>>, vector<1x1x1x256xf32>,
    %17 = arith.mulf %3, %3 : vector<64x256xf32>
    %cst_19 = arith.constant dense<0.000000e+00> : vector<256xf32>
    %18 = vector.multi_reduction <add>, %17, %cst_19 [0] : vector<64x256xf32> to vector<256xf32>
    %19 = vector.shape_cast %18 : vector<256xf32> to vector<1x256xf32>
    %c0_20 = arith.constant 0 : index
    %c0_21 = arith.constant 0 : index
    %c1 = arith.constant 1 : index
    %c0_22 = arith.constant 0 : index
    %20 = vector.load %arg6[%c0_20, %c0_21, %c1, %c0_22] : memref<1x1x2x256xf32, #tpu.memory_space<vmem>>, vector<1x1x1x256xf32>
    %21 = vector.shape_cast %20 : vector<1x1x1x256xf32> to vector<1x256xf32>
    %22 = vector.shape_cast %19 : vector<1x256xf32> to vector<1x1x1x256xf32>
    tpu.vector_store %arg6[%c0_20, %c0_21, %c1, %c0_22], %22 {strides = array<i32>} : memref<1x1x2x256xf32, #tpu.memory_space<vmem>>, vector<1x1x1x256xf32>,
    return
  }
  func.func @transform_0(%arg0: i32, %arg1: i32) -> (i32, i32, i32, i32, i32) {
    %c0_i32 = arith.constant 0 : i32
    %c0_i32_0 = arith.constant 0 : i32
    %c0_i32_1 = arith.constant 0 : i32
    %c0_i32_2 = arith.constant 0 : i32
    return %arg0, %arg1, %c0_i32, %c0_i32_0, %c0_i32_1 : i32, i32, i32, i32, i32
  }
  func.func @transform_1(%arg0: i32, %arg1: i32) -> (i32, i32) {
    %c0_i32 = arith.constant 0 : i32
    %c0_i32_0 = arith.constant 0 : i32
    %c0_i32_1 = arith.constant 0 : i32
    return %c0_i32, %c0_i32_0 : i32, i32
  }
  func.func @transform_2(%arg0: i32, %arg1: i32) -> (i32, i32, i32, i32) {
    %c0_i32 = arith.constant 0 : i32
    %c0_i32_0 = arith.constant 0 : i32
    %c0_i32_1 = arith.constant 0 : i32
    return %arg0, %arg1, %c0_i32, %c0_i32_0 : i32, i32, i32, i32
  }
  func.func @transform_3(%arg0: i32, %arg1: i32) -> (i32, i32, i32, i32) {
    %c0_i32 = arith.constant 0 : i32
    %c0_i32_0 = arith.constant 0 : i32
    %c0_i32_1 = arith.constant 0 : i32
    return %arg0, %arg1, %c0_i32, %c0_i32_0 : i32, i32, i32, i32
  }
  func.func @transform_4(%arg0: i32, %arg1: i32) -> (i32, i32, i32, i32) {
    %c0_i32 = arith.constant 0 : i32
    %c0_i32_0 = arith.constant 0 : i32
    %c0_i32_1 = arith.constant 0 : i32
    return %arg0, %arg1, %c0_i32, %c0_i32_0 : i32, i32, i32, i32
  }
}

module attributes {stable_mosaic.version = 11 : i64} {
  func.func @_bn_relu_conv3x3_kernel(%arg0: i32, %arg1: memref<1x8x8x128xbf16, #tpu.memory_space<vmem>>, %arg2: memref<1x128xf32, #tpu.memory_space<vmem>>, %arg3: memref<1x128xf32, #tpu.memory_space<vmem>>, %arg4: memref<3x3x128x128xbf16, #tpu.memory_space<vmem>>, %arg5: memref<1x8x8x128xbf16, #tpu.memory_space<vmem>>, %arg6: memref<1x2x128xf32, #tpu.memory_space<vmem>>, %arg7: memref<10x10x128xf32, #tpu.memory_space<vmem>>, %arg8: memref<64x128xf32, #tpu.memory_space<vmem>>) attributes {dimension_semantics = [#tpu.dimension_semantics<parallel>], iteration_bounds = array<i64: 2>, scalar_prefetch = 0 : i64, scratch_operands = 2 : i64, tpu.core_type = #tpu.core_type<tc>, window_params = [{transform_indices = @transform_0, window_bounds = array<i64: 1, 8, 8, 128>}, {pipeline_mode = #tpu.pipeline_mode<synchronous>, transform_indices = @transform_1, window_bounds = array<i64: 1, 128>}, {pipeline_mode = #tpu.pipeline_mode<synchronous>, transform_indices = @transform_2, window_bounds = array<i64: 1, 128>}, {pipeline_mode = #tpu.pipeline_mode<synchronous>, transform_indices = @transform_3, window_bounds = array<i64: 3, 3, 128, 128>}, {transform_indices = @transform_4, window_bounds = array<i64: 1, 8, 8, 128>}, {transform_indices = @transform_5, window_bounds = array<i64: 1, 2, 128>}]} {
    %cst = arith.constant 0.000000e+00 : f32
    %0 = vector.broadcast %cst : f32 to vector<1x10x128xf32>
    %c0 = arith.constant 0 : index
    %c0_0 = arith.constant 0 : index
    %c0_1 = arith.constant 0 : index
    %1 = vector.load %arg7[%c0, %c0_0, %c0_1] : memref<10x10x128xf32, #tpu.memory_space<vmem>>, vector<1x10x128xf32>
    tpu.vector_store %arg7[%c0, %c0_0, %c0_1], %0 {strides = array<i32>} : memref<10x10x128xf32, #tpu.memory_space<vmem>>, vector<1x10x128xf32>,
    %cst_2 = arith.constant 0.000000e+00 : f32
    %2 = vector.broadcast %cst_2 : f32 to vector<1x10x128xf32>
    %c9 = arith.constant 9 : index
    %c0_3 = arith.constant 0 : index
    %c0_4 = arith.constant 0 : index
    %3 = vector.load %arg7[%c9, %c0_3, %c0_4] : memref<10x10x128xf32, #tpu.memory_space<vmem>>, vector<1x10x128xf32>
    tpu.vector_store %arg7[%c9, %c0_3, %c0_4], %2 {strides = array<i32>} : memref<10x10x128xf32, #tpu.memory_space<vmem>>, vector<1x10x128xf32>,
    %cst_5 = arith.constant 0.000000e+00 : f32
    %4 = vector.broadcast %cst_5 : f32 to vector<10x1x128xf32>
    %c0_6 = arith.constant 0 : index
    %c0_7 = arith.constant 0 : index
    %c0_8 = arith.constant 0 : index
    %5 = vector.load %arg7[%c0_6, %c0_7, %c0_8] : memref<10x10x128xf32, #tpu.memory_space<vmem>>, vector<10x1x128xf32>
    tpu.vector_store %arg7[%c0_6, %c0_7, %c0_8], %4 {strides = array<i32>} : memref<10x10x128xf32, #tpu.memory_space<vmem>>, vector<10x1x128xf32>,
    %cst_9 = arith.constant 0.000000e+00 : f32
    %6 = vector.broadcast %cst_9 : f32 to vector<10x1x128xf32>
    %c0_10 = arith.constant 0 : index
    %c9_11 = arith.constant 9 : index
    %c0_12 = arith.constant 0 : index
    %7 = vector.load %arg7[%c0_10, %c9_11, %c0_12] : memref<10x10x128xf32, #tpu.memory_space<vmem>>, vector<10x1x128xf32>
    tpu.vector_store %arg7[%c0_10, %c9_11, %c0_12], %6 {strides = array<i32>} : memref<10x10x128xf32, #tpu.memory_space<vmem>>, vector<10x1x128xf32>,
    %c0_13 = arith.constant 0 : index
    %c0_14 = arith.constant 0 : index
    %c0_15 = arith.constant 0 : index
    %c0_16 = arith.constant 0 : index
    %8 = vector.load %arg1[%c0_13, %c0_14, %c0_15, %c0_16] : memref<1x8x8x128xbf16, #tpu.memory_space<vmem>>, vector<1x8x8x128xbf16>
    %9 = vector.shape_cast %8 : vector<1x8x8x128xbf16> to vector<8x8x128xbf16>
    %10 = arith.extf %9 : vector<8x8x128xbf16> to vector<8x8x128xf32>
    %c0_17 = arith.constant 0 : index
    %c0_18 = arith.constant 0 : index
    %11 = vector.load %arg2[%c0_17, %c0_18] : memref<1x128xf32, #tpu.memory_space<vmem>>, vector<1x128xf32>
    %12 = vector.shape_cast %11 : vector<1x128xf32> to vector<1x1x128xf32>
    %13 = vector.broadcast %12 : vector<1x1x128xf32> to vector<8x8x128xf32>
    %14 = arith.mulf %10, %13 : vector<8x8x128xf32>
    %c0_19 = arith.constant 0 : index
    %c0_20 = arith.constant 0 : index
    %15 = vector.load %arg3[%c0_19, %c0_20] : memref<1x128xf32, #tpu.memory_space<vmem>>, vector<1x128xf32>
    %16 = vector.shape_cast %15 : vector<1x128xf32> to vector<1x1x128xf32>
    %17 = vector.broadcast %16 : vector<1x1x128xf32> to vector<8x8x128xf32>
    %18 = arith.addf %14, %17 : vector<8x8x128xf32>
    %cst_21 = arith.constant 0.000000e+00 : f32
    %19 = vector.broadcast %cst_21 : f32 to vector<8x8x128xf32>
    %20 = arith.maximumf %18, %19 : vector<8x8x128xf32>
    %c1 = arith.constant 1 : index
    %c1_22 = arith.constant 1 : index
    %c0_23 = arith.constant 0 : index
    %21 = vector.load %arg7[%c1, %c1_22, %c0_23] : memref<10x10x128xf32, #tpu.memory_space<vmem>>, vector<8x8x128xf32>
    tpu.vector_store %arg7[%c1, %c1_22, %c0_23], %20 {strides = array<i32>} : memref<10x10x128xf32, #tpu.memory_space<vmem>>, vector<8x8x128xf32>,
    %cst_24 = arith.constant 0.000000e+00 : f32
    %22 = vector.broadcast %cst_24 : f32 to vector<64x128xf32>
    %c0_25 = arith.constant 0 : index
    %c0_26 = arith.constant 0 : index
    %23 = vector.load %arg8[%c0_25, %c0_26] : memref<64x128xf32, #tpu.memory_space<vmem>>, vector<64x128xf32>
    tpu.vector_store %arg8[%c0_25, %c0_26], %22 {strides = array<i32>} : memref<64x128xf32, #tpu.memory_space<vmem>>, vector<64x128xf32>,
    %c0_27 = arith.constant 0 : index
    %c0_28 = arith.constant 0 : index
    %c0_29 = arith.constant 0 : index
    %24 = vector.load %arg7[%c0_27, %c0_28, %c0_29] : memref<10x10x128xf32, #tpu.memory_space<vmem>>, vector<8x8x128xf32>
    %25 = vector.shape_cast %24 : vector<8x8x128xf32> to vector<64x128xf32>
    %c0_30 = arith.constant 0 : index
    %c0_31 = arith.constant 0 : index
    %26 = vector.load %arg8[%c0_30, %c0_31] : memref<64x128xf32, #tpu.memory_space<vmem>>, vector<64x128xf32>
    %27 = arith.truncf %25 : vector<64x128xf32> to vector<64x128xbf16>
    %c0_32 = arith.constant 0 : index
    %c0_33 = arith.constant 0 : index
    %c0_34 = arith.constant 0 : index
    %c0_35 = arith.constant 0 : index
    %28 = vector.load %arg4[%c0_32, %c0_33, %c0_34, %c0_35] : memref<3x3x128x128xbf16, #tpu.memory_space<vmem>>, vector<1x1x128x128xbf16>
    %29 = vector.shape_cast %28 : vector<1x1x128x128xbf16> to vector<128x128xbf16>
    %cst_36 = arith.constant dense<0.000000e+00> : vector<64x128xf32>
    %30 = tpu.matmul %27, %29, %cst_36 {dimension_numbers = #tpu.dot_dimension_numbers<[1], [0], [0], [1], [0, 0, 1, 1], [], []>} : vector<64x128xbf16>, vector<128x128xbf16>, vector<64x128xf32> -> vector<64x128xf32>
    %31 = arith.addf %26, %30 : vector<64x128xf32>
    %c0_37 = arith.constant 0 : index
    %c0_38 = arith.constant 0 : index
    %32 = vector.load %arg8[%c0_37, %c0_38] : memref<64x128xf32, #tpu.memory_space<vmem>>, vector<64x128xf32>
    tpu.vector_store %arg8[%c0_37, %c0_38], %31 {strides = array<i32>} : memref<64x128xf32, #tpu.memory_space<vmem>>, vector<64x128xf32>,
    %c0_39 = arith.constant 0 : index
    %c1_40 = arith.constant 1 : index
    %c0_41 = arith.constant 0 : index
    %33 = vector.load %arg7[%c0_39, %c1_40, %c0_41] : memref<10x10x128xf32, #tpu.memory_space<vmem>>, vector<8x8x128xf32>
    %34 = vector.shape_cast %33 : vector<8x8x128xf32> to vector<64x128xf32>
    %c0_42 = arith.constant 0 : index
    %c0_43 = arith.constant 0 : index
    %35 = vector.load %arg8[%c0_42, %c0_43] : memref<64x128xf32, #tpu.memory_space<vmem>>, vector<64x128xf32>
    %36 = arith.truncf %34 : vector<64x128xf32> to vector<64x128xbf16>
    %c0_44 = arith.constant 0 : index
    %c1_45 = arith.constant 1 : index
    %c0_46 = arith.constant 0 : index
    %c0_47 = arith.constant 0 : index
    %37 = vector.load %arg4[%c0_44, %c1_45, %c0_46, %c0_47] : memref<3x3x128x128xbf16, #tpu.memory_space<vmem>>, vector<1x1x128x128xbf16>
    %38 = vector.shape_cast %37 : vector<1x1x128x128xbf16> to vector<128x128xbf16>
    %cst_48 = arith.constant dense<0.000000e+00> : vector<64x128xf32>
    %39 = tpu.matmul %36, %38, %cst_48 {dimension_numbers = #tpu.dot_dimension_numbers<[1], [0], [0], [1], [0, 0, 1, 1], [], []>} : vector<64x128xbf16>, vector<128x128xbf16>, vector<64x128xf32> -> vector<64x128xf32>
    %40 = arith.addf %35, %39 : vector<64x128xf32>
    %c0_49 = arith.constant 0 : index
    %c0_50 = arith.constant 0 : index
    %41 = vector.load %arg8[%c0_49, %c0_50] : memref<64x128xf32, #tpu.memory_space<vmem>>, vector<64x128xf32>
    tpu.vector_store %arg8[%c0_49, %c0_50], %40 {strides = array<i32>} : memref<64x128xf32, #tpu.memory_space<vmem>>, vector<64x128xf32>,
    %c0_51 = arith.constant 0 : index
    %c2 = arith.constant 2 : index
    %c0_52 = arith.constant 0 : index
    %42 = vector.load %arg7[%c0_51, %c2, %c0_52] : memref<10x10x128xf32, #tpu.memory_space<vmem>>, vector<8x8x128xf32>
    %43 = vector.shape_cast %42 : vector<8x8x128xf32> to vector<64x128xf32>
    %c0_53 = arith.constant 0 : index
    %c0_54 = arith.constant 0 : index
    %44 = vector.load %arg8[%c0_53, %c0_54] : memref<64x128xf32, #tpu.memory_space<vmem>>, vector<64x128xf32>
    %45 = arith.truncf %43 : vector<64x128xf32> to vector<64x128xbf16>
    %c0_55 = arith.constant 0 : index
    %c2_56 = arith.constant 2 : index
    %c0_57 = arith.constant 0 : index
    %c0_58 = arith.constant 0 : index
    %46 = vector.load %arg4[%c0_55, %c2_56, %c0_57, %c0_58] : memref<3x3x128x128xbf16, #tpu.memory_space<vmem>>, vector<1x1x128x128xbf16>
    %47 = vector.shape_cast %46 : vector<1x1x128x128xbf16> to vector<128x128xbf16>
    %cst_59 = arith.constant dense<0.000000e+00> : vector<64x128xf32>
    %48 = tpu.matmul %45, %47, %cst_59 {dimension_numbers = #tpu.dot_dimension_numbers<[1], [0], [0], [1], [0, 0, 1, 1], [], []>} : vector<64x128xbf16>, vector<128x128xbf16>, vector<64x128xf32> -> vector<64x128xf32>
    %49 = arith.addf %44, %48 : vector<64x128xf32>
    %c0_60 = arith.constant 0 : index
    %c0_61 = arith.constant 0 : index
    %50 = vector.load %arg8[%c0_60, %c0_61] : memref<64x128xf32, #tpu.memory_space<vmem>>, vector<64x128xf32>
    tpu.vector_store %arg8[%c0_60, %c0_61], %49 {strides = array<i32>} : memref<64x128xf32, #tpu.memory_space<vmem>>, vector<64x128xf32>,
    %c1_62 = arith.constant 1 : index
    %c0_63 = arith.constant 0 : index
    %c0_64 = arith.constant 0 : index
    %51 = vector.load %arg7[%c1_62, %c0_63, %c0_64] : memref<10x10x128xf32, #tpu.memory_space<vmem>>, vector<8x8x128xf32>
    %52 = vector.shape_cast %51 : vector<8x8x128xf32> to vector<64x128xf32>
    %c0_65 = arith.constant 0 : index
    %c0_66 = arith.constant 0 : index
    %53 = vector.load %arg8[%c0_65, %c0_66] : memref<64x128xf32, #tpu.memory_space<vmem>>, vector<64x128xf32>
    %54 = arith.truncf %52 : vector<64x128xf32> to vector<64x128xbf16>
    %c1_67 = arith.constant 1 : index
    %c0_68 = arith.constant 0 : index
    %c0_69 = arith.constant 0 : index
    %c0_70 = arith.constant 0 : index
    %55 = vector.load %arg4[%c1_67, %c0_68, %c0_69, %c0_70] : memref<3x3x128x128xbf16, #tpu.memory_space<vmem>>, vector<1x1x128x128xbf16>
    %56 = vector.shape_cast %55 : vector<1x1x128x128xbf16> to vector<128x128xbf16>
    %cst_71 = arith.constant dense<0.000000e+00> : vector<64x128xf32>
    %57 = tpu.matmul %54, %56, %cst_71 {dimension_numbers = #tpu.dot_dimension_numbers<[1], [0], [0], [1], [0, 0, 1, 1], [], []>} : vector<64x128xbf16>, vector<128x128xbf16>, vector<64x128xf32> -> vector<64x128xf32>
    %58 = arith.addf %53, %57 : vector<64x128xf32>
    %c0_72 = arith.constant 0 : index
    %c0_73 = arith.constant 0 : index
    %59 = vector.load %arg8[%c0_72, %c0_73] : memref<64x128xf32, #tpu.memory_space<vmem>>, vector<64x128xf32>
    tpu.vector_store %arg8[%c0_72, %c0_73], %58 {strides = array<i32>} : memref<64x128xf32, #tpu.memory_space<vmem>>, vector<64x128xf32>,
    %c1_74 = arith.constant 1 : index
    %c1_75 = arith.constant 1 : index
    %c0_76 = arith.constant 0 : index
    %60 = vector.load %arg7[%c1_74, %c1_75, %c0_76] : memref<10x10x128xf32, #tpu.memory_space<vmem>>, vector<8x8x128xf32>
    %61 = vector.shape_cast %60 : vector<8x8x128xf32> to vector<64x128xf32>
    %c0_77 = arith.constant 0 : index
    %c0_78 = arith.constant 0 : index
    %62 = vector.load %arg8[%c0_77, %c0_78] : memref<64x128xf32, #tpu.memory_space<vmem>>, vector<64x128xf32>
    %63 = arith.truncf %61 : vector<64x128xf32> to vector<64x128xbf16>
    %c1_79 = arith.constant 1 : index
    %c1_80 = arith.constant 1 : index
    %c0_81 = arith.constant 0 : index
    %c0_82 = arith.constant 0 : index
    %64 = vector.load %arg4[%c1_79, %c1_80, %c0_81, %c0_82] : memref<3x3x128x128xbf16, #tpu.memory_space<vmem>>, vector<1x1x128x128xbf16>
    %65 = vector.shape_cast %64 : vector<1x1x128x128xbf16> to vector<128x128xbf16>
    %cst_83 = arith.constant dense<0.000000e+00> : vector<64x128xf32>
    %66 = tpu.matmul %63, %65, %cst_83 {dimension_numbers = #tpu.dot_dimension_numbers<[1], [0], [0], [1], [0, 0, 1, 1], [], []>} : vector<64x128xbf16>, vector<128x128xbf16>, vector<64x128xf32> -> vector<64x128xf32>
    %67 = arith.addf %62, %66 : vector<64x128xf32>
    %c0_84 = arith.constant 0 : index
    %c0_85 = arith.constant 0 : index
    %68 = vector.load %arg8[%c0_84, %c0_85] : memref<64x128xf32, #tpu.memory_space<vmem>>, vector<64x128xf32>
    tpu.vector_store %arg8[%c0_84, %c0_85], %67 {strides = array<i32>} : memref<64x128xf32, #tpu.memory_space<vmem>>, vector<64x128xf32>,
    %c1_86 = arith.constant 1 : index
    %c2_87 = arith.constant 2 : index
    %c0_88 = arith.constant 0 : index
    %69 = vector.load %arg7[%c1_86, %c2_87, %c0_88] : memref<10x10x128xf32, #tpu.memory_space<vmem>>, vector<8x8x128xf32>
    %70 = vector.shape_cast %69 : vector<8x8x128xf32> to vector<64x128xf32>
    %c0_89 = arith.constant 0 : index
    %c0_90 = arith.constant 0 : index
    %71 = vector.load %arg8[%c0_89, %c0_90] : memref<64x128xf32, #tpu.memory_space<vmem>>, vector<64x128xf32>
    %72 = arith.truncf %70 : vector<64x128xf32> to vector<64x128xbf16>
    %c1_91 = arith.constant 1 : index
    %c2_92 = arith.constant 2 : index
    %c0_93 = arith.constant 0 : index
    %c0_94 = arith.constant 0 : index
    %73 = vector.load %arg4[%c1_91, %c2_92, %c0_93, %c0_94] : memref<3x3x128x128xbf16, #tpu.memory_space<vmem>>, vector<1x1x128x128xbf16>
    %74 = vector.shape_cast %73 : vector<1x1x128x128xbf16> to vector<128x128xbf16>
    %cst_95 = arith.constant dense<0.000000e+00> : vector<64x128xf32>
    %75 = tpu.matmul %72, %74, %cst_95 {dimension_numbers = #tpu.dot_dimension_numbers<[1], [0], [0], [1], [0, 0, 1, 1], [], []>} : vector<64x128xbf16>, vector<128x128xbf16>, vector<64x128xf32> -> vector<64x128xf32>
    %76 = arith.addf %71, %75 : vector<64x128xf32>
    %c0_96 = arith.constant 0 : index
    %c0_97 = arith.constant 0 : index
    %77 = vector.load %arg8[%c0_96, %c0_97] : memref<64x128xf32, #tpu.memory_space<vmem>>, vector<64x128xf32>
    tpu.vector_store %arg8[%c0_96, %c0_97], %76 {strides = array<i32>} : memref<64x128xf32, #tpu.memory_space<vmem>>, vector<64x128xf32>,
    %c2_98 = arith.constant 2 : index
    %c0_99 = arith.constant 0 : index
    %c0_100 = arith.constant 0 : index
    %78 = vector.load %arg7[%c2_98, %c0_99, %c0_100] : memref<10x10x128xf32, #tpu.memory_space<vmem>>, vector<8x8x128xf32>
    %79 = vector.shape_cast %78 : vector<8x8x128xf32> to vector<64x128xf32>
    %c0_101 = arith.constant 0 : index
    %c0_102 = arith.constant 0 : index
    %80 = vector.load %arg8[%c0_101, %c0_102] : memref<64x128xf32, #tpu.memory_space<vmem>>, vector<64x128xf32>
    %81 = arith.truncf %79 : vector<64x128xf32> to vector<64x128xbf16>
    %c2_103 = arith.constant 2 : index
    %c0_104 = arith.constant 0 : index
    %c0_105 = arith.constant 0 : index
    %c0_106 = arith.constant 0 : index
    %82 = vector.load %arg4[%c2_103, %c0_104, %c0_105, %c0_106] : memref<3x3x128x128xbf16, #tpu.memory_space<vmem>>, vector<1x1x128x128xbf16>
    %83 = vector.shape_cast %82 : vector<1x1x128x128xbf16> to vector<128x128xbf16>
    %cst_107 = arith.constant dense<0.000000e+00> : vector<64x128xf32>
    %84 = tpu.matmul %81, %83, %cst_107 {dimension_numbers = #tpu.dot_dimension_numbers<[1], [0], [0], [1], [0, 0, 1, 1], [], []>} : vector<64x128xbf16>, vector<128x128xbf16>, vector<64x128xf32> -> vector<64x128xf32>
    %85 = arith.addf %80, %84 : vector<64x128xf32>
    %c0_108 = arith.constant 0 : index
    %c0_109 = arith.constant 0 : index
    %86 = vector.load %arg8[%c0_108, %c0_109] : memref<64x128xf32, #tpu.memory_space<vmem>>, vector<64x128xf32>
    tpu.vector_store %arg8[%c0_108, %c0_109], %85 {strides = array<i32>} : memref<64x128xf32, #tpu.memory_space<vmem>>, vector<64x128xf32>,
    %c2_110 = arith.constant 2 : index
    %c1_111 = arith.constant 1 : index
    %c0_112 = arith.constant 0 : index
    %87 = vector.load %arg7[%c2_110, %c1_111, %c0_112] : memref<10x10x128xf32, #tpu.memory_space<vmem>>, vector<8x8x128xf32>
    %88 = vector.shape_cast %87 : vector<8x8x128xf32> to vector<64x128xf32>
    %c0_113 = arith.constant 0 : index
    %c0_114 = arith.constant 0 : index
    %89 = vector.load %arg8[%c0_113, %c0_114] : memref<64x128xf32, #tpu.memory_space<vmem>>, vector<64x128xf32>
    %90 = arith.truncf %88 : vector<64x128xf32> to vector<64x128xbf16>
    %c2_115 = arith.constant 2 : index
    %c1_116 = arith.constant 1 : index
    %c0_117 = arith.constant 0 : index
    %c0_118 = arith.constant 0 : index
    %91 = vector.load %arg4[%c2_115, %c1_116, %c0_117, %c0_118] : memref<3x3x128x128xbf16, #tpu.memory_space<vmem>>, vector<1x1x128x128xbf16>
    %92 = vector.shape_cast %91 : vector<1x1x128x128xbf16> to vector<128x128xbf16>
    %cst_119 = arith.constant dense<0.000000e+00> : vector<64x128xf32>
    %93 = tpu.matmul %90, %92, %cst_119 {dimension_numbers = #tpu.dot_dimension_numbers<[1], [0], [0], [1], [0, 0, 1, 1], [], []>} : vector<64x128xbf16>, vector<128x128xbf16>, vector<64x128xf32> -> vector<64x128xf32>
    %94 = arith.addf %89, %93 : vector<64x128xf32>
    %c0_120 = arith.constant 0 : index
    %c0_121 = arith.constant 0 : index
    %95 = vector.load %arg8[%c0_120, %c0_121] : memref<64x128xf32, #tpu.memory_space<vmem>>, vector<64x128xf32>
    tpu.vector_store %arg8[%c0_120, %c0_121], %94 {strides = array<i32>} : memref<64x128xf32, #tpu.memory_space<vmem>>, vector<64x128xf32>,
    %c2_122 = arith.constant 2 : index
    %c2_123 = arith.constant 2 : index
    %c0_124 = arith.constant 0 : index
    %96 = vector.load %arg7[%c2_122, %c2_123, %c0_124] : memref<10x10x128xf32, #tpu.memory_space<vmem>>, vector<8x8x128xf32>
    %97 = vector.shape_cast %96 : vector<8x8x128xf32> to vector<64x128xf32>
    %c0_125 = arith.constant 0 : index
    %c0_126 = arith.constant 0 : index
    %98 = vector.load %arg8[%c0_125, %c0_126] : memref<64x128xf32, #tpu.memory_space<vmem>>, vector<64x128xf32>
    %99 = arith.truncf %97 : vector<64x128xf32> to vector<64x128xbf16>
    %c2_127 = arith.constant 2 : index
    %c2_128 = arith.constant 2 : index
    %c0_129 = arith.constant 0 : index
    %c0_130 = arith.constant 0 : index
    %100 = vector.load %arg4[%c2_127, %c2_128, %c0_129, %c0_130] : memref<3x3x128x128xbf16, #tpu.memory_space<vmem>>, vector<1x1x128x128xbf16>
    %101 = vector.shape_cast %100 : vector<1x1x128x128xbf16> to vector<128x128xbf16>
    %cst_131 = arith.constant dense<0.000000e+00> : vector<64x128xf32>
    %102 = tpu.matmul %99, %101, %cst_131 {dimension_numbers = #tpu.dot_dimension_numbers<[1], [0], [0], [1], [0, 0, 1, 1], [], []>} : vector<64x128xbf16>, vector<128x128xbf16>, vector<64x128xf32> -> vector<64x128xf32>
    %103 = arith.addf %98, %102 : vector<64x128xf32>
    %c0_132 = arith.constant 0 : index
    %c0_133 = arith.constant 0 : index
    %104 = vector.load %arg8[%c0_132, %c0_133] : memref<64x128xf32, #tpu.memory_space<vmem>>, vector<64x128xf32>
    tpu.vector_store %arg8[%c0_132, %c0_133], %103 {strides = array<i32>} : memref<64x128xf32, #tpu.memory_space<vmem>>, vector<64x128xf32>,
    %c0_134 = arith.constant 0 : index
    %c0_135 = arith.constant 0 : index
    %105 = vector.load %arg8[%c0_134, %c0_135] : memref<64x128xf32, #tpu.memory_space<vmem>>, vector<64x128xf32>
    %106 = vector.shape_cast %105 : vector<64x128xf32> to vector<8x8x128xf32>
    %107 = arith.truncf %106 : vector<8x8x128xf32> to vector<8x8x128xbf16>
    %c0_136 = arith.constant 0 : index
    %c0_137 = arith.constant 0 : index
    %c0_138 = arith.constant 0 : index
    %c0_139 = arith.constant 0 : index
    %108 = vector.load %arg5[%c0_136, %c0_137, %c0_138, %c0_139] : memref<1x8x8x128xbf16, #tpu.memory_space<vmem>>, vector<1x8x8x128xbf16>
    %109 = vector.shape_cast %108 : vector<1x8x8x128xbf16> to vector<8x8x128xbf16>
    %110 = vector.shape_cast %107 : vector<8x8x128xbf16> to vector<1x8x8x128xbf16>
    tpu.vector_store %arg5[%c0_136, %c0_137, %c0_138, %c0_139], %110 {strides = array<i32>} : memref<1x8x8x128xbf16, #tpu.memory_space<vmem>>, vector<1x8x8x128xbf16>,
    %cst_140 = arith.constant dense<0.000000e+00> : vector<128xf32>
    %111 = vector.multi_reduction <add>, %105, %cst_140 [0] : vector<64x128xf32> to vector<128xf32>
    %112 = vector.shape_cast %111 : vector<128xf32> to vector<1x128xf32>
    %c0_141 = arith.constant 0 : index
    %c0_142 = arith.constant 0 : index
    %c0_143 = arith.constant 0 : index
    %113 = vector.load %arg6[%c0_141, %c0_142, %c0_143] : memref<1x2x128xf32, #tpu.memory_space<vmem>>, vector<1x1x128xf32>
    %114 = vector.shape_cast %113 : vector<1x1x128xf32> to vector<1x128xf32>
    %115 = vector.shape_cast %112 : vector<1x128xf32> to vector<1x1x128xf32>
    tpu.vector_store %arg6[%c0_141, %c0_142, %c0_143], %115 {strides = array<i32>} : memref<1x2x128xf32, #tpu.memory_space<vmem>>, vector<1x1x128xf32>,
    %116 = arith.mulf %105, %105 : vector<64x128xf32>
    %cst_144 = arith.constant dense<0.000000e+00> : vector<128xf32>
    %117 = vector.multi_reduction <add>, %116, %cst_144 [0] : vector<64x128xf32> to vector<128xf32>
    %118 = vector.shape_cast %117 : vector<128xf32> to vector<1x128xf32>
    %c0_145 = arith.constant 0 : index
    %c1_146 = arith.constant 1 : index
    %c0_147 = arith.constant 0 : index
    %119 = vector.load %arg6[%c0_145, %c1_146, %c0_147] : memref<1x2x128xf32, #tpu.memory_space<vmem>>, vector<1x1x128xf32>
    %120 = vector.shape_cast %119 : vector<1x1x128xf32> to vector<1x128xf32>
    %121 = vector.shape_cast %118 : vector<1x128xf32> to vector<1x1x128xf32>
    tpu.vector_store %arg6[%c0_145, %c1_146, %c0_147], %121 {strides = array<i32>} : memref<1x2x128xf32, #tpu.memory_space<vmem>>, vector<1x1x128xf32>,
    return
  }
  func.func @transform_0(%arg0: i32) -> (i32, i32, i32, i32) {
    %c0_i32 = arith.constant 0 : i32
    %c0_i32_0 = arith.constant 0 : i32
    %c0_i32_1 = arith.constant 0 : i32
    %c0_i32_2 = arith.constant 0 : i32
    return %arg0, %c0_i32, %c0_i32_0, %c0_i32_1 : i32, i32, i32, i32
  }
  func.func @transform_1(%arg0: i32) -> (i32, i32) {
    %c0_i32 = arith.constant 0 : i32
    %c0_i32_0 = arith.constant 0 : i32
    %c0_i32_1 = arith.constant 0 : i32
    return %c0_i32, %c0_i32_0 : i32, i32
  }
  func.func @transform_2(%arg0: i32) -> (i32, i32) {
    %c0_i32 = arith.constant 0 : i32
    %c0_i32_0 = arith.constant 0 : i32
    %c0_i32_1 = arith.constant 0 : i32
    return %c0_i32, %c0_i32_0 : i32, i32
  }
  func.func @transform_3(%arg0: i32) -> (i32, i32, i32, i32) {
    %c0_i32 = arith.constant 0 : i32
    %c0_i32_0 = arith.constant 0 : i32
    %c0_i32_1 = arith.constant 0 : i32
    %c0_i32_2 = arith.constant 0 : i32
    %c0_i32_3 = arith.constant 0 : i32
    return %c0_i32, %c0_i32_0, %c0_i32_1, %c0_i32_2 : i32, i32, i32, i32
  }
  func.func @transform_4(%arg0: i32) -> (i32, i32, i32, i32) {
    %c0_i32 = arith.constant 0 : i32
    %c0_i32_0 = arith.constant 0 : i32
    %c0_i32_1 = arith.constant 0 : i32
    %c0_i32_2 = arith.constant 0 : i32
    return %arg0, %c0_i32, %c0_i32_0, %c0_i32_1 : i32, i32, i32, i32
  }
  func.func @transform_5(%arg0: i32) -> (i32, i32, i32) {
    %c0_i32 = arith.constant 0 : i32
    %c0_i32_0 = arith.constant 0 : i32
    %c0_i32_1 = arith.constant 0 : i32
    return %arg0, %c0_i32, %c0_i32_0 : i32, i32, i32
  }
}

module attributes {stable_mosaic.version = 11 : i64} {
  func.func @_bn_relu_add_kernel(%arg0: i32, %arg1: memref<128x128xbf16, #tpu.memory_space<vmem>>, %arg2: memref<128x128xbf16, #tpu.memory_space<vmem>>, %arg3: memref<1x128xf32, #tpu.memory_space<vmem>>, %arg4: memref<1x128xf32, #tpu.memory_space<vmem>>, %arg5: memref<1x128xf32, #tpu.memory_space<vmem>>, %arg6: memref<1x128xf32, #tpu.memory_space<vmem>>, %arg7: memref<128x128xf32, #tpu.memory_space<vmem>>) attributes {dimension_semantics = [#tpu.dimension_semantics<parallel>], iteration_bounds = array<i64: 1>, scalar_prefetch = 0 : i64, scratch_operands = 0 : i64, tpu.core_type = #tpu.core_type<tc>, window_params = [{transform_indices = @transform_0, window_bounds = array<i64: 128, 128>}, {transform_indices = @transform_1, window_bounds = array<i64: 128, 128>}, {pipeline_mode = #tpu.pipeline_mode<synchronous>, transform_indices = @transform_2, window_bounds = array<i64: 1, 128>}, {pipeline_mode = #tpu.pipeline_mode<synchronous>, transform_indices = @transform_3, window_bounds = array<i64: 1, 128>}, {pipeline_mode = #tpu.pipeline_mode<synchronous>, transform_indices = @transform_4, window_bounds = array<i64: 1, 128>}, {pipeline_mode = #tpu.pipeline_mode<synchronous>, transform_indices = @transform_5, window_bounds = array<i64: 1, 128>}, {transform_indices = @transform_6, window_bounds = array<i64: 128, 128>}]} {
    %c0 = arith.constant 0 : index
    %c0_0 = arith.constant 0 : index
    %0 = vector.load %arg1[%c0, %c0_0] : memref<128x128xbf16, #tpu.memory_space<vmem>>, vector<128x128xbf16>
    %1 = arith.extf %0 : vector<128x128xbf16> to vector<128x128xf32>
    %c0_1 = arith.constant 0 : index
    %c0_2 = arith.constant 0 : index
    %2 = vector.load %arg3[%c0_1, %c0_2] : memref<1x128xf32, #tpu.memory_space<vmem>>, vector<1x128xf32>
    %3 = vector.broadcast %2 : vector<1x128xf32> to vector<128x128xf32>
    %4 = arith.mulf %1, %3 : vector<128x128xf32>
    %c0_3 = arith.constant 0 : index
    %c0_4 = arith.constant 0 : index
    %5 = vector.load %arg4[%c0_3, %c0_4] : memref<1x128xf32, #tpu.memory_space<vmem>>, vector<1x128xf32>
    %6 = vector.broadcast %5 : vector<1x128xf32> to vector<128x128xf32>
    %7 = arith.addf %4, %6 : vector<128x128xf32>
    %cst = arith.constant 0.000000e+00 : f32
    %8 = vector.broadcast %cst : f32 to vector<128x128xf32>
    %9 = arith.maximumf %7, %8 : vector<128x128xf32>
    %c0_5 = arith.constant 0 : index
    %c0_6 = arith.constant 0 : index
    %10 = vector.load %arg2[%c0_5, %c0_6] : memref<128x128xbf16, #tpu.memory_space<vmem>>, vector<128x128xbf16>
    %11 = arith.extf %10 : vector<128x128xbf16> to vector<128x128xf32>
    %c0_7 = arith.constant 0 : index
    %c0_8 = arith.constant 0 : index
    %12 = vector.load %arg5[%c0_7, %c0_8] : memref<1x128xf32, #tpu.memory_space<vmem>>, vector<1x128xf32>
    %13 = vector.broadcast %12 : vector<1x128xf32> to vector<128x128xf32>
    %14 = arith.mulf %11, %13 : vector<128x128xf32>
    %15 = arith.addf %9, %14 : vector<128x128xf32>
    %c0_9 = arith.constant 0 : index
    %c0_10 = arith.constant 0 : index
    %16 = vector.load %arg6[%c0_9, %c0_10] : memref<1x128xf32, #tpu.memory_space<vmem>>, vector<1x128xf32>
    %17 = vector.broadcast %16 : vector<1x128xf32> to vector<128x128xf32>
    %18 = arith.addf %15, %17 : vector<128x128xf32>
    %c0_11 = arith.constant 0 : index
    %c0_12 = arith.constant 0 : index
    %19 = vector.load %arg7[%c0_11, %c0_12] : memref<128x128xf32, #tpu.memory_space<vmem>>, vector<128x128xf32>
    tpu.vector_store %arg7[%c0_11, %c0_12], %18 {strides = array<i32>} : memref<128x128xf32, #tpu.memory_space<vmem>>, vector<128x128xf32>,
    return
  }
  func.func @transform_0(%arg0: i32) -> (i32, i32) {
    %c0_i32 = arith.constant 0 : i32
    %c0_i32_0 = arith.constant 0 : i32
    return %arg0, %c0_i32 : i32, i32
  }
  func.func @transform_1(%arg0: i32) -> (i32, i32) {
    %c0_i32 = arith.constant 0 : i32
    %c0_i32_0 = arith.constant 0 : i32
    return %arg0, %c0_i32 : i32, i32
  }
  func.func @transform_2(%arg0: i32) -> (i32, i32) {
    %c0_i32 = arith.constant 0 : i32
    %c0_i32_0 = arith.constant 0 : i32
    %c0_i32_1 = arith.constant 0 : i32
    return %c0_i32, %c0_i32_0 : i32, i32
  }
  func.func @transform_3(%arg0: i32) -> (i32, i32) {
    %c0_i32 = arith.constant 0 : i32
    %c0_i32_0 = arith.constant 0 : i32
    %c0_i32_1 = arith.constant 0 : i32
    return %c0_i32, %c0_i32_0 : i32, i32
  }
  func.func @transform_4(%arg0: i32) -> (i32, i32) {
    %c0_i32 = arith.constant 0 : i32
    %c0_i32_0 = arith.constant 0 : i32
    %c0_i32_1 = arith.constant 0 : i32
    return %c0_i32, %c0_i32_0 : i32, i32
  }
  func.func @transform_5(%arg0: i32) -> (i32, i32) {
    %c0_i32 = arith.constant 0 : i32
    %c0_i32_0 = arith.constant 0 : i32
    %c0_i32_1 = arith.constant 0 : i32
    return %c0_i32, %c0_i32_0 : i32, i32
  }
  func.func @transform_6(%arg0: i32) -> (i32, i32) {
    %c0_i32 = arith.constant 0 : i32
    %c0_i32_0 = arith.constant 0 : i32
    return %arg0, %c0_i32 : i32, i32
  }
}

</mosaic_0001>

<llo_original>
// kernel: basic_block_forward.3
$region0: #{basic_block_forward.3}
  #allocation0 [shape = 'u32[]', space=smem, size = 0x4, offset = 0x4, fixed_abs, tag = 'smem constant byte address 0x4 - core index']
  #allocation1 [shape = 'u32[144,128]{1,0:T(1,128)}', space=vmem, size = 0x12000, scoped, tag = 'internal scratch']
  %s0 = inlined_call_operand.vmem [shape: bf16[2,8,2,8,256], index: 0, kind: input, shape index: {}]
  %s1 = inlined_call_operand.vmem [shape: bf16[128,256], index: 1, kind: input, shape index: {}]
  %s2 = inlined_call_operand.vmem [shape: bf16[2,8,8,128], index: 2, kind: output, shape index: {0}]
  %s3 = inlined_call_operand.vmem [shape: bf16[2,8,8,128], index: 3, kind: output, shape index: {1}]
  %s4 = inlined_call_operand.vmem [shape: f32[2,1,2,256], index: 4, kind: output, shape index: {2}]
  %5 = xla_tuple %s2, %s3, %s4
  %s6 = sld [smem:[#allocation0]]
  $region98: #{basic_block_forward.3} parent=0
    _
  %s8 = ssub.s32 1, %s6
  %s9 = scalar_select 0, %s8, %s6
  $region1: #{basic_block_forward.3} parent=0
    #allocation2 [shape = 'u8[32768]{0}', space=vmem, size = 0x8000, scoped, tag = 'input window, operand 0']
    loop: start=0, step=1, limit=4
    $region2: #{basic_block_forward.3} parent=1 // loop_pre_header
      _
    $region3: #{basic_block_forward.3} parent=1 // loop_header
      %s11 = sphi 0, %s15
      %p12 = scmp.ge.s32.totalorder %s11, 4
      %s18 = sphi 0, %s30
      %s19 = sphi 0, %s26
      %s20 = sphi 0, %s18
      %s21 = sphi 0, %s19
      %s22 = sphi 0, %s20
      %s23 = sphi 0, %s21
      %s35 = sphi 0, %s37
      %s38 = sphi 0, %s35
      %s39 = sphi 0, %s38
      %s55 = sphi 0, %s39
      %s59 = sphi 0, %s59
      %s61 = sphi 0, %s59
      %s62 = sphi 0, %s61
      %s76 = sphi 0, %s62
      %s84 = sphi 0, %s86
      %s87 = sphi 0, %s84
      %s88 = sphi 0, %s87
      %s104 = sphi 0, %s88
      %s112 = sphi 0, %s114
      %s115 = sphi 0, %s112
      %s116 = sphi 0, %s115
      %s132 = sphi 0, %s116
      %s140 = sphi 0, %s142
      %s143 = sphi 0, %s140
      %s144 = sphi 0, %s143
      %s160 = sphi 0, %s144
    $region4: #{basic_block_forward.3} parent=1 // loop_header_branch
      %14 = sbr.rel (%p12) target = $region8
    $region5: #{basic_block_forward.3} parent=1 // loop_body
      %s16 = ssub.s32 %s11, 1
      %s17 = ssub.s32 %s11, 2
      %s24 = sadd.s32 1, %s19
      %p25 = scmp.ge.s32.totalorder %s24, 1
      %s26 = scalar_select %p25, 0, %s24
      %s27 = sadd.s32 1, %s18
      %s28 = scalar_select %p25, %s27, %s18
      %p29 = scmp.ge.s32.totalorder %s28, 2
      %s30 = scalar_select %p29, 0, %s28
      %s31 = ssub.s32 %s18, %s30
      %s32 = ssub.s32 %s19, %s26
      %s33 = sor.u32 %s31, %s32
      %p34 = scmp.eq.s32.totalorder %s33, 0
      %s36 = sadd.s32 %s35, 1
      %s37 = scalar_select %p34, %s35, %s36
      %p40 = pneg %p34
      %p41 = scmp.eq.s32.totalorder %s11, 1
      %p42 = por %p40, %p41
      %p43 = scmp.ne.s32.totalorder %s35, %s38
      %p44 = scmp.eq.s32.totalorder %s11, 0
      %p45 = por %p43, %p44
      %p46 = scmp.ne.s32.totalorder %s35, %s38
      %p47 = scmp.eq.s32.totalorder %s16, 1
      %p48 = por %p46, %p47
      %p49 = scmp.ne.s32.totalorder %s38, %s39
      %p50 = scmp.eq.s32.totalorder %s16, 0
      %p51 = por %p49, %p50
      %p52 = scmp.ne.s32.totalorder %s38, %s39
      %p53 = scmp.eq.s32.totalorder %s17, 1
      %p54 = por %p52, %p53
      %p56 = scmp.ne.s32.totalorder %s39, %s55
      %p57 = scmp.eq.s32.totalorder %s17, 0
      %p58 = por %p56, %p57
      %s60 = sadd.s32 %s59, 1
      %p63 = scmp.eq.s32.totalorder %s11, 1
      %p64 = scmp.ne.s32.totalorder %s59, %s61
      %p65 = scmp.eq.s32.totalorder %s11, 0
      %p66 = por %p64, %p65
      %p67 = scmp.ne.s32.totalorder %s59, %s61
      %p68 = scmp.eq.s32.totalorder %s16, 1
      %p69 = por %p67, %p68
      %p70 = scmp.ne.s32.totalorder %s61, %s62
      %p71 = scmp.eq.s32.totalorder %s16, 0
      %p72 = por %p70, %p71
      %p73 = scmp.ne.s32.totalorder %s61, %s62
      %p74 = scmp.eq.s32.totalorder %s17, 1
      %p75 = por %p73, %p74
      %p77 = scmp.ne.s32.totalorder %s62, %s76
      %p78 = scmp.eq.s32.totalorder %s17, 0
      %p79 = por %p77, %p78
      %s80 = ssub.s32 %s18, %s30
      %s81 = ssub.s32 %s19, %s26
      %s82 = sor.u32 %s80, %s81
      %p83 = scmp.eq.s32.totalorder %s82, 0
      %s85 = sadd.s32 %s84, 1
      %s86 = scalar_select %p83, %s84, %s85
      %p89 = pneg %p83
      %p90 = scmp.eq.s32.totalorder %s11, 1
      %p91 = por %p89, %p90
      %p92 = scmp.ne.s32.totalorder %s84, %s87
      %p93 = scmp.eq.s32.totalorder %s11, 0
      %p94 = por %p92, %p93
      %p95 = scmp.ne.s32.totalorder %s84, %s87
      %p96 = scmp.eq.s32.totalorder %s16, 1
      %p97 = por %p95, %p96
      %p98 = scmp.ne.s32.totalorder %s87, %s88
      %p99 = scmp.eq.s32.totalorder %s16, 0
      %p100 = por %p98, %p99
      %p101 = scmp.ne.s32.totalorder %s87, %s88
      %p102 = scmp.eq.s32.totalorder %s17, 1
      %p103 = por %p101, %p102
      %p105 = scmp.ne.s32.totalorder %s88, %s104
      %p106 = scmp.eq.s32.totalorder %s17, 0
      %p107 = por %p105, %p106
      %s108 = ssub.s32 %s18, %s30
      %s109 = ssub.s32 %s19, %s26
      %s110 = sor.u32 %s108, %s109
      %p111 = scmp.eq.s32.totalorder %s110, 0
      %s113 = sadd.s32 %s112, 1
      %s114 = scalar_select %p111, %s112, %s113
      %p117 = pneg %p111
      %p118 = scmp.eq.s32.totalorder %s11, 1
      %p119 = por %p117, %p118
      %p120 = scmp.ne.s32.totalorder %s112, %s115
      %p121 = scmp.eq.s32.totalorder %s11, 0
      %p122 = por %p120, %p121
      %p123 = scmp.ne.s32.totalorder %s112, %s115
      %p124 = scmp.eq.s32.totalorder %s16, 1
      %p125 = por %p123, %p124
      %p126 = scmp.ne.s32.totalorder %s115, %s116
      %p127 = scmp.eq.s32.totalorder %s16, 0
      %p128 = por %p126, %p127
      %p129 = scmp.ne.s32.totalorder %s115, %s116
      %p130 = scmp.eq.s32.totalorder %s17, 1
      %p131 = por %p129, %p130
      %p133 = scmp.ne.s32.totalorder %s116, %s132
      %p134 = scmp.eq.s32.totalorder %s17, 0
      %p135 = por %p133, %p134
      %s136 = ssub.s32 %s18, %s30
      %s137 = ssub.s32 %s19, %s26
      %s138 = sor.u32 %s136, %s137
      %p139 = scmp.eq.s32.totalorder %s138, 0
      %s141 = sadd.s32 %s140, 1
      %s142 = scalar_select %p139, %s140, %s141
      %p145 = pneg %p139
      %p146 = scmp.eq.s32.totalorder %s11, 1
      %p147 = por %p145, %p146
      %p148 = scmp.ne.s32.totalorder %s140, %s143
      %p149 = scmp.eq.s32.totalorder %s11, 0
      %p150 = por %p148, %p149
      %p151 = scmp.ne.s32.totalorder %s140, %s143
      %p152 = scmp.eq.s32.totalorder %s16, 1
      %p153 = por %p151, %p152
      %p154 = scmp.ne.s32.totalorder %s143, %s144
      %p155 = scmp.eq.s32.totalorder %s16, 0
      %p156 = por %p154, %p155
      %p157 = scmp.ne.s32.totalorder %s143, %s144
      %p158 = scmp.eq.s32.totalorder %s17, 1
      %p159 = por %p157, %p158
      %p161 = scmp.ne.s32.totalorder %s144, %s160
      %p162 = scmp.eq.s32.totalorder %s17, 0
      %p163 = por %p161, %p162
      %p164 = scmp.le.s32.totalorder 1, %s11
      %p165 = scmp.lt.s32.totalorder %s11, 3
      %p166 = pnand %p164, %p165
      %p167 = pneg %p166
      // Predicated region
      $region9: #{basic_block_forward.3} parent=5 // pred_check
        _
      $region10: #{basic_block_forward.3} parent=5 // pred_check_branch
        %169 = sbr.rel (%p166) target = $region12
      $region11: #{basic_block_forward.3} parent=5 // pred_region
        %s170 = ssub.s32 %s11, 1
        // Predicated region
        $region13: #{basic_block_forward.3} parent=11 // pred_check
          %p171 = pneg %p72
        $region14: #{basic_block_forward.3} parent=11 // pred_check_branch
          %173 = sbr.rel (%p171) target = $region16
        $region15: #{basic_block_forward.3} parent=11 // pred_region
          _
        $region16: #{basic_block_forward.3} parent=11 // pred_fallthru
          _
      $region12: #{basic_block_forward.3} parent=5 // pred_fallthru
        _
      %p174 = scmp.lt.s32.totalorder %s11, 2
      // Predicated region
      $region17: #{basic_block_forward.3} parent=5 // pred_check
        %p175 = pneg %p174
      $region18: #{basic_block_forward.3} parent=5 // pred_check_branch
        %177 = sbr.rel (%p175) target = $region20
      $region19: #{basic_block_forward.3} parent=5 // pred_region
        // Predicated region
        $region21: #{basic_block_forward.3} parent=19 // pred_check
          %p178 = pneg %p45
        $region22: #{basic_block_forward.3} parent=19 // pred_check_branch
          %180 = sbr.rel (%p178) target = $region24
        $region23: #{basic_block_forward.3} parent=19 // pred_region
          %s181 = sand.u32 %s35, 1
          %s182 = sand.u32 %s35, 1
          %s183 = smul.addr %s182, 32
          %s184 = scalar_lea.vmem [#allocation2], %s183
          %s185 = smul.u32 8, %s19
          %s186 = smul.addr %s185, 4
          %s187 = smul.addr %s18, 32
          %s188 = sadd.s32 %s186, %s187
          %s189 = smul.addr %s188, 4
          %s190 = scalar_lea.vmem %s0, %s189
          // Predicated region
          $region25: #{basic_block_forward.3} parent=23 // pred_check
            _
          $region26: #{basic_block_forward.3} parent=23 // pred_check_branch
            %192 = sbr.rel (0) target = $region28
          $region27: #{basic_block_forward.3} parent=23 // pred_region
            // Predicated region
            $region29: #{basic_block_forward.3} parent=27 // pred_check
              _
            $region30: #{basic_block_forward.3} parent=27 // pred_check_branch
              %194 = sbr.rel target = $region32
            $region31: #{basic_block_forward.3} parent=27 // pred_region
              // Predicated region
              $region44: #{basic_block_forward.3} parent=31 // pred_check
                _
              $region45: #{basic_block_forward.3} parent=31 // pred_check_branch
                %223 = sbr.rel (0) target = $region47
              $region46: #{basic_block_forward.3} parent=31 // pred_region
                loop: start=0, step=1, limit=1
                $region48: #{basic_block_forward.3} parent=46 // loop_pre_header
                  _
                $region49: #{basic_block_forward.3} parent=46 // loop_header
                  %s225 = sphi 0, %s229
                  %p226 = scmp.ge.s32.totalorder %s225, 1
                  %s230 = sphi %s190, %s190
                  %s231 = sphi %s184, %s184
                $region50: #{basic_block_forward.3} parent=46 // loop_header_branch
                  %228 = sbr.rel (%p226) target = $region54
                $region51: #{basic_block_forward.3} parent=46 // loop_body
                  _
                $region52: #{basic_block_forward.3} parent=46 // loop_footer
                  %s229 = sadd.s32 1, %s225
                $region53: #{basic_block_forward.3} parent=46 // loop_footer_branch
                  %224 = sbr.rel target = $region49
                $region54: #{basic_block_forward.3} parent=46 // loop_exit
                  _
                loop: start=0, step=1, limit=1
                $region55: #{basic_block_forward.3} parent=46 // loop_pre_header
                  _
                $region56: #{basic_block_forward.3} parent=46 // loop_header
                  %s234 = sphi 0, %s238
                  %p235 = scmp.ge.s32.totalorder %s234, 1
                  %s239 = sphi %s190, %s190
                  %s240 = sphi %s184, %s184
                $region57: #{basic_block_forward.3} parent=46 // loop_header_branch
                  %237 = sbr.rel (%p235) target = $region61
                $region58: #{basic_block_forward.3} parent=46 // loop_body
                  %v241 = vld [vmem:[%s239] sm:$0xf]
                  %242 = vst [vmem:[%s240] sm:$0xf] %v241
                  %v243 = vld [vmem:[%s239 + $0x10] sm:$0xf]
                  %244 = vst [vmem:[%s240 + $0x4] sm:$0xf] %v243
                  %v245 = vld [vmem:[%s239 + $0x20] sm:$0xf]
                  %246 = vst [vmem:[%s240 + $0x8] sm:$0xf] %v245
                  %v247 = vld [vmem:[%s239 + $0x30] sm:$0xf]
                  %248 = vst [vmem:[%s240 + $0xc] sm:$0xf] %v247
                  %v249 = vld [vmem:[%s239 + $0x40] sm:$0xf]
                  %250 = vst [vmem:[%s240 + $0x10] sm:$0xf] %v249
                  %v251 = vld [vmem:[%s239 + $0x50] sm:$0xf]
                  %252 = vst [vmem:[%s240 + $0x14] sm:$0xf] %v251
                  %v253 = vld [vmem:[%s239 + $0x60] sm:$0xf]
                  %254 = vst [vmem:[%s240 + $0x18] sm:$0xf] %v253
                  %v255 = vld [vmem:[%s239 + $0x70] sm:$0xf]
                  %256 = vst [vmem:[%s240 + $0x1c] sm:$0xf] %v255
                $region59: #{basic_block_forward.3} parent=46 // loop_footer
                  %s238 = sadd.s32 1, %s234
                $region60: #{basic_block_forward.3} parent=46 // loop_footer_branch
                  %233 = sbr.rel target = $region56
                $region61: #{basic_block_forward.3} parent=46 // loop_exit
                  _
              $region47: #{basic_block_forward.3} parent=31 // pred_fallthru
                _
            $region32: #{basic_block_forward.3} parent=27 // pred_fallthru
              _
            // Predicated region
            $region33: #{basic_block_forward.3} parent=27 // pred_check
              _
            $region34: #{basic_block_forward.3} parent=27 // pred_check_branch
              %196 = sbr.rel (0) target = $region36
            $region35: #{basic_block_forward.3} parent=27 // pred_region
              loop: start=0, step=1, limit=1
              $region37: #{basic_block_forward.3} parent=35 // loop_pre_header
                _
              $region38: #{basic_block_forward.3} parent=35 // loop_header
                %s199 = sphi 0, %s203
                %p200 = scmp.ge.s32.totalorder %s199, 1
                %s204 = sphi %s190, %s190
                %s205 = sphi %s184, %s184
              $region39: #{basic_block_forward.3} parent=35 // loop_header_branch
                %202 = sbr.rel (%p200) target = $region43
              $region40: #{basic_block_forward.3} parent=35 // loop_body
                %v206 = vld [vmem:[%s204] sm:$0xf]
                %207 = vst [vmem:[%s205] sm:$0xf] %v206
                %v208 = vld [vmem:[%s204 + $0x10] sm:$0xf]
                %209 = vst [vmem:[%s205 + $0x4] sm:$0xf] %v208
                %v210 = vld [vmem:[%s204 + $0x20] sm:$0xf]
                %211 = vst [vmem:[%s205 + $0x8] sm:$0xf] %v210
                %v212 = vld [vmem:[%s204 + $0x30] sm:$0xf]
                %213 = vst [vmem:[%s205 + $0xc] sm:$0xf] %v212
                %v214 = vld [vmem:[%s204 + $0x40] sm:$0xf]
                %215 = vst [vmem:[%s205 + $0x10] sm:$0xf] %v214
                %v216 = vld [vmem:[%s204 + $0x50] sm:$0xf]
                %217 = vst [vmem:[%s205 + $0x14] sm:$0xf] %v216
                %v218 = vld [vmem:[%s204 + $0x60] sm:$0xf]
                %219 = vst [vmem:[%s205 + $0x18] sm:$0xf] %v218
                %v220 = vld [vmem:[%s204 + $0x70] sm:$0xf]
                %221 = vst [vmem:[%s205 + $0x1c] sm:$0xf] %v220
              $region41: #{basic_block_forward.3} parent=35 // loop_footer
                %s203 = sadd.s32 1, %s199
              $region42: #{basic_block_forward.3} parent=35 // loop_footer_branch
                %198 = sbr.rel target = $region38
              $region43: #{basic_block_forward.3} parent=35 // loop_exit
                _
            $region36: #{basic_block_forward.3} parent=27 // pred_fallthru
              _
          $region28: #{basic_block_forward.3} parent=23 // pred_fallthru
            _
          %257 = vnop
        $region24: #{basic_block_forward.3} parent=19 // pred_fallthru
          _
      $region20: #{basic_block_forward.3} parent=5 // pred_fallthru
        _
      %p258 = scmp.le.s32.totalorder 1, %s11
      %p259 = scmp.lt.s32.totalorder %s11, 3
      %p260 = pnand %p258, %p259
      %p261 = pneg %p260
      // Predicated region
      $region62: #{basic_block_forward.3} parent=5 // pred_check
        _
      $region63: #{basic_block_forward.3} parent=5 // pred_check_branch
        %263 = sbr.rel (%p260) target = $region65
      $region64: #{basic_block_forward.3} parent=5 // pred_region
        %s264 = ssub.s32 %s11, 1
        %s265 = sand.u32 %s38, 1
        %s266 = sand.u32 %s38, 1
        %s267 = smul.addr %s266, 32
        %s268 = scalar_lea.vmem [#allocation2], %s267
        // Predicated region
        $region66: #{basic_block_forward.3} parent=64 // pred_check
          %p269 = pneg %p51
        $region67: #{basic_block_forward.3} parent=64 // pred_check_branch
          %271 = sbr.rel (%p269) target = $region69
        $region68: #{basic_block_forward.3} parent=64 // pred_region
          _
        $region69: #{basic_block_forward.3} parent=64 // pred_fallthru
          _
        %s272 = sand.u32 %s38, 1
        %s273 = sand.u32 %s38, 1
        %s274 = smul.addr %s273, 32
        %s275 = scalar_lea.vmem [#allocation2], %s274
        %p276 = pneg %p51
        %p277 = pneg %p48
        %p278 = pneg %p72
        %p279 = pneg %p69
        %p280 = pneg %p100
        %p281 = pneg %p97
        %s282 = smul.u32 8, %s21
        %p283 = scmp.lt.s32.totalorder %s20, 1
        %s284 = scalar_select %p283, %s20, 1
        %p285 = scmp.lt.s32.totalorder %s282, 7
        %s286 = scalar_select %p285, %s282, 7
        %s287 = smul.addr %s284, 8
        %s288 = sadd.s32 %s286, %s287
        %s289 = smul.addr %s288, 4
        %s290 = scalar_lea.vmem %s2, %s289
        %p291 = pneg %p128
        %p292 = pneg %p125
        %s293 = smul.u32 8, %s21
        %p294 = scmp.lt.s32.totalorder %s20, 1
        %s295 = scalar_select %p294, %s20, 1
        %p296 = scmp.lt.s32.totalorder %s293, 7
        %s297 = scalar_select %p296, %s293, 7
        %s298 = smul.addr %s295, 8
        %s299 = sadd.s32 %s297, %s298
        %s300 = smul.addr %s299, 4
        %s301 = scalar_lea.vmem %s3, %s300
        %p302 = pneg %p156
        %p303 = pneg %p153
        %p304 = scmp.lt.s32.totalorder %s20, 1
        %s305 = scalar_select %p304, %s20, 1
        %p306 = scmp.lt.s32.totalorder %s21, 0
        %s307 = scalar_select %p306, %s21, 0
        %s308 = smul.addr %s307, 2
        %s309 = smul.addr %s305, 2
        %s310 = sadd.s32 %s308, %s309
        %s311 = smul.addr %s310, 2
        %s312 = scalar_lea.vmem %s4, %s311
        %s313 = smul.u32 8, %s21
        %s314 = smul.u32 8, %s21
        %p315 = scmp.lt.s32.totalorder %s20, 1
        %s316 = scalar_select %p315, %s20, 1
        %p317 = scmp.lt.s32.totalorder %s314, 7
        %s318 = scalar_select %p317, %s314, 7
        %s319 = smul.addr %s316, 8
        %s320 = sadd.s32 %s318, %s319
        %s321 = smul.addr %s320, 4
        %s322 = scalar_lea.vmem %s2, %s321
        %s323 = smul.u32 8, %s21
        %s324 = smul.u32 8, %s21
        %p325 = scmp.lt.s32.totalorder %s20, 1
        %s326 = scalar_select %p325, %s20, 1
        %p327 = scmp.lt.s32.totalorder %s324, 7
        %s328 = scalar_select %p327, %s324, 7
        %s329 = smul.addr %s326, 8
        %s330 = sadd.s32 %s328, %s329
        %s331 = smul.addr %s330, 4
        %s332 = scalar_lea.vmem %s3, %s331
        %s333 = smul.u32 8, %s21
        %p334 = scmp.lt.s32.totalorder %s20, 1
        %s335 = scalar_select %p334, %s20, 1
        %p336 = scmp.lt.s32.totalorder %s21, 0
        %s337 = scalar_select %p336, %s21, 0
        %s338 = smul.addr %s337, 2
        %s339 = smul.addr %s335, 2
        %s340 = sadd.s32 %s338, %s339
        %s341 = smul.addr %s340, 2
        %s342 = scalar_lea.vmem %s4, %s341
        %v344 = vld [vmem:[%s268] sm:$0xf]
        %v345 = vld [vmem:[%s268 + $0x4] sm:$0xf]
        %v346 = vld [vmem:[%s268 + $0x8] sm:$0xf]
        %v347 = vld [vmem:[%s268 + $0xc] sm:$0xf]
        %v348 = vld [vmem:[%s268 + $0x10] sm:$0xf]
        %v349 = vld [vmem:[%s268 + $0x14] sm:$0xf]
        %v350 = vld [vmem:[%s268 + $0x18] sm:$0xf]
        %v351 = vld [vmem:[%s268 + $0x1c] sm:$0xf]
        %v352 = vld [vmem:[%s1] sm:$0xff]
        %v353 = vld [vmem:[%s1 + $0x8] sm:$0xff]
        %v354 = vld [vmem:[%s1 + $0x10] sm:$0xff]
        %v355 = vld [vmem:[%s1 + $0x18] sm:$0xff]
        %v356 = vld [vmem:[%s1 + $0x20] sm:$0xff]
        %v357 = vld [vmem:[%s1 + $0x28] sm:$0xff]
        %v358 = vld [vmem:[%s1 + $0x30] sm:$0xff]
        %v359 = vld [vmem:[%s1 + $0x38] sm:$0xff]
        %v360 = vld [vmem:[%s1 + $0x40] sm:$0xff]
        %v361 = vld [vmem:[%s1 + $0x48] sm:$0xff]
        %v362 = vld [vmem:[%s1 + $0x50] sm:$0xff]
        %v363 = vld [vmem:[%s1 + $0x58] sm:$0xff]
        %v364 = vld [vmem:[%s1 + $0x60] sm:$0xff]
        %v365 = vld [vmem:[%s1 + $0x68] sm:$0xff]
        %v366 = vld [vmem:[%s1 + $0x70] sm:$0xff]
        %v367 = vld [vmem:[%s1 + $0x78] sm:$0xff]
        %v376 = vunpack.c.l.b16 %v344
        %v377 = vunpack.c.l.b16 %v345
        %v378 = vunpack.c.l.b16 %v346
        %v379 = vunpack.c.l.b16 %v347
        %v380 = vunpack.c.l.b16 %v348
        %v381 = vunpack.c.l.b16 %v349
        %v382 = vunpack.c.l.b16 %v350
        %v383 = vunpack.c.l.b16 %v351
        %v384 = vpack.c.b16 %v377, %v376
        %v385 = vpack.c.b16 %v379, %v378
        %v386 = vpack.c.b16 %v381, %v380
        %v387 = vpack.c.b16 %v383, %v382
        %v408 = vunpack.c.l.b16 %v352
        %v409 = vunpack.c.h.b16 %v352
        %v410 = vunpack.c.l.b16 %v353
        %v411 = vunpack.c.h.b16 %v353
        %v412 = vunpack.c.l.b16 %v354
        %v413 = vunpack.c.h.b16 %v354
        %v414 = vunpack.c.l.b16 %v355
        %v415 = vunpack.c.h.b16 %v355
        %v416 = vunpack.c.l.b16 %v356
        %v417 = vunpack.c.h.b16 %v356
        %v418 = vunpack.c.l.b16 %v357
        %v419 = vunpack.c.h.b16 %v357
        %v420 = vunpack.c.l.b16 %v358
        %v421 = vunpack.c.h.b16 %v358
        %v422 = vunpack.c.l.b16 %v359
        %v423 = vunpack.c.h.b16 %v359
        %v424 = vunpack.c.l.b16 %v360
        %v425 = vunpack.c.h.b16 %v360
        %v426 = vunpack.c.l.b16 %v361
        %v427 = vunpack.c.h.b16 %v361
        %v428 = vunpack.c.l.b16 %v362
        %v429 = vunpack.c.h.b16 %v362
        %v430 = vunpack.c.l.b16 %v363
        %v431 = vunpack.c.h.b16 %v363
        %v432 = vunpack.c.l.b16 %v364
        %v433 = vunpack.c.h.b16 %v364
        %v434 = vunpack.c.l.b16 %v365
        %v435 = vunpack.c.h.b16 %v365
        %v436 = vunpack.c.l.b16 %v366
        %v437 = vunpack.c.h.b16 %v366
        %v438 = vunpack.c.l.b16 %v367
        %v439 = vunpack.c.h.b16 %v367
        %v440 = vpack.c.b16 %v410, %v408
        %v441 = vpack.c.b16 %v411, %v409
        %v442 = vpack.c.b16 %v414, %v412
        %v443 = vpack.c.b16 %v415, %v413
        %v444 = vpack.c.b16 %v418, %v416
        %v445 = vpack.c.b16 %v419, %v417
        %v446 = vpack.c.b16 %v422, %v420
        %v447 = vpack.c.b16 %v423, %v421
        %v448 = vpack.c.b16 %v426, %v424
        %v449 = vpack.c.b16 %v427, %v425
        %v450 = vpack.c.b16 %v430, %v428
        %v451 = vpack.c.b16 %v431, %v429
        %v452 = vpack.c.b16 %v434, %v432
        %v453 = vpack.c.b16 %v435, %v433
        %v454 = vpack.c.b16 %v438, %v436
        %v455 = vpack.c.b16 %v439, %v437
        %472 = vmatprep.subr.bf16.mxu0 %v441
        %473 = vmatpush1.bf16.msra.mxu0 %v440
        %474 = vmatprep.subr.bf16.mxu0 %v443
        %475 = vmatpush1.bf16.msra.mxu0 %v442
        %476 = vmatprep.subr.bf16.mxu0 %v445
        %477 = vmatpush1.bf16.msra.mxu0 %v444
        %478 = vmatprep.subr.bf16.mxu0 %v447
        %479 = vmatpush1.bf16.msra.mxu0 %v446
        %480 = vmatprep.subr.bf16.mxu0 %v449
        %481 = vmatpush1.bf16.msra.mxu0 %v448
        %482 = vmatprep.subr.bf16.mxu0 %v451
        %483 = vmatpush1.bf16.msra.mxu0 %v450
        %484 = vmatprep.subr.bf16.mxu0 %v453
        %485 = vmatpush1.bf16.msra.mxu0 %v452
        %486 = vmatprep.subr.bf16.mxu0 %v455
        %487 = vmatpush1.bf16.msra.mxu0 %v454
        %488 = vmatprep.subr.bf16.mxu0 0
        %489 = vmatpush1.bf16.msra.mxu0 0
        %490 = vmatprep.subr.bf16.mxu0 0
        %491 = vmatpush1.bf16.msra.mxu0 0
        %492 = vmatprep.subr.bf16.mxu0 0
        %493 = vmatpush1.bf16.msra.mxu0 0
        %494 = vmatprep.subr.bf16.mxu0 0
        %495 = vmatpush1.bf16.msra.mxu0 0
        %496 = vmatprep.subr.bf16.mxu0 0
        %497 = vmatpush1.bf16.msra.mxu0 0
        %498 = vmatprep.subr.bf16.mxu0 0
        %499 = vmatpush1.bf16.msra.mxu0 0
        %500 = vmatprep.subr.bf16.mxu0 0
        %501 = vmatpush1.bf16.msra.mxu0 0
        %502 = vmatprep.subr.bf16.mxu0 0
        %503 = vmatpush1.bf16.msra.mxu0 0
        %504 = vmatprep.mubr.bf16.mxu0 0
        %505 = vmatmul.mubr.bf16.gmra.mrb[0].mxu0 %v384
        %v506 = vpop.f32.mrb[0].mxu0
        %v507 = vadd.f32 0.0, %v506
        %v508 = vpop.f32.mrb[0].mxu0
        %v509 = vadd.f32 0.0, %v508
        %v510 = vpop.f32.mrb[0].mxu0
        %v511 = vadd.f32 0.0, %v510
        %v512 = vpop.f32.mrb[0].mxu0
        %v513 = vadd.f32 0.0, %v512
        %514 = vmatprep.mubr.bf16.mxu0 0
        %515 = vmatmul.mubr.bf16.gmra.mrb[0].mxu0 %v385
        %v516 = vpop.f32.mrb[0].mxu0
        %v517 = vadd.f32 0.0, %v516
        %v518 = vpop.f32.mrb[0].mxu0
        %v519 = vadd.f32 0.0, %v518
        %v520 = vpop.f32.mrb[0].mxu0
        %v521 = vadd.f32 0.0, %v520
        %v522 = vpop.f32.mrb[0].mxu0
        %v523 = vadd.f32 0.0, %v522
        %524 = vmatprep.mubr.bf16.mxu0 0
        %525 = vmatmul.mubr.bf16.gmra.mrb[0].mxu0 %v386
        %v526 = vpop.f32.mrb[0].mxu0
        %v527 = vadd.f32 0.0, %v526
        %v528 = vpop.f32.mrb[0].mxu0
        %v529 = vadd.f32 0.0, %v528
        %v530 = vpop.f32.mrb[0].mxu0
        %v531 = vadd.f32 0.0, %v530
        %v532 = vpop.f32.mrb[0].mxu0
        %v533 = vadd.f32 0.0, %v532
        %534 = vmatprep.mubr.bf16.mxu0 0
        %535 = vmatmul.mubr.bf16.gmra.mrb[0].mxu0 %v387
        %v536 = vpop.f32.mrb[0].mxu0
        %v537 = vadd.f32 0.0, %v536
        %v538 = vpop.f32.mrb[0].mxu0
        %v539 = vadd.f32 0.0, %v538
        %v540 = vpop.f32.mrb[0].mxu0
        %v541 = vadd.f32 0.0, %v540
        %v542 = vpop.f32.mrb[0].mxu0
        %v543 = vadd.f32 0.0, %v542
        %544 = vdwg.mxu0
        %v545 = vpack.c.bf16 %v507, %v507
        %v546 = vpack.c.bf16 %v511, %v511
        %v547 = vpack.c.bf16 %v517, %v517
        %v548 = vpack.c.bf16 %v521, %v521
        %v549 = vpack.c.bf16 %v527, %v527
        %v550 = vpack.c.bf16 %v531, %v531
        %v551 = vpack.c.bf16 %v537, %v537
        %v552 = vpack.c.bf16 %v541, %v541
        %553 = vst [vmem:[%s322] sm:$0xf] %v545
        %554 = vst [vmem:[%s322 + $0x4] sm:$0xf] %v546
        %555 = vst [vmem:[%s322 + $0x8] sm:$0xf] %v547
        %556 = vst [vmem:[%s322 + $0xc] sm:$0xf] %v548
        %557 = vst [vmem:[%s322 + $0x10] sm:$0xf] %v549
        %558 = vst [vmem:[%s322 + $0x14] sm:$0xf] %v550
        %559 = vst [vmem:[%s322 + $0x18] sm:$0xf] %v551
        %560 = vst [vmem:[%s322 + $0x1c] sm:$0xf] %v552
        %v561 = vpack.c.bf16 %v509, %v509
        %v562 = vpack.c.bf16 %v513, %v513
        %v563 = vpack.c.bf16 %v519, %v519
        %v564 = vpack.c.bf16 %v523, %v523
        %v565 = vpack.c.bf16 %v529, %v529
        %v566 = vpack.c.bf16 %v533, %v533
        %v567 = vpack.c.bf16 %v539, %v539
        %v568 = vpack.c.bf16 %v543, %v543
        %569 = vst [vmem:[%s332] sm:$0xf] %v561
        %570 = vst [vmem:[%s332 + $0x4] sm:$0xf] %v562
        %571 = vst [vmem:[%s332 + $0x8] sm:$0xf] %v563
        %572 = vst [vmem:[%s332 + $0xc] sm:$0xf] %v564
        %573 = vst [vmem:[%s332 + $0x10] sm:$0xf] %v565
        %574 = vst [vmem:[%s332 + $0x14] sm:$0xf] %v566
        %575 = vst [vmem:[%s332 + $0x18] sm:$0xf] %v567
        %576 = vst [vmem:[%s332 + $0x1c] sm:$0xf] %v568
        %v577 = vadd.f32 %v507, %v511
        %v578 = vadd.f32 %v577, %v517
        %v579 = vadd.f32 %v578, %v521
        %v580 = vadd.f32 %v579, %v527
        %v581 = vadd.f32 %v580, %v531
        %v582 = vadd.f32 %v581, %v537
        %v583 = vadd.f32 %v582, %v541
        %v584 = vrot.slane %v583, 4
        %v585 = vadd.f32 %v583, %v584
        %v586 = vrot.slane %v585, 2
        %v587 = vadd.f32 %v585, %v586
        %v588 = vrot.slane %v587, 1
        %v589 = vadd.f32 %v587, %v588
        %v590 = vadd.f32 %v509, %v513
        %v591 = vadd.f32 %v590, %v519
        %v592 = vadd.f32 %v591, %v523
        %v593 = vadd.f32 %v592, %v529
        %v594 = vadd.f32 %v593, %v533
        %v595 = vadd.f32 %v594, %v539
        %v596 = vadd.f32 %v595, %v543
        %v597 = vrot.slane %v596, 4
        %v598 = vadd.f32 %v596, %v597
        %v599 = vrot.slane %v598, 2
        %v600 = vadd.f32 %v598, %v599
        %v601 = vrot.slane %v600, 1
        %v602 = vadd.f32 %v600, %v601
        %v605 = vcombine.low %v589, %v602
        %v607 = vunpack.c.l.s4 1966171168
        %v608 = vunpack.c.0.s8 %v607
        %v609 = vlaneseq
        %v610 = vshrl.u32 %v609, 7
        %v611 = vsub.s32 %v608, %v610
        %v612 = vrot.slane %v605, %v611
        %v614 = vunpack.c.l.s4 1966171168
        %v615 = vunpack.c.0.s8 %v614
        %v616 = vlaneseq
        %v617 = vshrl.u32 %v616, 7
        %v618 = vsub.s32 %v615, %v617
        %v619 = vrot.slane %v612, %v618
        %v621 = vlaneseq
        %vm622 = vcmp.ge.s32.totalorder %v621, 0
        %vm623 = vcmp.lt.s32.totalorder %v621, 256
        %vm624 = vmand %vm622, %vm623
        %625 = vst.msk [vmem:[%s342] ss:$2 sm:$0x3] %vm624, %v619
        %v626 = vmul.f32 %v507, %v507
        %v627 = vmul.f32 %v509, %v509
        %v628 = vmul.f32 %v511, %v511
        %v629 = vmul.f32 %v513, %v513
        %v630 = vmul.f32 %v517, %v517
        %v631 = vmul.f32 %v519, %v519
        %v632 = vmul.f32 %v521, %v521
        %v633 = vmul.f32 %v523, %v523
        %v634 = vmul.f32 %v527, %v527
        %v635 = vmul.f32 %v529, %v529
        %v636 = vmul.f32 %v531, %v531
        %v637 = vmul.f32 %v533, %v533
        %v638 = vmul.f32 %v537, %v537
        %v639 = vmul.f32 %v539, %v539
        %v640 = vmul.f32 %v541, %v541
        %v641 = vmul.f32 %v543, %v543
        %v642 = vadd.f32 %v626, %v628
        %v643 = vadd.f32 %v642, %v630
        %v644 = vadd.f32 %v643, %v632
        %v645 = vadd.f32 %v644, %v634
        %v646 = vadd.f32 %v645, %v636
        %v647 = vadd.f32 %v646, %v638
        %v648 = vadd.f32 %v647, %v640
        %v649 = vrot.slane %v648, 4
        %v650 = vadd.f32 %v648, %v649
        %v651 = vrot.slane %v650, 2
        %v652 = vadd.f32 %v650, %v651
        %v653 = vrot.slane %v652, 1
        %v654 = vadd.f32 %v652, %v653
        %v655 = vadd.f32 %v627, %v629
        %v656 = vadd.f32 %v655, %v631
        %v657 = vadd.f32 %v656, %v633
        %v658 = vadd.f32 %v657, %v635
        %v659 = vadd.f32 %v658, %v637
        %v660 = vadd.f32 %v659, %v639
        %v661 = vadd.f32 %v660, %v641
        %v662 = vrot.slane %v661, 4
        %v663 = vadd.f32 %v661, %v662
        %v664 = vrot.slane %v663, 2
        %v665 = vadd.f32 %v663, %v664
        %v666 = vrot.slane %v665, 1
        %v667 = vadd.f32 %v665, %v666
        %v670 = vcombine.low %v654, %v667
        %v672 = vunpack.c.l.s4 1966171168
        %v673 = vunpack.c.0.s8 %v672
        %v674 = vlaneseq
        %v675 = vshrl.u32 %v674, 7
        %v676 = vsub.s32 %v673, %v675
        %v677 = vrot.slane %v670, %v676
        %v679 = vunpack.c.l.s4 1966171168
        %v680 = vunpack.c.0.s8 %v679
        %v681 = vlaneseq
        %v682 = vshrl.u32 %v681, 7
        %v683 = vsub.s32 %v680, %v682
        %v684 = vrot.slane %v677, %v683
        %s686 = scalar_lea.vmem %s342, 1
        %687 = vst.msk [vmem:[%s686] ss:$2 sm:$0x3] %vm624, %v684
        %s688 = smul.u32 8, %s21
        %p689 = scmp.lt.s32.totalorder %s20, 1
        %s690 = scalar_select %p689, %s20, 1
        %p691 = scmp.lt.s32.totalorder %s688, 7
        %s692 = scalar_select %p691, %s688, 7
        %s693 = smul.addr %s690, 8
        %s694 = sadd.s32 %s692, %s693
        %s695 = smul.addr %s694, 4
        %s696 = scalar_lea.vmem %s2, %s695
        %s697 = smul.u32 8, %s21
        %p698 = scmp.lt.s32.totalorder %s20, 1
        %s699 = scalar_select %p698, %s20, 1
        %p700 = scmp.lt.s32.totalorder %s697, 7
        %s701 = scalar_select %p700, %s697, 7
        %s702 = smul.addr %s699, 8
        %s703 = sadd.s32 %s701, %s702
        %s704 = smul.addr %s703, 4
        %s705 = scalar_lea.vmem %s3, %s704
        %p706 = scmp.lt.s32.totalorder %s20, 1
        %s707 = scalar_select %p706, %s20, 1
        %p708 = scmp.lt.s32.totalorder %s21, 0
        %s709 = scalar_select %p708, %s21, 0
        %s710 = smul.addr %s709, 2
        %s711 = smul.addr %s707, 2
        %s712 = sadd.s32 %s710, %s711
        %s713 = smul.addr %s712, 2
        %s714 = scalar_lea.vmem %s4, %s713
        // Predicated region
        $region70: #{basic_block_forward.3} parent=64 // pred_check
          %p715 = pneg %p97
        $region71: #{basic_block_forward.3} parent=64 // pred_check_branch
          %717 = sbr.rel (%p715) target = $region73
        $region72: #{basic_block_forward.3} parent=64 // pred_region
          %s718 = smul.u32 8, %s21
        $region73: #{basic_block_forward.3} parent=64 // pred_fallthru
          _
        // Predicated region
        $region74: #{basic_block_forward.3} parent=64 // pred_check
          %p719 = pneg %p125
        $region75: #{basic_block_forward.3} parent=64 // pred_check_branch
          %721 = sbr.rel (%p719) target = $region77
        $region76: #{basic_block_forward.3} parent=64 // pred_region
          %s722 = smul.u32 8, %s21
        $region77: #{basic_block_forward.3} parent=64 // pred_fallthru
          _
        // Predicated region
        $region78: #{basic_block_forward.3} parent=64 // pred_check
          %p723 = pneg %p153
        $region79: #{basic_block_forward.3} parent=64 // pred_check_branch
          %725 = sbr.rel (%p723) target = $region81
        $region80: #{basic_block_forward.3} parent=64 // pred_region
          _
        $region81: #{basic_block_forward.3} parent=64 // pred_fallthru
          _
      $region65: #{basic_block_forward.3} parent=5 // pred_fallthru
        _
      %p726 = scmp.le.s32.totalorder 2, %s11
      // Predicated region
      $region82: #{basic_block_forward.3} parent=5 // pred_check
        %p727 = pneg %p726
      $region83: #{basic_block_forward.3} parent=5 // pred_check_branch
        %729 = sbr.rel (%p727) target = $region85
      $region84: #{basic_block_forward.3} parent=5 // pred_region
        %s730 = ssub.s32 %s11, 2
        // Predicated region
        $region86: #{basic_block_forward.3} parent=84 // pred_check
          %p731 = pneg %p103
        $region87: #{basic_block_forward.3} parent=84 // pred_check_branch
          %733 = sbr.rel (%p731) target = $region89
        $region88: #{basic_block_forward.3} parent=84 // pred_region
          %s734 = smul.u32 8, %s23
          %p735 = scmp.lt.s32.totalorder %s22, 1
          %s736 = scalar_select %p735, %s22, 1
          %p737 = scmp.lt.s32.totalorder %s734, 7
          %s738 = scalar_select %p737, %s734, 7
          %s739 = smul.addr %s736, 8
          %s740 = sadd.s32 %s738, %s739
          %s741 = smul.addr %s740, 4
          %s742 = scalar_lea.vmem %s2, %s741
        $region89: #{basic_block_forward.3} parent=84 // pred_fallthru
          _
        // Predicated region
        $region90: #{basic_block_forward.3} parent=84 // pred_check
          %p743 = pneg %p131
        $region91: #{basic_block_forward.3} parent=84 // pred_check_branch
          %745 = sbr.rel (%p743) target = $region93
        $region92: #{basic_block_forward.3} parent=84 // pred_region
          %s746 = smul.u32 8, %s23
          %p747 = scmp.lt.s32.totalorder %s22, 1
          %s748 = scalar_select %p747, %s22, 1
          %p749 = scmp.lt.s32.totalorder %s746, 7
          %s750 = scalar_select %p749, %s746, 7
          %s751 = smul.addr %s748, 8
          %s752 = sadd.s32 %s750, %s751
          %s753 = smul.addr %s752, 4
          %s754 = scalar_lea.vmem %s3, %s753
        $region93: #{basic_block_forward.3} parent=84 // pred_fallthru
          _
        // Predicated region
        $region94: #{basic_block_forward.3} parent=84 // pred_check
          %p755 = pneg %p159
        $region95: #{basic_block_forward.3} parent=84 // pred_check_branch
          %757 = sbr.rel (%p755) target = $region97
        $region96: #{basic_block_forward.3} parent=84 // pred_region
          %p758 = scmp.lt.s32.totalorder %s22, 1
          %s759 = scalar_select %p758, %s22, 1
          %p760 = scmp.lt.s32.totalorder %s23, 0
          %s761 = scalar_select %p760, %s23, 0
          %s762 = smul.addr %s761, 2
          %s763 = smul.addr %s759, 2
          %s764 = sadd.s32 %s762, %s763
          %s765 = smul.addr %s764, 2
          %s766 = scalar_lea.vmem %s4, %s765
        $region97: #{basic_block_forward.3} parent=84 // pred_fallthru
          _
      $region85: #{basic_block_forward.3} parent=5 // pred_fallthru
        _
    $region6: #{basic_block_forward.3} parent=1 // loop_footer
      %s15 = sadd.s32 1, %s11
    $region7: #{basic_block_forward.3} parent=1 // loop_footer_branch
      %10 = sbr.rel target = $region3
    $region8: #{basic_block_forward.3} parent=1 // loop_exit
      _

// kernel: basic_block_forward.5
$region0: #{basic_block_forward.5}
  #allocation0 [shape = 'u32[]', space=smem, size = 0x4, offset = 0x4, fixed_abs, tag = 'smem constant byte address 0x4 - core index']
  #allocation1 [shape = 'u32[144,128]{1,0:T(1,128)}', space=vmem, size = 0x12000, scoped, tag = 'internal scratch']
  %s0 = inlined_call_operand.vmem [shape: bf16[128,128], index: 0, kind: input, shape index: {}]
  %s1 = inlined_call_operand.vmem [shape: bf16[128,128], index: 1, kind: input, shape index: {}]
  %s2 = inlined_call_operand.vmem [shape: f32[1,128], index: 2, kind: input, shape index: {}]
  %s3 = inlined_call_operand.vmem [shape: f32[1,128], index: 3, kind: input, shape index: {}]
  %s4 = inlined_call_operand.vmem [shape: f32[1,128], index: 4, kind: input, shape index: {}]
  %s5 = inlined_call_operand.vmem [shape: f32[1,128], index: 5, kind: input, shape index: {}]
  %s6 = inlined_call_operand.vmem [shape: f32[128,128], index: 6, kind: output, shape index: {}]
  %s7 = sld [smem:[#allocation0]]
  $region34: #{basic_block_forward.5} parent=0
    _
  %s9 = ssub.s32 1, %s7
  %s10 = scalar_select 0, %s9, %s7
  // Predicated region
  $region2: #{basic_block_forward.5} parent=0 // pred_check
    _
  $region3: #{basic_block_forward.5} parent=0 // pred_check_branch
    %12 = sbr.rel (0) target = $region5
  $region4: #{basic_block_forward.5} parent=0 // pred_region
    _
  $region5: #{basic_block_forward.5} parent=0 // pred_fallthru
    _
  // Predicated region
  $region6: #{basic_block_forward.5} parent=0 // pred_check
    _
  $region7: #{basic_block_forward.5} parent=0 // pred_check_branch
    %14 = sbr.rel (0) target = $region9
  $region8: #{basic_block_forward.5} parent=0 // pred_region
    _
  $region9: #{basic_block_forward.5} parent=0 // pred_fallthru
    _
  // Predicated region
  $region10: #{basic_block_forward.5} parent=0 // pred_check
    _
  $region11: #{basic_block_forward.5} parent=0 // pred_check_branch
    %16 = sbr.rel (0) target = $region13
  $region12: #{basic_block_forward.5} parent=0 // pred_region
    _
  $region13: #{basic_block_forward.5} parent=0 // pred_fallthru
    _
  // Predicated region
  $region14: #{basic_block_forward.5} parent=0 // pred_check
    _
  $region15: #{basic_block_forward.5} parent=0 // pred_check_branch
    %18 = sbr.rel (0) target = $region17
  $region16: #{basic_block_forward.5} parent=0 // pred_region
    _
  $region17: #{basic_block_forward.5} parent=0 // pred_fallthru
    _
  // Predicated region
  $region18: #{basic_block_forward.5} parent=0 // pred_check
    _
  $region19: #{basic_block_forward.5} parent=0 // pred_check_branch
    %20 = sbr.rel (0) target = $region21
  $region20: #{basic_block_forward.5} parent=0 // pred_region
    _
  $region21: #{basic_block_forward.5} parent=0 // pred_fallthru
    _
  // Predicated region
  $region22: #{basic_block_forward.5} parent=0 // pred_check
    _
  $region23: #{basic_block_forward.5} parent=0 // pred_check_branch
    %22 = sbr.rel (0) target = $region25
  $region24: #{basic_block_forward.5} parent=0 // pred_region
    _
  $region25: #{basic_block_forward.5} parent=0 // pred_fallthru
    _
  %v23 = vld [vmem:[%s0] sm:$0xf]
  %v24 = vld [vmem:[%s0 + $0x4] sm:$0xf]
  %v25 = vld [vmem:[%s0 + $0x8] sm:$0xf]
  %v26 = vld [vmem:[%s0 + $0xc] sm:$0xf]
  %v27 = vld [vmem:[%s0 + $0x10] sm:$0xf]
  %v28 = vld [vmem:[%s0 + $0x14] sm:$0xf]
  %v29 = vld [vmem:[%s0 + $0x18] sm:$0xf]
  %v30 = vld [vmem:[%s0 + $0x1c] sm:$0xf]
  %v31 = vld [vmem:[%s0 + $0x20] sm:$0xf]
  %v32 = vld [vmem:[%s0 + $0x24] sm:$0xf]
  %v33 = vld [vmem:[%s0 + $0x28] sm:$0xf]
  %v34 = vld [vmem:[%s0 + $0x2c] sm:$0xf]
  %v35 = vld [vmem:[%s0 + $0x30] sm:$0xf]
  %v36 = vld [vmem:[%s0 + $0x34] sm:$0xf]
  %v37 = vld [vmem:[%s0 + $0x38] sm:$0xf]
  %v38 = vld [vmem:[%s0 + $0x3c] sm:$0xf]
  %v39 = vunpack.c.l.bf16 %v23
  %v40 = vunpack.c.l.bf16 %v24
  %v41 = vunpack.c.l.bf16 %v25
  %v42 = vunpack.c.l.bf16 %v26
  %v43 = vunpack.c.l.bf16 %v27
  %v44 = vunpack.c.l.bf16 %v28
  %v45 = vunpack.c.l.bf16 %v29
  %v46 = vunpack.c.l.bf16 %v30
  %v47 = vunpack.c.l.bf16 %v31
  %v48 = vunpack.c.l.bf16 %v32
  %v49 = vunpack.c.l.bf16 %v33
  %v50 = vunpack.c.l.bf16 %v34
  %v51 = vunpack.c.l.bf16 %v35
  %v52 = vunpack.c.l.bf16 %v36
  %v53 = vunpack.c.l.bf16 %v37
  %v54 = vunpack.c.l.bf16 %v38
  %v55 = vld [vmem:[%s2] sm:$0x1]
  %v57 = vlaneseq
  %v58 = vshrl.u32 %v57, 7
  %v59 = vsub.s32 0, %v58
  %v60 = vrot.slane %v55, %v59
  %v62 = vmul.f32 %v39, %v60
  %v63 = vmul.f32 %v40, %v60
  %v64 = vmul.f32 %v41, %v60
  %v65 = vmul.f32 %v42, %v60
  %v66 = vmul.f32 %v43, %v60
  %v67 = vmul.f32 %v44, %v60
  %v68 = vmul.f32 %v45, %v60
  %v69 = vmul.f32 %v46, %v60
  %v70 = vmul.f32 %v47, %v60
  %v71 = vmul.f32 %v48, %v60
  %v72 = vmul.f32 %v49, %v60
  %v73 = vmul.f32 %v50, %v60
  %v74 = vmul.f32 %v51, %v60
  %v75 = vmul.f32 %v52, %v60
  %v76 = vmul.f32 %v53, %v60
  %v77 = vmul.f32 %v54, %v60
  %v78 = vld [vmem:[%s3] sm:$0x1]
  %v80 = vlaneseq
  %v81 = vshrl.u32 %v80, 7
  %v82 = vsub.s32 0, %v81
  %v83 = vrot.slane %v78, %v82
  %v85 = vadd.f32 %v62, %v83
  %v86 = vadd.f32 %v63, %v83
  %v87 = vadd.f32 %v64, %v83
  %v88 = vadd.f32 %v65, %v83
  %v89 = vadd.f32 %v66, %v83
  %v90 = vadd.f32 %v67, %v83
  %v91 = vadd.f32 %v68, %v83
  %v92 = vadd.f32 %v69, %v83
  %v93 = vadd.f32 %v70, %v83
  %v94 = vadd.f32 %v71, %v83
  %v95 = vadd.f32 %v72, %v83
  %v96 = vadd.f32 %v73, %v83
  %v97 = vadd.f32 %v74, %v83
  %v98 = vadd.f32 %v75, %v83
  %v99 = vadd.f32 %v76, %v83
  %v100 = vadd.f32 %v77, %v83
  %v101 = vmax.f32 %v85, 0.0
  %v102 = vmax.f32 %v86, 0.0
  %v103 = vmax.f32 %v87, 0.0
  %v104 = vmax.f32 %v88, 0.0
  %v105 = vmax.f32 %v89, 0.0
  %v106 = vmax.f32 %v90, 0.0
  %v107 = vmax.f32 %v91, 0.0
  %v108 = vmax.f32 %v92, 0.0
  %v109 = vmax.f32 %v93, 0.0
  %v110 = vmax.f32 %v94, 0.0
  %v111 = vmax.f32 %v95, 0.0
  %v112 = vmax.f32 %v96, 0.0
  %v113 = vmax.f32 %v97, 0.0
  %v114 = vmax.f32 %v98, 0.0
  %v115 = vmax.f32 %v99, 0.0
  %v116 = vmax.f32 %v100, 0.0
  %v117 = vld [vmem:[%s1] sm:$0xf]
  %v118 = vld [vmem:[%s1 + $0x4] sm:$0xf]
  %v119 = vld [vmem:[%s1 + $0x8] sm:$0xf]
  %v120 = vld [vmem:[%s1 + $0xc] sm:$0xf]
  %v121 = vld [vmem:[%s1 + $0x10] sm:$0xf]
  %v122 = vld [vmem:[%s1 + $0x14] sm:$0xf]
  %v123 = vld [vmem:[%s1 + $0x18] sm:$0xf]
  %v124 = vld [vmem:[%s1 + $0x1c] sm:$0xf]
  %v125 = vld [vmem:[%s1 + $0x20] sm:$0xf]
  %v126 = vld [vmem:[%s1 + $0x24] sm:$0xf]
  %v127 = vld [vmem:[%s1 + $0x28] sm:$0xf]
  %v128 = vld [vmem:[%s1 + $0x2c] sm:$0xf]
  %v129 = vld [vmem:[%s1 + $0x30] sm:$0xf]
  %v130 = vld [vmem:[%s1 + $0x34] sm:$0xf]
  %v131 = vld [vmem:[%s1 + $0x38] sm:$0xf]
  %v132 = vld [vmem:[%s1 + $0x3c] sm:$0xf]
  %v133 = vunpack.c.l.bf16 %v117
  %v134 = vunpack.c.l.bf16 %v118
  %v135 = vunpack.c.l.bf16 %v119
  %v136 = vunpack.c.l.bf16 %v120
  %v137 = vunpack.c.l.bf16 %v121
  %v138 = vunpack.c.l.bf16 %v122
  %v139 = vunpack.c.l.bf16 %v123
  %v140 = vunpack.c.l.bf16 %v124
  %v141 = vunpack.c.l.bf16 %v125
  %v142 = vunpack.c.l.bf16 %v126
  %v143 = vunpack.c.l.bf16 %v127
  %v144 = vunpack.c.l.bf16 %v128
  %v145 = vunpack.c.l.bf16 %v129
  %v146 = vunpack.c.l.bf16 %v130
  %v147 = vunpack.c.l.bf16 %v131
  %v148 = vunpack.c.l.bf16 %v132
  %v149 = vld [vmem:[%s4] sm:$0x1]
  %v151 = vlaneseq
  %v152 = vshrl.u32 %v151, 7
  %v153 = vsub.s32 0, %v152
  %v154 = vrot.slane %v149, %v153
  %v156 = vmul.f32 %v133, %v154
  %v157 = vmul.f32 %v134, %v154
  %v158 = vmul.f32 %v135, %v154
  %v159 = vmul.f32 %v136, %v154
  %v160 = vmul.f32 %v137, %v154
  %v161 = vmul.f32 %v138, %v154
  %v162 = vmul.f32 %v139, %v154
  %v163 = vmul.f32 %v140, %v154
  %v164 = vmul.f32 %v141, %v154
  %v165 = vmul.f32 %v142, %v154
  %v166 = vmul.f32 %v143, %v154
  %v167 = vmul.f32 %v144, %v154
  %v168 = vmul.f32 %v145, %v154
  %v169 = vmul.f32 %v146, %v154
  %v170 = vmul.f32 %v147, %v154
  %v171 = vmul.f32 %v148, %v154
  %v172 = vadd.f32 %v101, %v156
  %v173 = vadd.f32 %v102, %v157
  %v174 = vadd.f32 %v103, %v158
  %v175 = vadd.f32 %v104, %v159
  %v176 = vadd.f32 %v105, %v160
  %v177 = vadd.f32 %v106, %v161
  %v178 = vadd.f32 %v107, %v162
  %v179 = vadd.f32 %v108, %v163
  %v180 = vadd.f32 %v109, %v164
  %v181 = vadd.f32 %v110, %v165
  %v182 = vadd.f32 %v111, %v166
  %v183 = vadd.f32 %v112, %v167
  %v184 = vadd.f32 %v113, %v168
  %v185 = vadd.f32 %v114, %v169
  %v186 = vadd.f32 %v115, %v170
  %v187 = vadd.f32 %v116, %v171
  %v188 = vld [vmem:[%s5] sm:$0x1]
  %v190 = vlaneseq
  %v191 = vshrl.u32 %v190, 7
  %v192 = vsub.s32 0, %v191
  %v193 = vrot.slane %v188, %v192
  %v195 = vadd.f32 %v172, %v193
  %v196 = vadd.f32 %v173, %v193
  %v197 = vadd.f32 %v174, %v193
  %v198 = vadd.f32 %v175, %v193
  %v199 = vadd.f32 %v176, %v193
  %v200 = vadd.f32 %v177, %v193
  %v201 = vadd.f32 %v178, %v193
  %v202 = vadd.f32 %v179, %v193
  %v203 = vadd.f32 %v180, %v193
  %v204 = vadd.f32 %v181, %v193
  %v205 = vadd.f32 %v182, %v193
  %v206 = vadd.f32 %v183, %v193
  %v207 = vadd.f32 %v184, %v193
  %v208 = vadd.f32 %v185, %v193
  %v209 = vadd.f32 %v186, %v193
  %v210 = vadd.f32 %v187, %v193
  %211 = vst [vmem:[%s6] sm:$0xff] %v195
  %212 = vst [vmem:[%s6 + $0x8] sm:$0xff] %v196
  %213 = vst [vmem:[%s6 + $0x10] sm:$0xff] %v197
  %214 = vst [vmem:[%s6 + $0x18] sm:$0xff] %v198
  %215 = vst [vmem:[%s6 + $0x20] sm:$0xff] %v199
  %216 = vst [vmem:[%s6 + $0x28] sm:$0xff] %v200
  %217 = vst [vmem:[%s6 + $0x30] sm:$0xff] %v201
  %218 = vst [vmem:[%s6 + $0x38] sm:$0xff] %v202
  %219 = vst [vmem:[%s6 + $0x40] sm:$0xff] %v203
  %220 = vst [vmem:[%s6 + $0x48] sm:$0xff] %v204
  %221 = vst [vmem:[%s6 + $0x50] sm:$0xff] %v205
  %222 = vst [vmem:[%s6 + $0x58] sm:$0xff] %v206
  %223 = vst [vmem:[%s6 + $0x60] sm:$0xff] %v207
  %224 = vst [vmem:[%s6 + $0x68] sm:$0xff] %v208
  %225 = vst [vmem:[%s6 + $0x70] sm:$0xff] %v209
  %226 = vst [vmem:[%s6 + $0x78] sm:$0xff] %v210
  // Predicated region
  $region26: #{basic_block_forward.5} parent=0 // pred_check
    _
  $region27: #{basic_block_forward.5} parent=0 // pred_check_branch
    %228 = sbr.rel (0) target = $region29
  $region28: #{basic_block_forward.5} parent=0 // pred_region
    _
  $region29: #{basic_block_forward.5} parent=0 // pred_fallthru
    _
  // Predicated region
  $region30: #{basic_block_forward.5} parent=0 // pred_check
    _
  $region31: #{basic_block_forward.5} parent=0 // pred_check_branch
    %230 = sbr.rel (0) target = $region33
  $region32: #{basic_block_forward.5} parent=0 // pred_region
    _
  $region33: #{basic_block_forward.5} parent=0 // pred_fallthru
    _

// kernel: basic_block_forward.4
$region0: #{basic_block_forward.4}
  #allocation0 [shape = 'u32[]', space=smem, size = 0x4, offset = 0x4, fixed_abs, tag = 'smem constant byte address 0x4 - core index']
  #allocation1 [shape = 'u32[144,128]{1,0:T(1,128)}', space=vmem, size = 0x12000, scoped, tag = 'internal scratch']
  #allocation2 [shape = 'f32[10,10,128]{2,1,0:T(8,128)}', space=vmem, size = 0x14000, scoped, tag = 'scratch operand']
  #allocation3 [shape = 'f32[64,128]{1,0:T(8,128)}', space=vmem, size = 0x8000, scoped, tag = 'scratch operand']
  %s0 = inlined_call_operand.vmem [shape: bf16[2,8,8,128], index: 0, kind: input, shape index: {}]
  %s1 = inlined_call_operand.vmem [shape: f32[1,128], index: 1, kind: input, shape index: {}]
  %s2 = inlined_call_operand.vmem [shape: f32[1,128], index: 2, kind: input, shape index: {}]
  %s3 = inlined_call_operand.vmem [shape: bf16[3,3,128,128], index: 3, kind: input, shape index: {}]
  %s4 = inlined_call_operand.vmem [shape: bf16[2,8,8,128], index: 4, kind: output, shape index: {0}]
  %s5 = inlined_call_operand.vmem [shape: f32[2,2,128], index: 5, kind: output, shape index: {1}]
  %6 = xla_tuple %s4, %s5
  %s7 = sld [smem:[#allocation0]]
  $region57: #{basic_block_forward.4} parent=0
    _
  %s9 = ssub.s32 1, %s7
  %s10 = scalar_select 0, %s9, %s7
  loop: start=0, step=1, limit=4
  $region2: #{basic_block_forward.4} parent=0 // loop_pre_header
    _
  $region3: #{basic_block_forward.4} parent=0 // loop_header
    %s12 = sphi 0, %s16
    %p13 = scmp.ge.s32.totalorder %s12, 4
    %s22 = sphi 0, %s24
    %s25 = sphi 0, %s22
    %s26 = sphi 0, %s25
    %s42 = sphi 0, %s26
    %s46 = sphi 0, %s46
    %s48 = sphi 0, %s46
    %s49 = sphi 0, %s48
    %s63 = sphi 0, %s49
    %s67 = sphi 0, %s67
    %s69 = sphi 0, %s67
    %s70 = sphi 0, %s69
    %s84 = sphi 0, %s70
    %s88 = sphi 0, %s88
    %s90 = sphi 0, %s88
    %s91 = sphi 0, %s90
    %s105 = sphi 0, %s91
    %s111 = sphi 0, %s113
    %s114 = sphi 0, %s111
    %s115 = sphi 0, %s114
    %s131 = sphi 0, %s115
    %s137 = sphi 0, %s139
    %s140 = sphi 0, %s137
    %s141 = sphi 0, %s140
    %s157 = sphi 0, %s141
  $region4: #{basic_block_forward.4} parent=0 // loop_header_branch
    %15 = sbr.rel (%p13) target = $region8
  $region5: #{basic_block_forward.4} parent=0 // loop_body
    %s17 = ssub.s32 %s12, 1
    %s18 = ssub.s32 %s12, 2
    %s19 = sadd.s32 %s12, 1
    %s20 = ssub.s32 %s12, %s19
    %p21 = scmp.eq.s32.totalorder %s20, 0
    %s23 = sadd.s32 %s22, 1
    %s24 = scalar_select %p21, %s22, %s23
    %p27 = pneg %p21
    %p28 = scmp.eq.s32.totalorder %s12, 1
    %p29 = por %p27, %p28
    %p30 = scmp.ne.s32.totalorder %s22, %s25
    %p31 = scmp.eq.s32.totalorder %s12, 0
    %p32 = por %p30, %p31
    %p33 = scmp.ne.s32.totalorder %s22, %s25
    %p34 = scmp.eq.s32.totalorder %s17, 1
    %p35 = por %p33, %p34
    %p36 = scmp.ne.s32.totalorder %s25, %s26
    %p37 = scmp.eq.s32.totalorder %s17, 0
    %p38 = por %p36, %p37
    %p39 = scmp.ne.s32.totalorder %s25, %s26
    %p40 = scmp.eq.s32.totalorder %s18, 1
    %p41 = por %p39, %p40
    %p43 = scmp.ne.s32.totalorder %s26, %s42
    %p44 = scmp.eq.s32.totalorder %s18, 0
    %p45 = por %p43, %p44
    %s47 = sadd.s32 %s46, 1
    %p50 = scmp.eq.s32.totalorder %s12, 1
    %p51 = scmp.ne.s32.totalorder %s46, %s48
    %p52 = scmp.eq.s32.totalorder %s12, 0
    %p53 = por %p51, %p52
    %p54 = scmp.ne.s32.totalorder %s46, %s48
    %p55 = scmp.eq.s32.totalorder %s17, 1
    %p56 = por %p54, %p55
    %p57 = scmp.ne.s32.totalorder %s48, %s49
    %p58 = scmp.eq.s32.totalorder %s17, 0
    %p59 = por %p57, %p58
    %p60 = scmp.ne.s32.totalorder %s48, %s49
    %p61 = scmp.eq.s32.totalorder %s18, 1
    %p62 = por %p60, %p61
    %p64 = scmp.ne.s32.totalorder %s49, %s63
    %p65 = scmp.eq.s32.totalorder %s18, 0
    %p66 = por %p64, %p65
    %s68 = sadd.s32 %s67, 1
    %p71 = scmp.eq.s32.totalorder %s12, 1
    %p72 = scmp.ne.s32.totalorder %s67, %s69
    %p73 = scmp.eq.s32.totalorder %s12, 0
    %p74 = por %p72, %p73
    %p75 = scmp.ne.s32.totalorder %s67, %s69
    %p76 = scmp.eq.s32.totalorder %s17, 1
    %p77 = por %p75, %p76
    %p78 = scmp.ne.s32.totalorder %s69, %s70
    %p79 = scmp.eq.s32.totalorder %s17, 0
    %p80 = por %p78, %p79
    %p81 = scmp.ne.s32.totalorder %s69, %s70
    %p82 = scmp.eq.s32.totalorder %s18, 1
    %p83 = por %p81, %p82
    %p85 = scmp.ne.s32.totalorder %s70, %s84
    %p86 = scmp.eq.s32.totalorder %s18, 0
    %p87 = por %p85, %p86
    %s89 = sadd.s32 %s88, 1
    %p92 = scmp.eq.s32.totalorder %s12, 1
    %p93 = scmp.ne.s32.totalorder %s88, %s90
    %p94 = scmp.eq.s32.totalorder %s12, 0
    %p95 = por %p93, %p94
    %p96 = scmp.ne.s32.totalorder %s88, %s90
    %p97 = scmp.eq.s32.totalorder %s17, 1
    %p98 = por %p96, %p97
    %p99 = scmp.ne.s32.totalorder %s90, %s91
    %p100 = scmp.eq.s32.totalorder %s17, 0
    %p101 = por %p99, %p100
    %p102 = scmp.ne.s32.totalorder %s90, %s91
    %p103 = scmp.eq.s32.totalorder %s18, 1
    %p104 = por %p102, %p103
    %p106 = scmp.ne.s32.totalorder %s91, %s105
    %p107 = scmp.eq.s32.totalorder %s18, 0
    %p108 = por %p106, %p107
    %s109 = ssub.s32 %s12, %s19
    %p110 = scmp.eq.s32.totalorder %s109, 0
    %s112 = sadd.s32 %s111, 1
    %s113 = scalar_select %p110, %s111, %s112
    %p116 = pneg %p110
    %p117 = scmp.eq.s32.totalorder %s12, 1
    %p118 = por %p116, %p117
    %p119 = scmp.ne.s32.totalorder %s111, %s114
    %p120 = scmp.eq.s32.totalorder %s12, 0
    %p121 = por %p119, %p120
    %p122 = scmp.ne.s32.totalorder %s111, %s114
    %p123 = scmp.eq.s32.totalorder %s17, 1
    %p124 = por %p122, %p123
    %p125 = scmp.ne.s32.totalorder %s114, %s115
    %p126 = scmp.eq.s32.totalorder %s17, 0
    %p127 = por %p125, %p126
    %p128 = scmp.ne.s32.totalorder %s114, %s115
    %p129 = scmp.eq.s32.totalorder %s18, 1
    %p130 = por %p128, %p129
    %p132 = scmp.ne.s32.totalorder %s115, %s131
    %p133 = scmp.eq.s32.totalorder %s18, 0
    %p134 = por %p132, %p133
    %s135 = ssub.s32 %s12, %s19
    %p136 = scmp.eq.s32.totalorder %s135, 0
    %s138 = sadd.s32 %s137, 1
    %s139 = scalar_select %p136, %s137, %s138
    %p142 = pneg %p136
    %p143 = scmp.eq.s32.totalorder %s12, 1
    %p144 = por %p142, %p143
    %p145 = scmp.ne.s32.totalorder %s137, %s140
    %p146 = scmp.eq.s32.totalorder %s12, 0
    %p147 = por %p145, %p146
    %p148 = scmp.ne.s32.totalorder %s137, %s140
    %p149 = scmp.eq.s32.totalorder %s17, 1
    %p150 = por %p148, %p149
    %p151 = scmp.ne.s32.totalorder %s140, %s141
    %p152 = scmp.eq.s32.totalorder %s17, 0
    %p153 = por %p151, %p152
    %p154 = scmp.ne.s32.totalorder %s140, %s141
    %p155 = scmp.eq.s32.totalorder %s18, 1
    %p156 = por %p154, %p155
    %p158 = scmp.ne.s32.totalorder %s141, %s157
    %p159 = scmp.eq.s32.totalorder %s18, 0
    %p160 = por %p158, %p159
    %p161 = scmp.le.s32.totalorder 1, %s12
    %p162 = scmp.lt.s32.totalorder %s12, 3
    %p163 = pnand %p161, %p162
    %p164 = pneg %p163
    // Predicated region
    $region9: #{basic_block_forward.4} parent=5 // pred_check
      _
    $region10: #{basic_block_forward.4} parent=5 // pred_check_branch
      %166 = sbr.rel (%p163) target = $region12
    $region11: #{basic_block_forward.4} parent=5 // pred_region
      %s167 = ssub.s32 %s12, 1
      // Predicated region
      $region13: #{basic_block_forward.4} parent=11 // pred_check
        %p168 = pneg %p59
      $region14: #{basic_block_forward.4} parent=11 // pred_check_branch
        %170 = sbr.rel (%p168) target = $region16
      $region15: #{basic_block_forward.4} parent=11 // pred_region
        _
      $region16: #{basic_block_forward.4} parent=11 // pred_fallthru
        _
      // Predicated region
      $region17: #{basic_block_forward.4} parent=11 // pred_check
        %p171 = pneg %p80
      $region18: #{basic_block_forward.4} parent=11 // pred_check_branch
        %173 = sbr.rel (%p171) target = $region20
      $region19: #{basic_block_forward.4} parent=11 // pred_region
        _
      $region20: #{basic_block_forward.4} parent=11 // pred_fallthru
        _
      // Predicated region
      $region21: #{basic_block_forward.4} parent=11 // pred_check
        %p174 = pneg %p101
      $region22: #{basic_block_forward.4} parent=11 // pred_check_branch
        %176 = sbr.rel (%p174) target = $region24
      $region23: #{basic_block_forward.4} parent=11 // pred_region
        _
      $region24: #{basic_block_forward.4} parent=11 // pred_fallthru
        _
    $region12: #{basic_block_forward.4} parent=5 // pred_fallthru
      _
    %p177 = scmp.lt.s32.totalorder %s12, 2
    // Predicated region
    $region25: #{basic_block_forward.4} parent=5 // pred_check
      %p178 = pneg %p177
    $region26: #{basic_block_forward.4} parent=5 // pred_check_branch
      %180 = sbr.rel (%p178) target = $region28
    $region27: #{basic_block_forward.4} parent=5 // pred_region
      // Predicated region
      $region29: #{basic_block_forward.4} parent=27 // pred_check
        %p181 = pneg %p32
      $region30: #{basic_block_forward.4} parent=27 // pred_check_branch
        %183 = sbr.rel (%p181) target = $region32
      $region31: #{basic_block_forward.4} parent=27 // pred_region
        %p184 = scmp.lt.s32.totalorder %s12, 1
        %s185 = scalar_select %p184, %s12, 1
        %s186 = smul.addr %s185, 8
        %s187 = smul.addr %s186, 4
        %s188 = scalar_lea.vmem %s0, %s187
      $region32: #{basic_block_forward.4} parent=27 // pred_fallthru
        _
    $region28: #{basic_block_forward.4} parent=5 // pred_fallthru
      _
    %p189 = scmp.le.s32.totalorder 1, %s12
    %p190 = scmp.lt.s32.totalorder %s12, 3
    %p191 = pnand %p189, %p190
    %p192 = pneg %p191
    // Predicated region
    $region33: #{basic_block_forward.4} parent=5 // pred_check
      _
    $region34: #{basic_block_forward.4} parent=5 // pred_check_branch
      %194 = sbr.rel (%p191) target = $region36
    $region35: #{basic_block_forward.4} parent=5 // pred_region
      %s195 = ssub.s32 %s12, 1
      %p196 = scmp.lt.s32.totalorder %s17, 1
      %s197 = scalar_select %p196, %s17, 1
      %s198 = smul.addr %s197, 8
      %s199 = smul.addr %s198, 4
      %s200 = scalar_lea.vmem %s0, %s199
      %p201 = pneg %p38
      %p202 = pneg %p35
      %p203 = pneg %p59
      %p204 = pneg %p56
      %p205 = pneg %p80
      %p206 = pneg %p77
      %p207 = pneg %p101
      %p208 = pneg %p98
      %p209 = pneg %p127
      %p210 = pneg %p124
      %p211 = scmp.lt.s32.totalorder %s17, 1
      %s212 = scalar_select %p211, %s17, 1
      %s213 = smul.addr %s212, 8
      %s214 = smul.addr %s213, 4
      %s215 = scalar_lea.vmem %s4, %s214
      %p216 = pneg %p153
      %p217 = pneg %p150
      %p218 = scmp.lt.s32.totalorder %s17, 1
      %s219 = scalar_select %p218, %s17, 1
      %s220 = smul.addr %s219, 2
      %s221 = scalar_lea.vmem %s5, %s220
      %p222 = scmp.lt.s32.totalorder %s17, 1
      %s223 = scalar_select %p222, %s17, 1
      %s224 = smul.addr %s223, 8
      %s225 = smul.addr %s224, 4
      %s226 = scalar_lea.vmem %s0, %s225
      %p227 = scmp.lt.s32.totalorder %s17, 1
      %s228 = scalar_select %p227, %s17, 1
      %s229 = smul.addr %s228, 8
      %s230 = smul.addr %s229, 4
      %s231 = scalar_lea.vmem %s4, %s230
      %p232 = scmp.lt.s32.totalorder %s17, 1
      %s233 = scalar_select %p232, %s17, 1
      %s234 = smul.addr %s233, 2
      %s235 = scalar_lea.vmem %s5, %s234
      %237 = vst [vmem:[#allocation2] sm:$0xff] 0.0
      %238 = vst [vmem:[#allocation2 + $0x8] sm:$0x3] 0.0
      %s239 = scalar_lea.vmem [#allocation2], 144
      %240 = vst [vmem:[%s239] sm:$0xff] 0.0
      %241 = vst [vmem:[%s239 + $0x8] sm:$0x3] 0.0
      %242 = vst [vmem:[#allocation2] sm:$0x1] 0.0
      %243 = vst [vmem:[#allocation2 + $0x10] sm:$0x1] 0.0
      %244 = vst [vmem:[#allocation2 + $0x20] sm:$0x1] 0.0
      %245 = vst [vmem:[#allocation2 + $0x30] sm:$0x1] 0.0
      %246 = vst [vmem:[#allocation2 + $0x40] sm:$0x1] 0.0
      %247 = vst [vmem:[#allocation2 + $0x50] sm:$0x1] 0.0
      %248 = vst [vmem:[#allocation2 + $0x60] sm:$0x1] 0.0
      %249 = vst [vmem:[#allocation2 + $0x70] sm:$0x1] 0.0
      %250 = vst [vmem:[#allocation2 + $0x80] sm:$0x1] 0.0
      %251 = vst [vmem:[#allocation2 + $0x90] sm:$0x1] 0.0
      %252 = vst [vmem:[#allocation2 + $0x9] sm:$0x1] 0.0
      %253 = vst [vmem:[#allocation2 + $0x19] sm:$0x1] 0.0
      %254 = vst [vmem:[#allocation2 + $0x29] sm:$0x1] 0.0
      %255 = vst [vmem:[#allocation2 + $0x39] sm:$0x1] 0.0
      %256 = vst [vmem:[#allocation2 + $0x49] sm:$0x1] 0.0
      %257 = vst [vmem:[#allocation2 + $0x59] sm:$0x1] 0.0
      %258 = vst [vmem:[#allocation2 + $0x69] sm:$0x1] 0.0
      %259 = vst [vmem:[#allocation2 + $0x79] sm:$0x1] 0.0
      %260 = vst [vmem:[#allocation2 + $0x89] sm:$0x1] 0.0
      %261 = vst [vmem:[#allocation2 + $0x99] sm:$0x1] 0.0
      %v262 = vld [vmem:[%s226] sm:$0xf]
      %v263 = vld [vmem:[%s226 + $0x4] sm:$0xf]
      %v264 = vld [vmem:[%s226 + $0x8] sm:$0xf]
      %v265 = vld [vmem:[%s226 + $0xc] sm:$0xf]
      %v266 = vld [vmem:[%s226 + $0x10] sm:$0xf]
      %v267 = vld [vmem:[%s226 + $0x14] sm:$0xf]
      %v268 = vld [vmem:[%s226 + $0x18] sm:$0xf]
      %v269 = vld [vmem:[%s226 + $0x1c] sm:$0xf]
      %v270 = vunpack.c.l.bf16 %v262
      %v271 = vunpack.c.l.bf16 %v263
      %v272 = vunpack.c.l.bf16 %v264
      %v273 = vunpack.c.l.bf16 %v265
      %v274 = vunpack.c.l.bf16 %v266
      %v275 = vunpack.c.l.bf16 %v267
      %v276 = vunpack.c.l.bf16 %v268
      %v277 = vunpack.c.l.bf16 %v269
      %v278 = vld [vmem:[%s1] sm:$0x1]
      %v280 = vlaneseq
      %v281 = vshrl.u32 %v280, 7
      %v282 = vsub.s32 0, %v281
      %v283 = vrot.slane %v278, %v282
      %v285 = vmul.f32 %v270, %v283
      %v286 = vmul.f32 %v271, %v283
      %v287 = vmul.f32 %v272, %v283
      %v288 = vmul.f32 %v273, %v283
      %v289 = vmul.f32 %v274, %v283
      %v290 = vmul.f32 %v275, %v283
      %v291 = vmul.f32 %v276, %v283
      %v292 = vmul.f32 %v277, %v283
      %v293 = vld [vmem:[%s2] sm:$0x1]
      %v295 = vlaneseq
      %v296 = vshrl.u32 %v295, 7
      %v297 = vsub.s32 0, %v296
      %v298 = vrot.slane %v293, %v297
      %v300 = vadd.f32 %v285, %v298
      %v301 = vadd.f32 %v286, %v298
      %v302 = vadd.f32 %v287, %v298
      %v303 = vadd.f32 %v288, %v298
      %v304 = vadd.f32 %v289, %v298
      %v305 = vadd.f32 %v290, %v298
      %v306 = vadd.f32 %v291, %v298
      %v307 = vadd.f32 %v292, %v298
      %v308 = vmax.f32 %v300, 0.0
      %v309 = vmax.f32 %v301, 0.0
      %v310 = vmax.f32 %v302, 0.0
      %v311 = vmax.f32 %v303, 0.0
      %v312 = vmax.f32 %v304, 0.0
      %v313 = vmax.f32 %v305, 0.0
      %v314 = vmax.f32 %v306, 0.0
      %v315 = vmax.f32 %v307, 0.0
      %s316 = scalar_lea.vmem [#allocation2], 16
      %317 = vst [vmem:[%s316 + $0x1] sm:$0xff] %v308
      %318 = vst [vmem:[%s316 + $0x11] sm:$0xff] %v309
      %319 = vst [vmem:[%s316 + $0x21] sm:$0xff] %v310
      %320 = vst [vmem:[%s316 + $0x31] sm:$0xff] %v311
      %321 = vst [vmem:[%s316 + $0x41] sm:$0xff] %v312
      %322 = vst [vmem:[%s316 + $0x51] sm:$0xff] %v313
      %323 = vst [vmem:[%s316 + $0x61] sm:$0xff] %v314
      %324 = vst [vmem:[%s316 + $0x71] sm:$0xff] %v315
      %325 = vst [vmem:[#allocation3] sm:$0xff] 0.0
      %326 = vst [vmem:[#allocation3 + $0x8] sm:$0xff] 0.0
      %327 = vst [vmem:[#allocation3 + $0x10] sm:$0xff] 0.0
      %328 = vst [vmem:[#allocation3 + $0x18] sm:$0xff] 0.0
      %329 = vst [vmem:[#allocation3 + $0x20] sm:$0xff] 0.0
      %330 = vst [vmem:[#allocation3 + $0x28] sm:$0xff] 0.0
      %331 = vst [vmem:[#allocation3 + $0x30] sm:$0xff] 0.0
      %332 = vst [vmem:[#allocation3 + $0x38] sm:$0xff] 0.0
      %v333 = vld [vmem:[#allocation2] sm:$0xff]
      %v334 = vld [vmem:[#allocation2 + $0x10] sm:$0xff]
      %v335 = vld [vmem:[#allocation2 + $0x20] sm:$0xff]
      %v336 = vld [vmem:[#allocation2 + $0x30] sm:$0xff]
      %v337 = vld [vmem:[#allocation2 + $0x40] sm:$0xff]
      %v338 = vld [vmem:[#allocation2 + $0x50] sm:$0xff]
      %v339 = vld [vmem:[#allocation2 + $0x60] sm:$0xff]
      %v340 = vld [vmem:[#allocation2 + $0x70] sm:$0xff]
      %v341 = vld [vmem:[#allocation3] sm:$0xff]
      %v342 = vld [vmem:[#allocation3 + $0x8] sm:$0xff]
      %v343 = vld [vmem:[#allocation3 + $0x10] sm:$0xff]
      %v344 = vld [vmem:[#allocation3 + $0x18] sm:$0xff]
      %v345 = vld [vmem:[#allocation3 + $0x20] sm:$0xff]
      %v346 = vld [vmem:[#allocation3 + $0x28] sm:$0xff]
      %v347 = vld [vmem:[#allocation3 + $0x30] sm:$0xff]
      %v348 = vld [vmem:[#allocation3 + $0x38] sm:$0xff]
      %v349 = vpack.c.bf16 %v334, %v333
      %v350 = vpack.c.bf16 %v336, %v335
      %v351 = vpack.c.bf16 %v338, %v337
      %v352 = vpack.c.bf16 %v340, %v339
      %v353 = vld [vmem:[%s3] sm:$0xf]
      %v354 = vld [vmem:[%s3 + $0x4] sm:$0xf]
      %v355 = vld [vmem:[%s3 + $0x8] sm:$0xf]
      %v356 = vld [vmem:[%s3 + $0xc] sm:$0xf]
      %v357 = vld [vmem:[%s3 + $0x10] sm:$0xf]
      %v358 = vld [vmem:[%s3 + $0x14] sm:$0xf]
      %v359 = vld [vmem:[%s3 + $0x18] sm:$0xf]
      %v360 = vld [vmem:[%s3 + $0x1c] sm:$0xf]
      %v361 = vld [vmem:[%s3 + $0x20] sm:$0xf]
      %v362 = vld [vmem:[%s3 + $0x24] sm:$0xf]
      %v363 = vld [vmem:[%s3 + $0x28] sm:$0xf]
      %v364 = vld [vmem:[%s3 + $0x2c] sm:$0xf]
      %v365 = vld [vmem:[%s3 + $0x30] sm:$0xf]
      %v366 = vld [vmem:[%s3 + $0x34] sm:$0xf]
      %v367 = vld [vmem:[%s3 + $0x38] sm:$0xf]
      %v368 = vld [vmem:[%s3 + $0x3c] sm:$0xf]
      %v385 = vunpack.c.l.b16 %v353
      %v386 = vunpack.c.l.b16 %v354
      %v387 = vunpack.c.l.b16 %v355
      %v388 = vunpack.c.l.b16 %v356
      %v389 = vunpack.c.l.b16 %v357
      %v390 = vunpack.c.l.b16 %v358
      %v391 = vunpack.c.l.b16 %v359
      %v392 = vunpack.c.l.b16 %v360
      %v393 = vunpack.c.l.b16 %v361
      %v394 = vunpack.c.l.b16 %v362
      %v395 = vunpack.c.l.b16 %v363
      %v396 = vunpack.c.l.b16 %v364
      %v397 = vunpack.c.l.b16 %v365
      %v398 = vunpack.c.l.b16 %v366
      %v399 = vunpack.c.l.b16 %v367
      %v400 = vunpack.c.l.b16 %v368
      %v401 = vpack.c.b16 %v386, %v385
      %v402 = vpack.c.b16 %v388, %v387
      %v403 = vpack.c.b16 %v390, %v389
      %v404 = vpack.c.b16 %v392, %v391
      %v405 = vpack.c.b16 %v394, %v393
      %v406 = vpack.c.b16 %v396, %v395
      %v407 = vpack.c.b16 %v398, %v397
      %v408 = vpack.c.b16 %v400, %v399
      %417 = vmatprep.subr.bf16.mxu0 0
      %418 = vmatpush1.bf16.msra.mxu0 %v401
      %419 = vmatprep.subr.bf16.mxu0 0
      %420 = vmatpush1.bf16.msra.mxu0 %v402
      %421 = vmatprep.subr.bf16.mxu0 0
      %422 = vmatpush1.bf16.msra.mxu0 %v403
      %423 = vmatprep.subr.bf16.mxu0 0
      %424 = vmatpush1.bf16.msra.mxu0 %v404
      %425 = vmatprep.subr.bf16.mxu0 0
      %426 = vmatpush1.bf16.msra.mxu0 %v405
      %427 = vmatprep.subr.bf16.mxu0 0
      %428 = vmatpush1.bf16.msra.mxu0 %v406
      %429 = vmatprep.subr.bf16.mxu0 0
      %430 = vmatpush1.bf16.msra.mxu0 %v407
      %431 = vmatprep.subr.bf16.mxu0 0
      %432 = vmatpush1.bf16.msra.mxu0 %v408
      %433 = vmatprep.subr.bf16.mxu0 0
      %434 = vmatpush1.bf16.msra.mxu0 0
      %435 = vmatprep.subr.bf16.mxu0 0
      %436 = vmatpush1.bf16.msra.mxu0 0
      %437 = vmatprep.subr.bf16.mxu0 0
      %438 = vmatpush1.bf16.msra.mxu0 0
      %439 = vmatprep.subr.bf16.mxu0 0
      %440 = vmatpush1.bf16.msra.mxu0 0
      %441 = vmatprep.subr.bf16.mxu0 0
      %442 = vmatpush1.bf16.msra.mxu0 0
      %443 = vmatprep.subr.bf16.mxu0 0
      %444 = vmatpush1.bf16.msra.mxu0 0
      %445 = vmatprep.subr.bf16.mxu0 0
      %446 = vmatpush1.bf16.msra.mxu0 0
      %447 = vmatprep.subr.bf16.mxu0 0
      %448 = vmatpush1.bf16.msra.mxu0 0
      %449 = vmatprep.mubr.bf16.mxu0 0
      %450 = vmatmul.mubr.bf16.gmra.mrb[0].mxu0 %v349
      %v451 = vpop.f32.mrb[0].mxu0
      %v452 = vadd.f32 0.0, %v451
      %v453 = vpop.f32.mrb[0].mxu0
      %v454 = vpop.f32.mrb[0].mxu0
      %v455 = vadd.f32 0.0, %v454
      %v456 = vpop.f32.mrb[0].mxu0
      %457 = vmatprep.mubr.bf16.mxu0 0
      %458 = vmatmul.mubr.bf16.gmra.mrb[0].mxu0 %v350
      %v459 = vpop.f32.mrb[0].mxu0
      %v460 = vadd.f32 0.0, %v459
      %v461 = vpop.f32.mrb[0].mxu0
      %v462 = vpop.f32.mrb[0].mxu0
      %v463 = vadd.f32 0.0, %v462
      %v464 = vpop.f32.mrb[0].mxu0
      %465 = vmatprep.mubr.bf16.mxu0 0
      %466 = vmatmul.mubr.bf16.gmra.mrb[0].mxu0 %v351
      %v467 = vpop.f32.mrb[0].mxu0
      %v468 = vadd.f32 0.0, %v467
      %v469 = vpop.f32.mrb[0].mxu0
      %v470 = vpop.f32.mrb[0].mxu0
      %v471 = vadd.f32 0.0, %v470
      %v472 = vpop.f32.mrb[0].mxu0
      %473 = vmatprep.mubr.bf16.mxu0 0
      %474 = vmatmul.mubr.bf16.gmra.mrb[0].mxu0 %v352
      %v475 = vpop.f32.mrb[0].mxu0
      %v476 = vadd.f32 0.0, %v475
      %v477 = vpop.f32.mrb[0].mxu0
      %v478 = vpop.f32.mrb[0].mxu0
      %v479 = vadd.f32 0.0, %v478
      %v480 = vpop.f32.mrb[0].mxu0
      %481 = vdwg.mxu0
      %v482 = vadd.f32 %v341, %v452
      %v483 = vadd.f32 %v342, %v455
      %v484 = vadd.f32 %v343, %v460
      %v485 = vadd.f32 %v344, %v463
      %v486 = vadd.f32 %v345, %v468
      %v487 = vadd.f32 %v346, %v471
      %v488 = vadd.f32 %v347, %v476
      %v489 = vadd.f32 %v348, %v479
      %490 = vst [vmem:[#allocation3] sm:$0xff] %v482
      %491 = vst [vmem:[#allocation3 + $0x8] sm:$0xff] %v483
      %492 = vst [vmem:[#allocation3 + $0x10] sm:$0xff] %v484
      %493 = vst [vmem:[#allocation3 + $0x18] sm:$0xff] %v485
      %494 = vst [vmem:[#allocation3 + $0x20] sm:$0xff] %v486
      %495 = vst [vmem:[#allocation3 + $0x28] sm:$0xff] %v487
      %496 = vst [vmem:[#allocation3 + $0x30] sm:$0xff] %v488
      %497 = vst [vmem:[#allocation3 + $0x38] sm:$0xff] %v489
      %v498 = vld [vmem:[#allocation2 + $0x1] sm:$0xff]
      %v499 = vld [vmem:[#allocation2 + $0x11] sm:$0xff]
      %v500 = vld [vmem:[#allocation2 + $0x21] sm:$0xff]
      %v501 = vld [vmem:[#allocation2 + $0x31] sm:$0xff]
      %v502 = vld [vmem:[#allocation2 + $0x41] sm:$0xff]
      %v503 = vld [vmem:[#allocation2 + $0x51] sm:$0xff]
      %v504 = vld [vmem:[#allocation2 + $0x61] sm:$0xff]
      %v505 = vld [vmem:[#allocation2 + $0x71] sm:$0xff]
      %v506 = vld [vmem:[#allocation3] sm:$0xff]
      %v507 = vld [vmem:[#allocation3 + $0x8] sm:$0xff]
      %v508 = vld [vmem:[#allocation3 + $0x10] sm:$0xff]
      %v509 = vld [vmem:[#allocation3 + $0x18] sm:$0xff]
      %v510 = vld [vmem:[#allocation3 + $0x20] sm:$0xff]
      %v511 = vld [vmem:[#allocation3 + $0x28] sm:$0xff]
      %v512 = vld [vmem:[#allocation3 + $0x30] sm:$0xff]
      %v513 = vld [vmem:[#allocation3 + $0x38] sm:$0xff]
      %v514 = vpack.c.bf16 %v499, %v498
      %v515 = vpack.c.bf16 %v501, %v500
      %v516 = vpack.c.bf16 %v503, %v502
      %v517 = vpack.c.bf16 %v505, %v504
      %s518 = scalar_lea.vmem %s3, 64
      %v519 = vld [vmem:[%s518] sm:$0xf]
      %v520 = vld [vmem:[%s518 + $0x4] sm:$0xf]
      %v521 = vld [vmem:[%s518 + $0x8] sm:$0xf]
      %v522 = vld [vmem:[%s518 + $0xc] sm:$0xf]
      %v523 = vld [vmem:[%s518 + $0x10] sm:$0xf]
      %v524 = vld [vmem:[%s518 + $0x14] sm:$0xf]
      %v525 = vld [vmem:[%s518 + $0x18] sm:$0xf]
      %v526 = vld [vmem:[%s518 + $0x1c] sm:$0xf]
      %v527 = vld [vmem:[%s518 + $0x20] sm:$0xf]
      %v528 = vld [vmem:[%s518 + $0x24] sm:$0xf]
      %v529 = vld [vmem:[%s518 + $0x28] sm:$0xf]
      %v530 = vld [vmem:[%s518 + $0x2c] sm:$0xf]
      %v531 = vld [vmem:[%s518 + $0x30] sm:$0xf]
      %v532 = vld [vmem:[%s518 + $0x34] sm:$0xf]
      %v533 = vld [vmem:[%s518 + $0x38] sm:$0xf]
      %v534 = vld [vmem:[%s518 + $0x3c] sm:$0xf]
      %v551 = vunpack.c.l.b16 %v519
      %v552 = vunpack.c.l.b16 %v520
      %v553 = vunpack.c.l.b16 %v521
      %v554 = vunpack.c.l.b16 %v522
      %v555 = vunpack.c.l.b16 %v523
      %v556 = vunpack.c.l.b16 %v524
      %v557 = vunpack.c.l.b16 %v525
      %v558 = vunpack.c.l.b16 %v526
      %v559 = vunpack.c.l.b16 %v527
      %v560 = vunpack.c.l.b16 %v528
      %v561 = vunpack.c.l.b16 %v529
      %v562 = vunpack.c.l.b16 %v530
      %v563 = vunpack.c.l.b16 %v531
      %v564 = vunpack.c.l.b16 %v532
      %v565 = vunpack.c.l.b16 %v533
      %v566 = vunpack.c.l.b16 %v534
      %v567 = vpack.c.b16 %v552, %v551
      %v568 = vpack.c.b16 %v554, %v553
      %v569 = vpack.c.b16 %v556, %v555
      %v570 = vpack.c.b16 %v558, %v557
      %v571 = vpack.c.b16 %v560, %v559
      %v572 = vpack.c.b16 %v562, %v561
      %v573 = vpack.c.b16 %v564, %v563
      %v574 = vpack.c.b16 %v566, %v565
      %583 = vmatprep.subr.bf16.mxu0 0
      %584 = vmatpush1.bf16.msra.mxu0 %v567
      %585 = vmatprep.subr.bf16.mxu0 0
      %586 = vmatpush1.bf16.msra.mxu0 %v568
      %587 = vmatprep.subr.bf16.mxu0 0
      %588 = vmatpush1.bf16.msra.mxu0 %v569
      %589 = vmatprep.subr.bf16.mxu0 0
      %590 = vmatpush1.bf16.msra.mxu0 %v570
      %591 = vmatprep.subr.bf16.mxu0 0
      %592 = vmatpush1.bf16.msra.mxu0 %v571
      %593 = vmatprep.subr.bf16.mxu0 0
      %594 = vmatpush1.bf16.msra.mxu0 %v572
      %595 = vmatprep.subr.bf16.mxu0 0
      %596 = vmatpush1.bf16.msra.mxu0 %v573
      %597 = vmatprep.subr.bf16.mxu0 0
      %598 = vmatpush1.bf16.msra.mxu0 %v574
      %599 = vmatprep.subr.bf16.mxu0 0
      %600 = vmatpush1.bf16.msra.mxu0 0
      %601 = vmatprep.subr.bf16.mxu0 0
      %602 = vmatpush1.bf16.msra.mxu0 0
      %603 = vmatprep.subr.bf16.mxu0 0
      %604 = vmatpush1.bf16.msra.mxu0 0
      %605 = vmatprep.subr.bf16.mxu0 0
      %606 = vmatpush1.bf16.msra.mxu0 0
      %607 = vmatprep.subr.bf16.mxu0 0
      %608 = vmatpush1.bf16.msra.mxu0 0
      %609 = vmatprep.subr.bf16.mxu0 0
      %610 = vmatpush1.bf16.msra.mxu0 0
      %611 = vmatprep.subr.bf16.mxu0 0
      %612 = vmatpush1.bf16.msra.mxu0 0
      %613 = vmatprep.subr.bf16.mxu0 0
      %614 = vmatpush1.bf16.msra.mxu0 0
      %615 = vmatprep.mubr.bf16.mxu0 0
      %616 = vmatmul.mubr.bf16.gmra.mrb[0].mxu0 %v514
      %v617 = vpop.f32.mrb[0].mxu0
      %v618 = vadd.f32 0.0, %v617
      %v619 = vpop.f32.mrb[0].mxu0
      %v620 = vpop.f32.mrb[0].mxu0
      %v621 = vadd.f32 0.0, %v620
      %v622 = vpop.f32.mrb[0].mxu0
      %623 = vmatprep.mubr.bf16.mxu0 0
      %624 = vmatmul.mubr.bf16.gmra.mrb[0].mxu0 %v515
      %v625 = vpop.f32.mrb[0].mxu0
      %v626 = vadd.f32 0.0, %v625
      %v627 = vpop.f32.mrb[0].mxu0
      %v628 = vpop.f32.mrb[0].mxu0
      %v629 = vadd.f32 0.0, %v628
      %v630 = vpop.f32.mrb[0].mxu0
      %631 = vmatprep.mubr.bf16.mxu0 0
      %632 = vmatmul.mubr.bf16.gmra.mrb[0].mxu0 %v516
      %v633 = vpop.f32.mrb[0].mxu0
      %v634 = vadd.f32 0.0, %v633
      %v635 = vpop.f32.mrb[0].mxu0
      %v636 = vpop.f32.mrb[0].mxu0
      %v637 = vadd.f32 0.0, %v636
      %v638 = vpop.f32.mrb[0].mxu0
      %639 = vmatprep.mubr.bf16.mxu0 0
      %640 = vmatmul.mubr.bf16.gmra.mrb[0].mxu0 %v517
      %v641 = vpop.f32.mrb[0].mxu0
      %v642 = vadd.f32 0.0, %v641
      %v643 = vpop.f32.mrb[0].mxu0
      %v644 = vpop.f32.mrb[0].mxu0
      %v645 = vadd.f32 0.0, %v644
      %v646 = vpop.f32.mrb[0].mxu0
      %647 = vdwg.mxu0
      %v648 = vadd.f32 %v506, %v618
      %v649 = vadd.f32 %v507, %v621
      %v650 = vadd.f32 %v508, %v626
      %v651 = vadd.f32 %v509, %v629
      %v652 = vadd.f32 %v510, %v634
      %v653 = vadd.f32 %v511, %v637
      %v654 = vadd.f32 %v512, %v642
      %v655 = vadd.f32 %v513, %v645
      %656 = vst [vmem:[#allocation3] sm:$0xff] %v648
      %657 = vst [vmem:[#allocation3 + $0x8] sm:$0xff] %v649
      %658 = vst [vmem:[#allocation3 + $0x10] sm:$0xff] %v650
      %659 = vst [vmem:[#allocation3 + $0x18] sm:$0xff] %v651
      %660 = vst [vmem:[#allocation3 + $0x20] sm:$0xff] %v652
      %661 = vst [vmem:[#allocation3 + $0x28] sm:$0xff] %v653
      %662 = vst [vmem:[#allocation3 + $0x30] sm:$0xff] %v654
      %663 = vst [vmem:[#allocation3 + $0x38] sm:$0xff] %v655
      %v664 = vld [vmem:[#allocation2 + $0x2] sm:$0xff]
      %v665 = vld [vmem:[#allocation2 + $0x12] sm:$0xff]
      %v666 = vld [vmem:[#allocation2 + $0x22] sm:$0xff]
      %v667 = vld [vmem:[#allocation2 + $0x32] sm:$0xff]
      %v668 = vld [vmem:[#allocation2 + $0x42] sm:$0xff]
      %v669 = vld [vmem:[#allocation2 + $0x52] sm:$0xff]
      %v670 = vld [vmem:[#allocation2 + $0x62] sm:$0xff]
      %v671 = vld [vmem:[#allocation2 + $0x72] sm:$0xff]
      %v672 = vld [vmem:[#allocation3] sm:$0xff]
      %v673 = vld [vmem:[#allocation3 + $0x8] sm:$0xff]
      %v674 = vld [vmem:[#allocation3 + $0x10] sm:$0xff]
      %v675 = vld [vmem:[#allocation3 + $0x18] sm:$0xff]
      %v676 = vld [vmem:[#allocation3 + $0x20] sm:$0xff]
      %v677 = vld [vmem:[#allocation3 + $0x28] sm:$0xff]
      %v678 = vld [vmem:[#allocation3 + $0x30] sm:$0xff]
      %v679 = vld [vmem:[#allocation3 + $0x38] sm:$0xff]
      %v680 = vpack.c.bf16 %v665, %v664
      %v681 = vpack.c.bf16 %v667, %v666
      %v682 = vpack.c.bf16 %v669, %v668
      %v683 = vpack.c.bf16 %v671, %v670
      %s684 = scalar_lea.vmem %s3, 128
      %v685 = vld [vmem:[%s684] sm:$0xf]
      %v686 = vld [vmem:[%s684 + $0x4] sm:$0xf]
      %v687 = vld [vmem:[%s684 + $0x8] sm:$0xf]
      %v688 = vld [vmem:[%s684 + $0xc] sm:$0xf]
      %v689 = vld [vmem:[%s684 + $0x10] sm:$0xf]
      %v690 = vld [vmem:[%s684 + $0x14] sm:$0xf]
      %v691 = vld [vmem:[%s684 + $0x18] sm:$0xf]
      %v692 = vld [vmem:[%s684 + $0x1c] sm:$0xf]
      %v693 = vld [vmem:[%s684 + $0x20] sm:$0xf]
      %v694 = vld [vmem:[%s684 + $0x24] sm:$0xf]
      %v695 = vld [vmem:[%s684 + $0x28] sm:$0xf]
      %v696 = vld [vmem:[%s684 + $0x2c] sm:$0xf]
      %v697 = vld [vmem:[%s684 + $0x30] sm:$0xf]
      %v698 = vld [vmem:[%s684 + $0x34] sm:$0xf]
      %v699 = vld [vmem:[%s684 + $0x38] sm:$0xf]
      %v700 = vld [vmem:[%s684 + $0x3c] sm:$0xf]
      %v717 = vunpack.c.l.b16 %v685
      %v718 = vunpack.c.l.b16 %v686
      %v719 = vunpack.c.l.b16 %v687
      %v720 = vunpack.c.l.b16 %v688
      %v721 = vunpack.c.l.b16 %v689
      %v722 = vunpack.c.l.b16 %v690
      %v723 = vunpack.c.l.b16 %v691
      %v724 = vunpack.c.l.b16 %v692
      %v725 = vunpack.c.l.b16 %v693
      %v726 = vunpack.c.l.b16 %v694
      %v727 = vunpack.c.l.b16 %v695
      %v728 = vunpack.c.l.b16 %v696
      %v729 = vunpack.c.l.b16 %v697
      %v730 = vunpack.c.l.b16 %v698
      %v731 = vunpack.c.l.b16 %v699
      %v732 = vunpack.c.l.b16 %v700
      %v733 = vpack.c.b16 %v718, %v717
      %v734 = vpack.c.b16 %v720, %v719
      %v735 = vpack.c.b16 %v722, %v721
      %v736 = vpack.c.b16 %v724, %v723
      %v737 = vpack.c.b16 %v726, %v725
      %v738 = vpack.c.b16 %v728, %v727
      %v739 = vpack.c.b16 %v730, %v729
      %v740 = vpack.c.b16 %v732, %v731
      %749 = vmatprep.subr.bf16.mxu0 0
      %750 = vmatpush1.bf16.msra.mxu0 %v733
      %751 = vmatprep.subr.bf16.mxu0 0
      %752 = vmatpush1.bf16.msra.mxu0 %v734
      %753 = vmatprep.subr.bf16.mxu0 0
      %754 = vmatpush1.bf16.msra.mxu0 %v735
      %755 = vmatprep.subr.bf16.mxu0 0
      %756 = vmatpush1.bf16.msra.mxu0 %v736
      %757 = vmatprep.subr.bf16.mxu0 0
      %758 = vmatpush1.bf16.msra.mxu0 %v737
      %759 = vmatprep.subr.bf16.mxu0 0
      %760 = vmatpush1.bf16.msra.mxu0 %v738
      %761 = vmatprep.subr.bf16.mxu0 0
      %762 = vmatpush1.bf16.msra.mxu0 %v739
      %763 = vmatprep.subr.bf16.mxu0 0
      %764 = vmatpush1.bf16.msra.mxu0 %v740
      %765 = vmatprep.subr.bf16.mxu0 0
      %766 = vmatpush1.bf16.msra.mxu0 0
      %767 = vmatprep.subr.bf16.mxu0 0
      %768 = vmatpush1.bf16.msra.mxu0 0
      %769 = vmatprep.subr.bf16.mxu0 0
      %770 = vmatpush1.bf16.msra.mxu0 0
      %771 = vmatprep.subr.bf16.mxu0 0
      %772 = vmatpush1.bf16.msra.mxu0 0
      %773 = vmatprep.subr.bf16.mxu0 0
      %774 = vmatpush1.bf16.msra.mxu0 0
      %775 = vmatprep.subr.bf16.mxu0 0
      %776 = vmatpush1.bf16.msra.mxu0 0
      %777 = vmatprep.subr.bf16.mxu0 0
      %778 = vmatpush1.bf16.msra.mxu0 0
      %779 = vmatprep.subr.bf16.mxu0 0
      %780 = vmatpush1.bf16.msra.mxu0 0
      %781 = vmatprep.mubr.bf16.mxu0 0
      %782 = vmatmul.mubr.bf16.gmra.mrb[0].mxu0 %v680
      %v783 = vpop.f32.mrb[0].mxu0
      %v784 = vadd.f32 0.0, %v783
      %v785 = vpop.f32.mrb[0].mxu0
      %v786 = vpop.f32.mrb[0].mxu0
      %v787 = vadd.f32 0.0, %v786
      %v788 = vpop.f32.mrb[0].mxu0
      %789 = vmatprep.mubr.bf16.mxu0 0
      %790 = vmatmul.mubr.bf16.gmra.mrb[0].mxu0 %v681
      %v791 = vpop.f32.mrb[0].mxu0
      %v792 = vadd.f32 0.0, %v791
      %v793 = vpop.f32.mrb[0].mxu0
      %v794 = vpop.f32.mrb[0].mxu0
      %v795 = vadd.f32 0.0, %v794
      %v796 = vpop.f32.mrb[0].mxu0
      %797 = vmatprep.mubr.bf16.mxu0 0
      %798 = vmatmul.mubr.bf16.gmra.mrb[0].mxu0 %v682
      %v799 = vpop.f32.mrb[0].mxu0
      %v800 = vadd.f32 0.0, %v799
      %v801 = vpop.f32.mrb[0].mxu0
      %v802 = vpop.f32.mrb[0].mxu0
      %v803 = vadd.f32 0.0, %v802
      %v804 = vpop.f32.mrb[0].mxu0
      %805 = vmatprep.mubr.bf16.mxu0 0
      %806 = vmatmul.mubr.bf16.gmra.mrb[0].mxu0 %v683
      %v807 = vpop.f32.mrb[0].mxu0
      %v808 = vadd.f32 0.0, %v807
      %v809 = vpop.f32.mrb[0].mxu0
      %v810 = vpop.f32.mrb[0].mxu0
      %v811 = vadd.f32 0.0, %v810
      %v812 = vpop.f32.mrb[0].mxu0
      %813 = vdwg.mxu0
      %v814 = vadd.f32 %v672, %v784
      %v815 = vadd.f32 %v673, %v787
      %v816 = vadd.f32 %v674, %v792
      %v817 = vadd.f32 %v675, %v795
      %v818 = vadd.f32 %v676, %v800
      %v819 = vadd.f32 %v677, %v803
      %v820 = vadd.f32 %v678, %v808
      %v821 = vadd.f32 %v679, %v811
      %822 = vst [vmem:[#allocation3] sm:$0xff] %v814
      %823 = vst [vmem:[#allocation3 + $0x8] sm:$0xff] %v815
      %824 = vst [vmem:[#allocation3 + $0x10] sm:$0xff] %v816
      %825 = vst [vmem:[#allocation3 + $0x18] sm:$0xff] %v817
      %826 = vst [vmem:[#allocation3 + $0x20] sm:$0xff] %v818
      %827 = vst [vmem:[#allocation3 + $0x28] sm:$0xff] %v819
      %828 = vst [vmem:[#allocation3 + $0x30] sm:$0xff] %v820
      %829 = vst [vmem:[#allocation3 + $0x38] sm:$0xff] %v821
      %v830 = vld [vmem:[%s316] sm:$0xff]
      %v831 = vld [vmem:[%s316 + $0x10] sm:$0xff]
      %v832 = vld [vmem:[%s316 + $0x20] sm:$0xff]
      %v833 = vld [vmem:[%s316 + $0x30] sm:$0xff]
      %v834 = vld [vmem:[%s316 + $0x40] sm:$0xff]
      %v835 = vld [vmem:[%s316 + $0x50] sm:$0xff]
      %v836 = vld [vmem:[%s316 + $0x60] sm:$0xff]
      %v837 = vld [vmem:[%s316 + $0x70] sm:$0xff]
      %v838 = vld [vmem:[#allocation3] sm:$0xff]
      %v839 = vld [vmem:[#allocation3 + $0x8] sm:$0xff]
      %v840 = vld [vmem:[#allocation3 + $0x10] sm:$0xff]
      %v841 = vld [vmem:[#allocation3 + $0x18] sm:$0xff]
      %v842 = vld [vmem:[#allocation3 + $0x20] sm:$0xff]
      %v843 = vld [vmem:[#allocation3 + $0x28] sm:$0xff]
      %v844 = vld [vmem:[#allocation3 + $0x30] sm:$0xff]
      %v845 = vld [vmem:[#allocation3 + $0x38] sm:$0xff]
      %v846 = vpack.c.bf16 %v831, %v830
      %v847 = vpack.c.bf16 %v833, %v832
      %v848 = vpack.c.bf16 %v835, %v834
      %v849 = vpack.c.bf16 %v837, %v836
      %s850 = scalar_lea.vmem %s3, 192
      %v851 = vld [vmem:[%s850] sm:$0xf]
      %v852 = vld [vmem:[%s850 + $0x4] sm:$0xf]
      %v853 = vld [vmem:[%s850 + $0x8] sm:$0xf]
      %v854 = vld [vmem:[%s850 + $0xc] sm:$0xf]
      %v855 = vld [vmem:[%s850 + $0x10] sm:$0xf]
      %v856 = vld [vmem:[%s850 + $0x14] sm:$0xf]
      %v857 = vld [vmem:[%s850 + $0x18] sm:$0xf]
      %v858 = vld [vmem:[%s850 + $0x1c] sm:$0xf]
      %v859 = vld [vmem:[%s850 + $0x20] sm:$0xf]
      %v860 = vld [vmem:[%s850 + $0x24] sm:$0xf]
      %v861 = vld [vmem:[%s850 + $0x28] sm:$0xf]
      %v862 = vld [vmem:[%s850 + $0x2c] sm:$0xf]
      %v863 = vld [vmem:[%s850 + $0x30] sm:$0xf]
      %v864 = vld [vmem:[%s850 + $0x34] sm:$0xf]
      %v865 = vld [vmem:[%s850 + $0x38] sm:$0xf]
      %v866 = vld [vmem:[%s850 + $0x3c] sm:$0xf]
      %v883 = vunpack.c.l.b16 %v851
      %v884 = vunpack.c.l.b16 %v852
      %v885 = vunpack.c.l.b16 %v853
      %v886 = vunpack.c.l.b16 %v854
      %v887 = vunpack.c.l.b16 %v855
      %v888 = vunpack.c.l.b16 %v856
      %v889 = vunpack.c.l.b16 %v857
      %v890 = vunpack.c.l.b16 %v858
      %v891 = vunpack.c.l.b16 %v859
      %v892 = vunpack.c.l.b16 %v860
      %v893 = vunpack.c.l.b16 %v861
      %v894 = vunpack.c.l.b16 %v862
      %v895 = vunpack.c.l.b16 %v863
      %v896 = vunpack.c.l.b16 %v864
      %v897 = vunpack.c.l.b16 %v865
      %v898 = vunpack.c.l.b16 %v866
      %v899 = vpack.c.b16 %v884, %v883
      %v900 = vpack.c.b16 %v886, %v885
      %v901 = vpack.c.b16 %v888, %v887
      %v902 = vpack.c.b16 %v890, %v889
      %v903 = vpack.c.b16 %v892, %v891
      %v904 = vpack.c.b16 %v894, %v893
      %v905 = vpack.c.b16 %v896, %v895
      %v906 = vpack.c.b16 %v898, %v897
      %915 = vmatprep.subr.bf16.mxu0 0
      %916 = vmatpush1.bf16.msra.mxu0 %v899
      %917 = vmatprep.subr.bf16.mxu0 0
      %918 = vmatpush1.bf16.msra.mxu0 %v900
      %919 = vmatprep.subr.bf16.mxu0 0
      %920 = vmatpush1.bf16.msra.mxu0 %v901
      %921 = vmatprep.subr.bf16.mxu0 0
      %922 = vmatpush1.bf16.msra.mxu0 %v902
      %923 = vmatprep.subr.bf16.mxu0 0
      %924 = vmatpush1.bf16.msra.mxu0 %v903
      %925 = vmatprep.subr.bf16.mxu0 0
      %926 = vmatpush1.bf16.msra.mxu0 %v904
      %927 = vmatprep.subr.bf16.mxu0 0
      %928 = vmatpush1.bf16.msra.mxu0 %v905
      %929 = vmatprep.subr.bf16.mxu0 0
      %930 = vmatpush1.bf16.msra.mxu0 %v906
      %931 = vmatprep.subr.bf16.mxu0 0
      %932 = vmatpush1.bf16.msra.mxu0 0
      %933 = vmatprep.subr.bf16.mxu0 0
      %934 = vmatpush1.bf16.msra.mxu0 0
      %935 = vmatprep.subr.bf16.mxu0 0
      %936 = vmatpush1.bf16.msra.mxu0 0
      %937 = vmatprep.subr.bf16.mxu0 0
      %938 = vmatpush1.bf16.msra.mxu0 0
      %939 = vmatprep.subr.bf16.mxu0 0
      %940 = vmatpush1.bf16.msra.mxu0 0
      %941 = vmatprep.subr.bf16.mxu0 0
      %942 = vmatpush1.bf16.msra.mxu0 0
      %943 = vmatprep.subr.bf16.mxu0 0
      %944 = vmatpush1.bf16.msra.mxu0 0
      %945 = vmatprep.subr.bf16.mxu0 0
      %946 = vmatpush1.bf16.msra.mxu0 0
      %947 = vmatprep.mubr.bf16.mxu0 0
      %948 = vmatmul.mubr.bf16.gmra.mrb[0].mxu0 %v846
      %v949 = vpop.f32.mrb[0].mxu0
      %v950 = vadd.f32 0.0, %v949
      %v951 = vpop.f32.mrb[0].mxu0
      %v952 = vpop.f32.mrb[0].mxu0
      %v953 = vadd.f32 0.0, %v952
      %v954 = vpop.f32.mrb[0].mxu0
      %955 = vmatprep.mubr.bf16.mxu0 0
      %956 = vmatmul.mubr.bf16.gmra.mrb[0].mxu0 %v847
      %v957 = vpop.f32.mrb[0].mxu0
      %v958 = vadd.f32 0.0, %v957
      %v959 = vpop.f32.mrb[0].mxu0
      %v960 = vpop.f32.mrb[0].mxu0
      %v961 = vadd.f32 0.0, %v960
      %v962 = vpop.f32.mrb[0].mxu0
      %963 = vmatprep.mubr.bf16.mxu0 0
      %964 = vmatmul.mubr.bf16.gmra.mrb[0].mxu0 %v848
      %v965 = vpop.f32.mrb[0].mxu0
      %v966 = vadd.f32 0.0, %v965
      %v967 = vpop.f32.mrb[0].mxu0
      %v968 = vpop.f32.mrb[0].mxu0
      %v969 = vadd.f32 0.0, %v968
      %v970 = vpop.f32.mrb[0].mxu0
      %971 = vmatprep.mubr.bf16.mxu0 0
      %972 = vmatmul.mubr.bf16.gmra.mrb[0].mxu0 %v849
      %v973 = vpop.f32.mrb[0].mxu0
      %v974 = vadd.f32 0.0, %v973
      %v975 = vpop.f32.mrb[0].mxu0
      %v976 = vpop.f32.mrb[0].mxu0
      %v977 = vadd.f32 0.0, %v976
      %v978 = vpop.f32.mrb[0].mxu0
      %979 = vdwg.mxu0
      %v980 = vadd.f32 %v838, %v950
      %v981 = vadd.f32 %v839, %v953
      %v982 = vadd.f32 %v840, %v958
      %v983 = vadd.f32 %v841, %v961
      %v984 = vadd.f32 %v842, %v966
      %v985 = vadd.f32 %v843, %v969
      %v986 = vadd.f32 %v844, %v974
      %v987 = vadd.f32 %v845, %v977
      %988 = vst [vmem:[#allocation3] sm:$0xff] %v980
      %989 = vst [vmem:[#allocation3 + $0x8] sm:$0xff] %v981
      %990 = vst [vmem:[#allocation3 + $0x10] sm:$0xff] %v982
      %991 = vst [vmem:[#allocation3 + $0x18] sm:$0xff] %v983
      %992 = vst [vmem:[#allocation3 + $0x20] sm:$0xff] %v984
      %993 = vst [vmem:[#allocation3 + $0x28] sm:$0xff] %v985
      %994 = vst [vmem:[#allocation3 + $0x30] sm:$0xff] %v986
      %995 = vst [vmem:[#allocation3 + $0x38] sm:$0xff] %v987
      %v996 = vld [vmem:[%s316 + $0x1] sm:$0xff]
      %v997 = vld [vmem:[%s316 + $0x11] sm:$0xff]
      %v998 = vld [vmem:[%s316 + $0x21] sm:$0xff]
      %v999 = vld [vmem:[%s316 + $0x31] sm:$0xff]
      %v1000 = vld [vmem:[%s316 + $0x41] sm:$0xff]
      %v1001 = vld [vmem:[%s316 + $0x51] sm:$0xff]
      %v1002 = vld [vmem:[%s316 + $0x61] sm:$0xff]
      %v1003 = vld [vmem:[%s316 + $0x71] sm:$0xff]
      %v1004 = vld [vmem:[#allocation3] sm:$0xff]
      %v1005 = vld [vmem:[#allocation3 + $0x8] sm:$0xff]
      %v1006 = vld [vmem:[#allocation3 + $0x10] sm:$0xff]
      %v1007 = vld [vmem:[#allocation3 + $0x18] sm:$0xff]
      %v1008 = vld [vmem:[#allocation3 + $0x20] sm:$0xff]
      %v1009 = vld [vmem:[#allocation3 + $0x28] sm:$0xff]
      %v1010 = vld [vmem:[#allocation3 + $0x30] sm:$0xff]
      %v1011 = vld [vmem:[#allocation3 + $0x38] sm:$0xff]
      %v1012 = vpack.c.bf16 %v997, %v996
      %v1013 = vpack.c.bf16 %v999, %v998
      %v1014 = vpack.c.bf16 %v1001, %v1000
      %v1015 = vpack.c.bf16 %v1003, %v1002
      %s1016 = scalar_lea.vmem %s3, 256
      %v1017 = vld [vmem:[%s1016] sm:$0xf]
      %v1018 = vld [vmem:[%s1016 + $0x4] sm:$0xf]
      %v1019 = vld [vmem:[%s1016 + $0x8] sm:$0xf]
      %v1020 = vld [vmem:[%s1016 + $0xc] sm:$0xf]
      %v1021 = vld [vmem:[%s1016 + $0x10] sm:$0xf]
      %v1022 = vld [vmem:[%s1016 + $0x14] sm:$0xf]
      %v1023 = vld [vmem:[%s1016 + $0x18] sm:$0xf]
      %v1024 = vld [vmem:[%s1016 + $0x1c] sm:$0xf]
      %v1025 = vld [vmem:[%s1016 + $0x20] sm:$0xf]
      %v1026 = vld [vmem:[%s1016 + $0x24] sm:$0xf]
      %v1027 = vld [vmem:[%s1016 + $0x28] sm:$0xf]
      %v1028 = vld [vmem:[%s1016 + $0x2c] sm:$0xf]
      %v1029 = vld [vmem:[%s1016 + $0x30] sm:$0xf]
      %v1030 = vld [vmem:[%s1016 + $0x34] sm:$0xf]
      %v1031 = vld [vmem:[%s1016 + $0x38] sm:$0xf]
      %v1032 = vld [vmem:[%s1016 + $0x3c] sm:$0xf]
      %v1049 = vunpack.c.l.b16 %v1017
      %v1050 = vunpack.c.l.b16 %v1018
      %v1051 = vunpack.c.l.b16 %v1019
      %v1052 = vunpack.c.l.b16 %v1020
      %v1053 = vunpack.c.l.b16 %v1021
      %v1054 = vunpack.c.l.b16 %v1022
      %v1055 = vunpack.c.l.b16 %v1023
      %v1056 = vunpack.c.l.b16 %v1024
      %v1057 = vunpack.c.l.b16 %v1025
      %v1058 = vunpack.c.l.b16 %v1026
      %v1059 = vunpack.c.l.b16 %v1027
      %v1060 = vunpack.c.l.b16 %v1028
      %v1061 = vunpack.c.l.b16 %v1029
      %v1062 = vunpack.c.l.b16 %v1030
      %v1063 = vunpack.c.l.b16 %v1031
      %v1064 = vunpack.c.l.b16 %v1032
      %v1065 = vpack.c.b16 %v1050, %v1049
      %v1066 = vpack.c.b16 %v1052, %v1051
      %v1067 = vpack.c.b16 %v1054, %v1053
      %v1068 = vpack.c.b16 %v1056, %v1055
      %v1069 = vpack.c.b16 %v1058, %v1057
      %v1070 = vpack.c.b16 %v1060, %v1059
      %v1071 = vpack.c.b16 %v1062, %v1061
      %v1072 = vpack.c.b16 %v1064, %v1063
      %1081 = vmatprep.subr.bf16.mxu0 0
      %1082 = vmatpush1.bf16.msra.mxu0 %v1065
      %1083 = vmatprep.subr.bf16.mxu0 0
      %1084 = vmatpush1.bf16.msra.mxu0 %v1066
      %1085 = vmatprep.subr.bf16.mxu0 0
      %1086 = vmatpush1.bf16.msra.mxu0 %v1067
      %1087 = vmatprep.subr.bf16.mxu0 0
      %1088 = vmatpush1.bf16.msra.mxu0 %v1068
      %1089 = vmatprep.subr.bf16.mxu0 0
      %1090 = vmatpush1.bf16.msra.mxu0 %v1069
      %1091 = vmatprep.subr.bf16.mxu0 0
      %1092 = vmatpush1.bf16.msra.mxu0 %v1070
      %1093 = vmatprep.subr.bf16.mxu0 0
      %1094 = vmatpush1.bf16.msra.mxu0 %v1071
      %1095 = vmatprep.subr.bf16.mxu0 0
      %1096 = vmatpush1.bf16.msra.mxu0 %v1072
      %1097 = vmatprep.subr.bf16.mxu0 0
      %1098 = vmatpush1.bf16.msra.mxu0 0
      %1099 = vmatprep.subr.bf16.mxu0 0
      %1100 = vmatpush1.bf16.msra.mxu0 0
      %1101 = vmatprep.subr.bf16.mxu0 0
      %1102 = vmatpush1.bf16.msra.mxu0 0
      %1103 = vmatprep.subr.bf16.mxu0 0
      %1104 = vmatpush1.bf16.msra.mxu0 0
      %1105 = vmatprep.subr.bf16.mxu0 0
      %1106 = vmatpush1.bf16.msra.mxu0 0
      %1107 = vmatprep.subr.bf16.mxu0 0
      %1108 = vmatpush1.bf16.msra.mxu0 0
      %1109 = vmatprep.subr.bf16.mxu0 0
      %1110 = vmatpush1.bf16.msra.mxu0 0
      %1111 = vmatprep.subr.bf16.mxu0 0
      %1112 = vmatpush1.bf16.msra.mxu0 0
      %1113 = vmatprep.mubr.bf16.mxu0 0
      %1114 = vmatmul.mubr.bf16.gmra.mrb[0].mxu0 %v1012
      %v1115 = vpop.f32.mrb[0].mxu0
      %v1116 = vadd.f32 0.0, %v1115
      %v1117 = vpop.f32.mrb[0].mxu0
      %v1118 = vpop.f32.mrb[0].mxu0
      %v1119 = vadd.f32 0.0, %v1118
      %v1120 = vpop.f32.mrb[0].mxu0
      %1121 = vmatprep.mubr.bf16.mxu0 0
      %1122 = vmatmul.mubr.bf16.gmra.mrb[0].mxu0 %v1013
      %v1123 = vpop.f32.mrb[0].mxu0
      %v1124 = vadd.f32 0.0, %v1123
      %v1125 = vpop.f32.mrb[0].mxu0
      %v1126 = vpop.f32.mrb[0].mxu0
      %v1127 = vadd.f32 0.0, %v1126
      %v1128 = vpop.f32.mrb[0].mxu0
      %1129 = vmatprep.mubr.bf16.mxu0 0
      %1130 = vmatmul.mubr.bf16.gmra.mrb[0].mxu0 %v1014
      %v1131 = vpop.f32.mrb[0].mxu0
      %v1132 = vadd.f32 0.0, %v1131
      %v1133 = vpop.f32.mrb[0].mxu0
      %v1134 = vpop.f32.mrb[0].mxu0
      %v1135 = vadd.f32 0.0, %v1134
      %v1136 = vpop.f32.mrb[0].mxu0
      %1137 = vmatprep.mubr.bf16.mxu0 0
      %1138 = vmatmul.mubr.bf16.gmra.mrb[0].mxu0 %v1015
      %v1139 = vpop.f32.mrb[0].mxu0
      %v1140 = vadd.f32 0.0, %v1139
      %v1141 = vpop.f32.mrb[0].mxu0
      %v1142 = vpop.f32.mrb[0].mxu0
      %v1143 = vadd.f32 0.0, %v1142
      %v1144 = vpop.f32.mrb[0].mxu0
      %1145 = vdwg.mxu0
      %v1146 = vadd.f32 %v1004, %v1116
      %v1147 = vadd.f32 %v1005, %v1119
      %v1148 = vadd.f32 %v1006, %v1124
      %v1149 = vadd.f32 %v1007, %v1127
      %v1150 = vadd.f32 %v1008, %v1132
      %v1151 = vadd.f32 %v1009, %v1135
      %v1152 = vadd.f32 %v1010, %v1140
      %v1153 = vadd.f32 %v1011, %v1143
      %1154 = vst [vmem:[#allocation3] sm:$0xff] %v1146
      %1155 = vst [vmem:[#allocation3 + $0x8] sm:$0xff] %v1147
      %1156 = vst [vmem:[#allocation3 + $0x10] sm:$0xff] %v1148
      %1157 = vst [vmem:[#allocation3 + $0x18] sm:$0xff] %v1149
      %1158 = vst [vmem:[#allocation3 + $0x20] sm:$0xff] %v1150
      %1159 = vst [vmem:[#allocation3 + $0x28] sm:$0xff] %v1151
      %1160 = vst [vmem:[#allocation3 + $0x30] sm:$0xff] %v1152
      %1161 = vst [vmem:[#allocation3 + $0x38] sm:$0xff] %v1153
      %v1162 = vld [vmem:[%s316 + $0x2] sm:$0xff]
      %v1163 = vld [vmem:[%s316 + $0x12] sm:$0xff]
      %v1164 = vld [vmem:[%s316 + $0x22] sm:$0xff]
      %v1165 = vld [vmem:[%s316 + $0x32] sm:$0xff]
      %v1166 = vld [vmem:[%s316 + $0x42] sm:$0xff]
      %v1167 = vld [vmem:[%s316 + $0x52] sm:$0xff]
      %v1168 = vld [vmem:[%s316 + $0x62] sm:$0xff]
      %v1169 = vld [vmem:[%s316 + $0x72] sm:$0xff]
      %v1170 = vld [vmem:[#allocation3] sm:$0xff]
      %v1171 = vld [vmem:[#allocation3 + $0x8] sm:$0xff]
      %v1172 = vld [vmem:[#allocation3 + $0x10] sm:$0xff]
      %v1173 = vld [vmem:[#allocation3 + $0x18] sm:$0xff]
      %v1174 = vld [vmem:[#allocation3 + $0x20] sm:$0xff]
      %v1175 = vld [vmem:[#allocation3 + $0x28] sm:$0xff]
      %v1176 = vld [vmem:[#allocation3 + $0x30] sm:$0xff]
      %v1177 = vld [vmem:[#allocation3 + $0x38] sm:$0xff]
      %v1178 = vpack.c.bf16 %v1163, %v1162
      %v1179 = vpack.c.bf16 %v1165, %v1164
      %v1180 = vpack.c.bf16 %v1167, %v1166
      %v1181 = vpack.c.bf16 %v1169, %v1168
      %s1182 = scalar_lea.vmem %s3, 320
      %v1183 = vld [vmem:[%s1182] sm:$0xf]
      %v1184 = vld [vmem:[%s1182 + $0x4] sm:$0xf]
      %v1185 = vld [vmem:[%s1182 + $0x8] sm:$0xf]
      %v1186 = vld [vmem:[%s1182 + $0xc] sm:$0xf]
      %v1187 = vld [vmem:[%s1182 + $0x10] sm:$0xf]
      %v1188 = vld [vmem:[%s1182 + $0x14] sm:$0xf]
      %v1189 = vld [vmem:[%s1182 + $0x18] sm:$0xf]
      %v1190 = vld [vmem:[%s1182 + $0x1c] sm:$0xf]
      %v1191 = vld [vmem:[%s1182 + $0x20] sm:$0xf]
      %v1192 = vld [vmem:[%s1182 + $0x24] sm:$0xf]
      %v1193 = vld [vmem:[%s1182 + $0x28] sm:$0xf]
      %v1194 = vld [vmem:[%s1182 + $0x2c] sm:$0xf]
      %v1195 = vld [vmem:[%s1182 + $0x30] sm:$0xf]
      %v1196 = vld [vmem:[%s1182 + $0x34] sm:$0xf]
      %v1197 = vld [vmem:[%s1182 + $0x38] sm:$0xf]
      %v1198 = vld [vmem:[%s1182 + $0x3c] sm:$0xf]
      %v1215 = vunpack.c.l.b16 %v1183
      %v1216 = vunpack.c.l.b16 %v1184
      %v1217 = vunpack.c.l.b16 %v1185
      %v1218 = vunpack.c.l.b16 %v1186
      %v1219 = vunpack.c.l.b16 %v1187
      %v1220 = vunpack.c.l.b16 %v1188
      %v1221 = vunpack.c.l.b16 %v1189
      %v1222 = vunpack.c.l.b16 %v1190
      %v1223 = vunpack.c.l.b16 %v1191
      %v1224 = vunpack.c.l.b16 %v1192
      %v1225 = vunpack.c.l.b16 %v1193
      %v1226 = vunpack.c.l.b16 %v1194
      %v1227 = vunpack.c.l.b16 %v1195
      %v1228 = vunpack.c.l.b16 %v1196
      %v1229 = vunpack.c.l.b16 %v1197
      %v1230 = vunpack.c.l.b16 %v1198
      %v1231 = vpack.c.b16 %v1216, %v1215
      %v1232 = vpack.c.b16 %v1218, %v1217
      %v1233 = vpack.c.b16 %v1220, %v1219
      %v1234 = vpack.c.b16 %v1222, %v1221
      %v1235 = vpack.c.b16 %v1224, %v1223
      %v1236 = vpack.c.b16 %v1226, %v1225
      %v1237 = vpack.c.b16 %v1228, %v1227
      %v1238 = vpack.c.b16 %v1230, %v1229
      %1247 = vmatprep.subr.bf16.mxu0 0
      %1248 = vmatpush1.bf16.msra.mxu0 %v1231
      %1249 = vmatprep.subr.bf16.mxu0 0
      %1250 = vmatpush1.bf16.msra.mxu0 %v1232
      %1251 = vmatprep.subr.bf16.mxu0 0
      %1252 = vmatpush1.bf16.msra.mxu0 %v1233
      %1253 = vmatprep.subr.bf16.mxu0 0
      %1254 = vmatpush1.bf16.msra.mxu0 %v1234
      %1255 = vmatprep.subr.bf16.mxu0 0
      %1256 = vmatpush1.bf16.msra.mxu0 %v1235
      %1257 = vmatprep.subr.bf16.mxu0 0
      %1258 = vmatpush1.bf16.msra.mxu0 %v1236
      %1259 = vmatprep.subr.bf16.mxu0 0
      %1260 = vmatpush1.bf16.msra.mxu0 %v1237
      %1261 = vmatprep.subr.bf16.mxu0 0
      %1262 = vmatpush1.bf16.msra.mxu0 %v1238
      %1263 = vmatprep.subr.bf16.mxu0 0
      %1264 = vmatpush1.bf16.msra.mxu0 0
      %1265 = vmatprep.subr.bf16.mxu0 0
      %1266 = vmatpush1.bf16.msra.mxu0 0
      %1267 = vmatprep.subr.bf16.mxu0 0
      %1268 = vmatpush1.bf16.msra.mxu0 0
      %1269 = vmatprep.subr.bf16.mxu0 0
      %1270 = vmatpush1.bf16.msra.mxu0 0
      %1271 = vmatprep.subr.bf16.mxu0 0
      %1272 = vmatpush1.bf16.msra.mxu0 0
      %1273 = vmatprep.subr.bf16.mxu0 0
      %1274 = vmatpush1.bf16.msra.mxu0 0
      %1275 = vmatprep.subr.bf16.mxu0 0
      %1276 = vmatpush1.bf16.msra.mxu0 0
      %1277 = vmatprep.subr.bf16.mxu0 0
      %1278 = vmatpush1.bf16.msra.mxu0 0
      %1279 = vmatprep.mubr.bf16.mxu0 0
      %1280 = vmatmul.mubr.bf16.gmra.mrb[0].mxu0 %v1178
      %v1281 = vpop.f32.mrb[0].mxu0
      %v1282 = vadd.f32 0.0, %v1281
      %v1283 = vpop.f32.mrb[0].mxu0
      %v1284 = vpop.f32.mrb[0].mxu0
      %v1285 = vadd.f32 0.0, %v1284
      %v1286 = vpop.f32.mrb[0].mxu0
      %1287 = vmatprep.mubr.bf16.mxu0 0
      %1288 = vmatmul.mubr.bf16.gmra.mrb[0].mxu0 %v1179
      %v1289 = vpop.f32.mrb[0].mxu0
      %v1290 = vadd.f32 0.0, %v1289
      %v1291 = vpop.f32.mrb[0].mxu0
      %v1292 = vpop.f32.mrb[0].mxu0
      %v1293 = vadd.f32 0.0, %v1292
      %v1294 = vpop.f32.mrb[0].mxu0
      %1295 = vmatprep.mubr.bf16.mxu0 0
      %1296 = vmatmul.mubr.bf16.gmra.mrb[0].mxu0 %v1180
      %v1297 = vpop.f32.mrb[0].mxu0
      %v1298 = vadd.f32 0.0, %v1297
      %v1299 = vpop.f32.mrb[0].mxu0
      %v1300 = vpop.f32.mrb[0].mxu0
      %v1301 = vadd.f32 0.0, %v1300
      %v1302 = vpop.f32.mrb[0].mxu0
      %1303 = vmatprep.mubr.bf16.mxu0 0
      %1304 = vmatmul.mubr.bf16.gmra.mrb[0].mxu0 %v1181
      %v1305 = vpop.f32.mrb[0].mxu0
      %v1306 = vadd.f32 0.0, %v1305
      %v1307 = vpop.f32.mrb[0].mxu0
      %v1308 = vpop.f32.mrb[0].mxu0
      %v1309 = vadd.f32 0.0, %v1308
      %v1310 = vpop.f32.mrb[0].mxu0
      %1311 = vdwg.mxu0
      %v1312 = vadd.f32 %v1170, %v1282
      %v1313 = vadd.f32 %v1171, %v1285
      %v1314 = vadd.f32 %v1172, %v1290
      %v1315 = vadd.f32 %v1173, %v1293
      %v1316 = vadd.f32 %v1174, %v1298
      %v1317 = vadd.f32 %v1175, %v1301
      %v1318 = vadd.f32 %v1176, %v1306
      %v1319 = vadd.f32 %v1177, %v1309
      %1320 = vst [vmem:[#allocation3] sm:$0xff] %v1312
      %1321 = vst [vmem:[#allocation3 + $0x8] sm:$0xff] %v1313
      %1322 = vst [vmem:[#allocation3 + $0x10] sm:$0xff] %v1314
      %1323 = vst [vmem:[#allocation3 + $0x18] sm:$0xff] %v1315
      %1324 = vst [vmem:[#allocation3 + $0x20] sm:$0xff] %v1316
      %1325 = vst [vmem:[#allocation3 + $0x28] sm:$0xff] %v1317
      %1326 = vst [vmem:[#allocation3 + $0x30] sm:$0xff] %v1318
      %1327 = vst [vmem:[#allocation3 + $0x38] sm:$0xff] %v1319
      %s1328 = scalar_lea.vmem [#allocation2], 32
      %v1329 = vld [vmem:[%s1328] sm:$0xff]
      %v1330 = vld [vmem:[%s1328 + $0x10] sm:$0xff]
      %v1331 = vld [vmem:[%s1328 + $0x20] sm:$0xff]
      %v1332 = vld [vmem:[%s1328 + $0x30] sm:$0xff]
      %v1333 = vld [vmem:[%s1328 + $0x40] sm:$0xff]
      %v1334 = vld [vmem:[%s1328 + $0x50] sm:$0xff]
      %v1335 = vld [vmem:[%s1328 + $0x60] sm:$0xff]
      %v1336 = vld [vmem:[%s1328 + $0x70] sm:$0xff]
      %v1337 = vld [vmem:[#allocation3] sm:$0xff]
      %v1338 = vld [vmem:[#allocation3 + $0x8] sm:$0xff]
      %v1339 = vld [vmem:[#allocation3 + $0x10] sm:$0xff]
      %v1340 = vld [vmem:[#allocation3 + $0x18] sm:$0xff]
      %v1341 = vld [vmem:[#allocation3 + $0x20] sm:$0xff]
      %v1342 = vld [vmem:[#allocation3 + $0x28] sm:$0xff]
      %v1343 = vld [vmem:[#allocation3 + $0x30] sm:$0xff]
      %v1344 = vld [vmem:[#allocation3 + $0x38] sm:$0xff]
      %v1345 = vpack.c.bf16 %v1330, %v1329
      %v1346 = vpack.c.bf16 %v1332, %v1331
      %v1347 = vpack.c.bf16 %v1334, %v1333
      %v1348 = vpack.c.bf16 %v1336, %v1335
      %s1349 = scalar_lea.vmem %s3, 384
      %v1350 = vld [vmem:[%s1349] sm:$0xf]
      %v1351 = vld [vmem:[%s1349 + $0x4] sm:$0xf]
      %v1352 = vld [vmem:[%s1349 + $0x8] sm:$0xf]
      %v1353 = vld [vmem:[%s1349 + $0xc] sm:$0xf]
      %v1354 = vld [vmem:[%s1349 + $0x10] sm:$0xf]
      %v1355 = vld [vmem:[%s1349 + $0x14] sm:$0xf]
      %v1356 = vld [vmem:[%s1349 + $0x18] sm:$0xf]
      %v1357 = vld [vmem:[%s1349 + $0x1c] sm:$0xf]
      %v1358 = vld [vmem:[%s1349 + $0x20] sm:$0xf]
      %v1359 = vld [vmem:[%s1349 + $0x24] sm:$0xf]
      %v1360 = vld [vmem:[%s1349 + $0x28] sm:$0xf]
      %v1361 = vld [vmem:[%s1349 + $0x2c] sm:$0xf]
      %v1362 = vld [vmem:[%s1349 + $0x30] sm:$0xf]
      %v1363 = vld [vmem:[%s1349 + $0x34] sm:$0xf]
      %v1364 = vld [vmem:[%s1349 + $0x38] sm:$0xf]
      %v1365 = vld [vmem:[%s1349 + $0x3c] sm:$0xf]
      %v1382 = vunpack.c.l.b16 %v1350
      %v1383 = vunpack.c.l.b16 %v1351
      %v1384 = vunpack.c.l.b16 %v1352
      %v1385 = vunpack.c.l.b16 %v1353
      %v1386 = vunpack.c.l.b16 %v1354
      %v1387 = vunpack.c.l.b16 %v1355
      %v1388 = vunpack.c.l.b16 %v1356
      %v1389 = vunpack.c.l.b16 %v1357
      %v1390 = vunpack.c.l.b16 %v1358
      %v1391 = vunpack.c.l.b16 %v1359
      %v1392 = vunpack.c.l.b16 %v1360
      %v1393 = vunpack.c.l.b16 %v1361
      %v1394 = vunpack.c.l.b16 %v1362
      %v1395 = vunpack.c.l.b16 %v1363
      %v1396 = vunpack.c.l.b16 %v1364
      %v1397 = vunpack.c.l.b16 %v1365
      %v1398 = vpack.c.b16 %v1383, %v1382
      %v1399 = vpack.c.b16 %v1385, %v1384
      %v1400 = vpack.c.b16 %v1387, %v1386
      %v1401 = vpack.c.b16 %v1389, %v1388
      %v1402 = vpack.c.b16 %v1391, %v1390
      %v1403 = vpack.c.b16 %v1393, %v1392
      %v1404 = vpack.c.b16 %v1395, %v1394
      %v1405 = vpack.c.b16 %v1397, %v1396
      %1414 = vmatprep.subr.bf16.mxu0 0
      %1415 = vmatpush1.bf16.msra.mxu0 %v1398
      %1416 = vmatprep.subr.bf16.mxu0 0
      %1417 = vmatpush1.bf16.msra.mxu0 %v1399
      %1418 = vmatprep.subr.bf16.mxu0 0
      %1419 = vmatpush1.bf16.msra.mxu0 %v1400
      %1420 = vmatprep.subr.bf16.mxu0 0
      %1421 = vmatpush1.bf16.msra.mxu0 %v1401
      %1422 = vmatprep.subr.bf16.mxu0 0
      %1423 = vmatpush1.bf16.msra.mxu0 %v1402
      %1424 = vmatprep.subr.bf16.mxu0 0
      %1425 = vmatpush1.bf16.msra.mxu0 %v1403
      %1426 = vmatprep.subr.bf16.mxu0 0
      %1427 = vmatpush1.bf16.msra.mxu0 %v1404
      %1428 = vmatprep.subr.bf16.mxu0 0
      %1429 = vmatpush1.bf16.msra.mxu0 %v1405
      %1430 = vmatprep.subr.bf16.mxu0 0
      %1431 = vmatpush1.bf16.msra.mxu0 0
      %1432 = vmatprep.subr.bf16.mxu0 0
      %1433 = vmatpush1.bf16.msra.mxu0 0
      %1434 = vmatprep.subr.bf16.mxu0 0
      %1435 = vmatpush1.bf16.msra.mxu0 0
      %1436 = vmatprep.subr.bf16.mxu0 0
      %1437 = vmatpush1.bf16.msra.mxu0 0
      %1438 = vmatprep.subr.bf16.mxu0 0
      %1439 = vmatpush1.bf16.msra.mxu0 0
      %1440 = vmatprep.subr.bf16.mxu0 0
      %1441 = vmatpush1.bf16.msra.mxu0 0
      %1442 = vmatprep.subr.bf16.mxu0 0
      %1443 = vmatpush1.bf16.msra.mxu0 0
      %1444 = vmatprep.subr.bf16.mxu0 0
      %1445 = vmatpush1.bf16.msra.mxu0 0
      %1446 = vmatprep.mubr.bf16.mxu0 0
      %1447 = vmatmul.mubr.bf16.gmra.mrb[0].mxu0 %v1345
      %v1448 = vpop.f32.mrb[0].mxu0
      %v1449 = vadd.f32 0.0, %v1448
      %v1450 = vpop.f32.mrb[0].mxu0
      %v1451 = vpop.f32.mrb[0].mxu0
      %v1452 = vadd.f32 0.0, %v1451
      %v1453 = vpop.f32.mrb[0].mxu0
      %1454 = vmatprep.mubr.bf16.mxu0 0
      %1455 = vmatmul.mubr.bf16.gmra.mrb[0].mxu0 %v1346
      %v1456 = vpop.f32.mrb[0].mxu0
      %v1457 = vadd.f32 0.0, %v1456
      %v1458 = vpop.f32.mrb[0].mxu0
      %v1459 = vpop.f32.mrb[0].mxu0
      %v1460 = vadd.f32 0.0, %v1459
      %v1461 = vpop.f32.mrb[0].mxu0
      %1462 = vmatprep.mubr.bf16.mxu0 0
      %1463 = vmatmul.mubr.bf16.gmra.mrb[0].mxu0 %v1347
      %v1464 = vpop.f32.mrb[0].mxu0
      %v1465 = vadd.f32 0.0, %v1464
      %v1466 = vpop.f32.mrb[0].mxu0
      %v1467 = vpop.f32.mrb[0].mxu0
      %v1468 = vadd.f32 0.0, %v1467
      %v1469 = vpop.f32.mrb[0].mxu0
      %1470 = vmatprep.mubr.bf16.mxu0 0
      %1471 = vmatmul.mubr.bf16.gmra.mrb[0].mxu0 %v1348
      %v1472 = vpop.f32.mrb[0].mxu0
      %v1473 = vadd.f32 0.0, %v1472
      %v1474 = vpop.f32.mrb[0].mxu0
      %v1475 = vpop.f32.mrb[0].mxu0
      %v1476 = vadd.f32 0.0, %v1475
      %v1477 = vpop.f32.mrb[0].mxu0
      %1478 = vdwg.mxu0
      %v1479 = vadd.f32 %v1337, %v1449
      %v1480 = vadd.f32 %v1338, %v1452
      %v1481 = vadd.f32 %v1339, %v1457
      %v1482 = vadd.f32 %v1340, %v1460
      %v1483 = vadd.f32 %v1341, %v1465
      %v1484 = vadd.f32 %v1342, %v1468
      %v1485 = vadd.f32 %v1343, %v1473
      %v1486 = vadd.f32 %v1344, %v1476
      %1487 = vst [vmem:[#allocation3] sm:$0xff] %v1479
      %1488 = vst [vmem:[#allocation3 + $0x8] sm:$0xff] %v1480
      %1489 = vst [vmem:[#allocation3 + $0x10] sm:$0xff] %v1481
      %1490 = vst [vmem:[#allocation3 + $0x18] sm:$0xff] %v1482
      %1491 = vst [vmem:[#allocation3 + $0x20] sm:$0xff] %v1483
      %1492 = vst [vmem:[#allocation3 + $0x28] sm:$0xff] %v1484
      %1493 = vst [vmem:[#allocation3 + $0x30] sm:$0xff] %v1485
      %1494 = vst [vmem:[#allocation3 + $0x38] sm:$0xff] %v1486
      %v1495 = vld [vmem:[%s1328 + $0x1] sm:$0xff]
      %v1496 = vld [vmem:[%s1328 + $0x11] sm:$0xff]
      %v1497 = vld [vmem:[%s1328 + $0x21] sm:$0xff]
      %v1498 = vld [vmem:[%s1328 + $0x31] sm:$0xff]
      %v1499 = vld [vmem:[%s1328 + $0x41] sm:$0xff]
      %v1500 = vld [vmem:[%s1328 + $0x51] sm:$0xff]
      %v1501 = vld [vmem:[%s1328 + $0x61] sm:$0xff]
      %v1502 = vld [vmem:[%s1328 + $0x71] sm:$0xff]
      %v1503 = vld [vmem:[#allocation3] sm:$0xff]
      %v1504 = vld [vmem:[#allocation3 + $0x8] sm:$0xff]
      %v1505 = vld [vmem:[#allocation3 + $0x10] sm:$0xff]
      %v1506 = vld [vmem:[#allocation3 + $0x18] sm:$0xff]
      %v1507 = vld [vmem:[#allocation3 + $0x20] sm:$0xff]
      %v1508 = vld [vmem:[#allocation3 + $0x28] sm:$0xff]
      %v1509 = vld [vmem:[#allocation3 + $0x30] sm:$0xff]
      %v1510 = vld [vmem:[#allocation3 + $0x38] sm:$0xff]
      %v1511 = vpack.c.bf16 %v1496, %v1495
      %v1512 = vpack.c.bf16 %v1498, %v1497
      %v1513 = vpack.c.bf16 %v1500, %v1499
      %v1514 = vpack.c.bf16 %v1502, %v1501
      %s1515 = scalar_lea.vmem %s3, 448
      %v1516 = vld [vmem:[%s1515] sm:$0xf]
      %v1517 = vld [vmem:[%s1515 + $0x4] sm:$0xf]
      %v1518 = vld [vmem:[%s1515 + $0x8] sm:$0xf]
      %v1519 = vld [vmem:[%s1515 + $0xc] sm:$0xf]
      %v1520 = vld [vmem:[%s1515 + $0x10] sm:$0xf]
      %v1521 = vld [vmem:[%s1515 + $0x14] sm:$0xf]
      %v1522 = vld [vmem:[%s1515 + $0x18] sm:$0xf]
      %v1523 = vld [vmem:[%s1515 + $0x1c] sm:$0xf]
      %v1524 = vld [vmem:[%s1515 + $0x20] sm:$0xf]
      %v1525 = vld [vmem:[%s1515 + $0x24] sm:$0xf]
      %v1526 = vld [vmem:[%s1515 + $0x28] sm:$0xf]
      %v1527 = vld [vmem:[%s1515 + $0x2c] sm:$0xf]
      %v1528 = vld [vmem:[%s1515 + $0x30] sm:$0xf]
      %v1529 = vld [vmem:[%s1515 + $0x34] sm:$0xf]
      %v1530 = vld [vmem:[%s1515 + $0x38] sm:$0xf]
      %v1531 = vld [vmem:[%s1515 + $0x3c] sm:$0xf]
      %v1548 = vunpack.c.l.b16 %v1516
      %v1549 = vunpack.c.l.b16 %v1517
      %v1550 = vunpack.c.l.b16 %v1518
      %v1551 = vunpack.c.l.b16 %v1519
      %v1552 = vunpack.c.l.b16 %v1520
      %v1553 = vunpack.c.l.b16 %v1521
      %v1554 = vunpack.c.l.b16 %v1522
      %v1555 = vunpack.c.l.b16 %v1523
      %v1556 = vunpack.c.l.b16 %v1524
      %v1557 = vunpack.c.l.b16 %v1525
      %v1558 = vunpack.c.l.b16 %v1526
      %v1559 = vunpack.c.l.b16 %v1527
      %v1560 = vunpack.c.l.b16 %v1528
      %v1561 = vunpack.c.l.b16 %v1529
      %v1562 = vunpack.c.l.b16 %v1530
      %v1563 = vunpack.c.l.b16 %v1531
      %v1564 = vpack.c.b16 %v1549, %v1548
      %v1565 = vpack.c.b16 %v1551, %v1550
      %v1566 = vpack.c.b16 %v1553, %v1552
      %v1567 = vpack.c.b16 %v1555, %v1554
      %v1568 = vpack.c.b16 %v1557, %v1556
      %v1569 = vpack.c.b16 %v1559, %v1558
      %v1570 = vpack.c.b16 %v1561, %v1560
      %v1571 = vpack.c.b16 %v1563, %v1562
      %1580 = vmatprep.subr.bf16.mxu0 0
      %1581 = vmatpush1.bf16.msra.mxu0 %v1564
      %1582 = vmatprep.subr.bf16.mxu0 0
      %1583 = vmatpush1.bf16.msra.mxu0 %v1565
      %1584 = vmatprep.subr.bf16.mxu0 0
      %1585 = vmatpush1.bf16.msra.mxu0 %v1566
      %1586 = vmatprep.subr.bf16.mxu0 0
      %1587 = vmatpush1.bf16.msra.mxu0 %v1567
      %1588 = vmatprep.subr.bf16.mxu0 0
      %1589 = vmatpush1.bf16.msra.mxu0 %v1568
      %1590 = vmatprep.subr.bf16.mxu0 0
      %1591 = vmatpush1.bf16.msra.mxu0 %v1569
      %1592 = vmatprep.subr.bf16.mxu0 0
      %1593 = vmatpush1.bf16.msra.mxu0 %v1570
      %1594 = vmatprep.subr.bf16.mxu0 0
      %1595 = vmatpush1.bf16.msra.mxu0 %v1571
      %1596 = vmatprep.subr.bf16.mxu0 0
      %1597 = vmatpush1.bf16.msra.mxu0 0
      %1598 = vmatprep.subr.bf16.mxu0 0
      %1599 = vmatpush1.bf16.msra.mxu0 0
      %1600 = vmatprep.subr.bf16.mxu0 0
      %1601 = vmatpush1.bf16.msra.mxu0 0
      %1602 = vmatprep.subr.bf16.mxu0 0
      %1603 = vmatpush1.bf16.msra.mxu0 0
      %1604 = vmatprep.subr.bf16.mxu0 0
      %1605 = vmatpush1.bf16.msra.mxu0 0
      %1606 = vmatprep.subr.bf16.mxu0 0
      %1607 = vmatpush1.bf16.msra.mxu0 0
      %1608 = vmatprep.subr.bf16.mxu0 0
      %1609 = vmatpush1.bf16.msra.mxu0 0
      %1610 = vmatprep.subr.bf16.mxu0 0
      %1611 = vmatpush1.bf16.msra.mxu0 0
      %1612 = vmatprep.mubr.bf16.mxu0 0
      %1613 = vmatmul.mubr.bf16.gmra.mrb[0].mxu0 %v1511
      %v1614 = vpop.f32.mrb[0].mxu0
      %v1615 = vadd.f32 0.0, %v1614
      %v1616 = vpop.f32.mrb[0].mxu0
      %v1617 = vpop.f32.mrb[0].mxu0
      %v1618 = vadd.f32 0.0, %v1617
      %v1619 = vpop.f32.mrb[0].mxu0
      %1620 = vmatprep.mubr.bf16.mxu0 0
      %1621 = vmatmul.mubr.bf16.gmra.mrb[0].mxu0 %v1512
      %v1622 = vpop.f32.mrb[0].mxu0
      %v1623 = vadd.f32 0.0, %v1622
      %v1624 = vpop.f32.mrb[0].mxu0
      %v1625 = vpop.f32.mrb[0].mxu0
      %v1626 = vadd.f32 0.0, %v1625
      %v1627 = vpop.f32.mrb[0].mxu0
      %1628 = vmatprep.mubr.bf16.mxu0 0
      %1629 = vmatmul.mubr.bf16.gmra.mrb[0].mxu0 %v1513
      %v1630 = vpop.f32.mrb[0].mxu0
      %v1631 = vadd.f32 0.0, %v1630
      %v1632 = vpop.f32.mrb[0].mxu0
      %v1633 = vpop.f32.mrb[0].mxu0
      %v1634 = vadd.f32 0.0, %v1633
      %v1635 = vpop.f32.mrb[0].mxu0
      %1636 = vmatprep.mubr.bf16.mxu0 0
      %1637 = vmatmul.mubr.bf16.gmra.mrb[0].mxu0 %v1514
      %v1638 = vpop.f32.mrb[0].mxu0
      %v1639 = vadd.f32 0.0, %v1638
      %v1640 = vpop.f32.mrb[0].mxu0
      %v1641 = vpop.f32.mrb[0].mxu0
      %v1642 = vadd.f32 0.0, %v1641
      %v1643 = vpop.f32.mrb[0].mxu0
      %1644 = vdwg.mxu0
      %v1645 = vadd.f32 %v1503, %v1615
      %v1646 = vadd.f32 %v1504, %v1618
      %v1647 = vadd.f32 %v1505, %v1623
      %v1648 = vadd.f32 %v1506, %v1626
      %v1649 = vadd.f32 %v1507, %v1631
      %v1650 = vadd.f32 %v1508, %v1634
      %v1651 = vadd.f32 %v1509, %v1639
      %v1652 = vadd.f32 %v1510, %v1642
      %1653 = vst [vmem:[#allocation3] sm:$0xff] %v1645
      %1654 = vst [vmem:[#allocation3 + $0x8] sm:$0xff] %v1646
      %1655 = vst [vmem:[#allocation3 + $0x10] sm:$0xff] %v1647
      %1656 = vst [vmem:[#allocation3 + $0x18] sm:$0xff] %v1648
      %1657 = vst [vmem:[#allocation3 + $0x20] sm:$0xff] %v1649
      %1658 = vst [vmem:[#allocation3 + $0x28] sm:$0xff] %v1650
      %1659 = vst [vmem:[#allocation3 + $0x30] sm:$0xff] %v1651
      %1660 = vst [vmem:[#allocation3 + $0x38] sm:$0xff] %v1652
      %v1661 = vld [vmem:[%s1328 + $0x2] sm:$0xff]
      %v1662 = vld [vmem:[%s1328 + $0x12] sm:$0xff]
      %v1663 = vld [vmem:[%s1328 + $0x22] sm:$0xff]
      %v1664 = vld [vmem:[%s1328 + $0x32] sm:$0xff]
      %v1665 = vld [vmem:[%s1328 + $0x42] sm:$0xff]
      %v1666 = vld [vmem:[%s1328 + $0x52] sm:$0xff]
      %v1667 = vld [vmem:[%s1328 + $0x62] sm:$0xff]
      %v1668 = vld [vmem:[%s1328 + $0x72] sm:$0xff]
      %v1669 = vld [vmem:[#allocation3] sm:$0xff]
      %v1670 = vld [vmem:[#allocation3 + $0x8] sm:$0xff]
      %v1671 = vld [vmem:[#allocation3 + $0x10] sm:$0xff]
      %v1672 = vld [vmem:[#allocation3 + $0x18] sm:$0xff]
      %v1673 = vld [vmem:[#allocation3 + $0x20] sm:$0xff]
      %v1674 = vld [vmem:[#allocation3 + $0x28] sm:$0xff]
      %v1675 = vld [vmem:[#allocation3 + $0x30] sm:$0xff]
      %v1676 = vld [vmem:[#allocation3 + $0x38] sm:$0xff]
      %v1677 = vpack.c.bf16 %v1662, %v1661
      %v1678 = vpack.c.bf16 %v1664, %v1663
      %v1679 = vpack.c.bf16 %v1666, %v1665
      %v1680 = vpack.c.bf16 %v1668, %v1667
      %s1681 = scalar_lea.vmem %s3, 512
      %v1682 = vld [vmem:[%s1681] sm:$0xf]
      %v1683 = vld [vmem:[%s1681 + $0x4] sm:$0xf]
      %v1684 = vld [vmem:[%s1681 + $0x8] sm:$0xf]
      %v1685 = vld [vmem:[%s1681 + $0xc] sm:$0xf]
      %v1686 = vld [vmem:[%s1681 + $0x10] sm:$0xf]
      %v1687 = vld [vmem:[%s1681 + $0x14] sm:$0xf]
      %v1688 = vld [vmem:[%s1681 + $0x18] sm:$0xf]
      %v1689 = vld [vmem:[%s1681 + $0x1c] sm:$0xf]
      %v1690 = vld [vmem:[%s1681 + $0x20] sm:$0xf]
      %v1691 = vld [vmem:[%s1681 + $0x24] sm:$0xf]
      %v1692 = vld [vmem:[%s1681 + $0x28] sm:$0xf]
      %v1693 = vld [vmem:[%s1681 + $0x2c] sm:$0xf]
      %v1694 = vld [vmem:[%s1681 + $0x30] sm:$0xf]
      %v1695 = vld [vmem:[%s1681 + $0x34] sm:$0xf]
      %v1696 = vld [vmem:[%s1681 + $0x38] sm:$0xf]
      %v1697 = vld [vmem:[%s1681 + $0x3c] sm:$0xf]
      %v1714 = vunpack.c.l.b16 %v1682
      %v1715 = vunpack.c.l.b16 %v1683
      %v1716 = vunpack.c.l.b16 %v1684
      %v1717 = vunpack.c.l.b16 %v1685
      %v1718 = vunpack.c.l.b16 %v1686
      %v1719 = vunpack.c.l.b16 %v1687
      %v1720 = vunpack.c.l.b16 %v1688
      %v1721 = vunpack.c.l.b16 %v1689
      %v1722 = vunpack.c.l.b16 %v1690
      %v1723 = vunpack.c.l.b16 %v1691
      %v1724 = vunpack.c.l.b16 %v1692
      %v1725 = vunpack.c.l.b16 %v1693
      %v1726 = vunpack.c.l.b16 %v1694
      %v1727 = vunpack.c.l.b16 %v1695
      %v1728 = vunpack.c.l.b16 %v1696
      %v1729 = vunpack.c.l.b16 %v1697
      %v1730 = vpack.c.b16 %v1715, %v1714
      %v1731 = vpack.c.b16 %v1717, %v1716
      %v1732 = vpack.c.b16 %v1719, %v1718
      %v1733 = vpack.c.b16 %v1721, %v1720
      %v1734 = vpack.c.b16 %v1723, %v1722
      %v1735 = vpack.c.b16 %v1725, %v1724
      %v1736 = vpack.c.b16 %v1727, %v1726
      %v1737 = vpack.c.b16 %v1729, %v1728
      %1746 = vmatprep.subr.bf16.mxu0 0
      %1747 = vmatpush1.bf16.msra.mxu0 %v1730
      %1748 = vmatprep.subr.bf16.mxu0 0
      %1749 = vmatpush1.bf16.msra.mxu0 %v1731
      %1750 = vmatprep.subr.bf16.mxu0 0
      %1751 = vmatpush1.bf16.msra.mxu0 %v1732
      %1752 = vmatprep.subr.bf16.mxu0 0
      %1753 = vmatpush1.bf16.msra.mxu0 %v1733
      %1754 = vmatprep.subr.bf16.mxu0 0
      %1755 = vmatpush1.bf16.msra.mxu0 %v1734
      %1756 = vmatprep.subr.bf16.mxu0 0
      %1757 = vmatpush1.bf16.msra.mxu0 %v1735
      %1758 = vmatprep.subr.bf16.mxu0 0
      %1759 = vmatpush1.bf16.msra.mxu0 %v1736
      %1760 = vmatprep.subr.bf16.mxu0 0
      %1761 = vmatpush1.bf16.msra.mxu0 %v1737
      %1762 = vmatprep.subr.bf16.mxu0 0
      %1763 = vmatpush1.bf16.msra.mxu0 0
      %1764 = vmatprep.subr.bf16.mxu0 0
      %1765 = vmatpush1.bf16.msra.mxu0 0
      %1766 = vmatprep.subr.bf16.mxu0 0
      %1767 = vmatpush1.bf16.msra.mxu0 0
      %1768 = vmatprep.subr.bf16.mxu0 0
      %1769 = vmatpush1.bf16.msra.mxu0 0
      %1770 = vmatprep.subr.bf16.mxu0 0
      %1771 = vmatpush1.bf16.msra.mxu0 0
      %1772 = vmatprep.subr.bf16.mxu0 0
      %1773 = vmatpush1.bf16.msra.mxu0 0
      %1774 = vmatprep.subr.bf16.mxu0 0
      %1775 = vmatpush1.bf16.msra.mxu0 0
      %1776 = vmatprep.subr.bf16.mxu0 0
      %1777 = vmatpush1.bf16.msra.mxu0 0
      %1778 = vmatprep.mubr.bf16.mxu0 0
      %1779 = vmatmul.mubr.bf16.gmra.mrb[0].mxu0 %v1677
      %v1780 = vpop.f32.mrb[0].mxu0
      %v1781 = vadd.f32 0.0, %v1780
      %v1782 = vpop.f32.mrb[0].mxu0
      %v1783 = vpop.f32.mrb[0].mxu0
      %v1784 = vadd.f32 0.0, %v1783
      %v1785 = vpop.f32.mrb[0].mxu0
      %1786 = vmatprep.mubr.bf16.mxu0 0
      %1787 = vmatmul.mubr.bf16.gmra.mrb[0].mxu0 %v1678
      %v1788 = vpop.f32.mrb[0].mxu0
      %v1789 = vadd.f32 0.0, %v1788
      %v1790 = vpop.f32.mrb[0].mxu0
      %v1791 = vpop.f32.mrb[0].mxu0
      %v1792 = vadd.f32 0.0, %v1791
      %v1793 = vpop.f32.mrb[0].mxu0
      %1794 = vmatprep.mubr.bf16.mxu0 0
      %1795 = vmatmul.mubr.bf16.gmra.mrb[0].mxu0 %v1679
      %v1796 = vpop.f32.mrb[0].mxu0
      %v1797 = vadd.f32 0.0, %v1796
      %v1798 = vpop.f32.mrb[0].mxu0
      %v1799 = vpop.f32.mrb[0].mxu0
      %v1800 = vadd.f32 0.0, %v1799
      %v1801 = vpop.f32.mrb[0].mxu0
      %1802 = vmatprep.mubr.bf16.mxu0 0
      %1803 = vmatmul.mubr.bf16.gmra.mrb[0].mxu0 %v1680
      %v1804 = vpop.f32.mrb[0].mxu0
      %v1805 = vadd.f32 0.0, %v1804
      %v1806 = vpop.f32.mrb[0].mxu0
      %v1807 = vpop.f32.mrb[0].mxu0
      %v1808 = vadd.f32 0.0, %v1807
      %v1809 = vpop.f32.mrb[0].mxu0
      %1810 = vdwg.mxu0
      %v1811 = vadd.f32 %v1669, %v1781
      %v1812 = vadd.f32 %v1670, %v1784
      %v1813 = vadd.f32 %v1671, %v1789
      %v1814 = vadd.f32 %v1672, %v1792
      %v1815 = vadd.f32 %v1673, %v1797
      %v1816 = vadd.f32 %v1674, %v1800
      %v1817 = vadd.f32 %v1675, %v1805
      %v1818 = vadd.f32 %v1676, %v1808
      %1819 = vst [vmem:[#allocation3] sm:$0xff] %v1811
      %1820 = vst [vmem:[#allocation3 + $0x8] sm:$0xff] %v1812
      %1821 = vst [vmem:[#allocation3 + $0x10] sm:$0xff] %v1813
      %1822 = vst [vmem:[#allocation3 + $0x18] sm:$0xff] %v1814
      %1823 = vst [vmem:[#allocation3 + $0x20] sm:$0xff] %v1815
      %1824 = vst [vmem:[#allocation3 + $0x28] sm:$0xff] %v1816
      %1825 = vst [vmem:[#allocation3 + $0x30] sm:$0xff] %v1817
      %1826 = vst [vmem:[#allocation3 + $0x38] sm:$0xff] %v1818
      %v1827 = vld [vmem:[#allocation3] sm:$0xff]
      %v1828 = vld [vmem:[#allocation3 + $0x8] sm:$0xff]
      %v1829 = vld [vmem:[#allocation3 + $0x10] sm:$0xff]
      %v1830 = vld [vmem:[#allocation3 + $0x18] sm:$0xff]
      %v1831 = vld [vmem:[#allocation3 + $0x20] sm:$0xff]
      %v1832 = vld [vmem:[#allocation3 + $0x28] sm:$0xff]
      %v1833 = vld [vmem:[#allocation3 + $0x30] sm:$0xff]
      %v1834 = vld [vmem:[#allocation3 + $0x38] sm:$0xff]
      %v1835 = vpack.c.bf16 %v1827, %v1827
      %v1836 = vpack.c.bf16 %v1828, %v1828
      %v1837 = vpack.c.bf16 %v1829, %v1829
      %v1838 = vpack.c.bf16 %v1830, %v1830
      %v1839 = vpack.c.bf16 %v1831, %v1831
      %v1840 = vpack.c.bf16 %v1832, %v1832
      %v1841 = vpack.c.bf16 %v1833, %v1833
      %v1842 = vpack.c.bf16 %v1834, %v1834
      %1843 = vst [vmem:[%s231] sm:$0xf] %v1835
      %1844 = vst [vmem:[%s231 + $0x4] sm:$0xf] %v1836
      %1845 = vst [vmem:[%s231 + $0x8] sm:$0xf] %v1837
      %1846 = vst [vmem:[%s231 + $0xc] sm:$0xf] %v1838
      %1847 = vst [vmem:[%s231 + $0x10] sm:$0xf] %v1839
      %1848 = vst [vmem:[%s231 + $0x14] sm:$0xf] %v1840
      %1849 = vst [vmem:[%s231 + $0x18] sm:$0xf] %v1841
      %1850 = vst [vmem:[%s231 + $0x1c] sm:$0xf] %v1842
      %v1851 = vadd.f32 %v1827, %v1828
      %v1852 = vadd.f32 %v1851, %v1829
      %v1853 = vadd.f32 %v1852, %v1830
      %v1854 = vadd.f32 %v1853, %v1831
      %v1855 = vadd.f32 %v1854, %v1832
      %v1856 = vadd.f32 %v1855, %v1833
      %v1857 = vadd.f32 %v1856, %v1834
      %v1858 = vrot.slane %v1857, 4
      %v1859 = vadd.f32 %v1857, %v1858
      %v1860 = vrot.slane %v1859, 2
      %v1861 = vadd.f32 %v1859, %v1860
      %v1862 = vrot.slane %v1861, 1
      %v1863 = vadd.f32 %v1861, %v1862
      %1864 = vst [vmem:[%s235] sm:$0x1] %v1863
      %v1865 = vmul.f32 %v1827, %v1827
      %v1866 = vmul.f32 %v1828, %v1828
      %v1867 = vmul.f32 %v1829, %v1829
      %v1868 = vmul.f32 %v1830, %v1830
      %v1869 = vmul.f32 %v1831, %v1831
      %v1870 = vmul.f32 %v1832, %v1832
      %v1871 = vmul.f32 %v1833, %v1833
      %v1872 = vmul.f32 %v1834, %v1834
      %v1873 = vadd.f32 %v1865, %v1866
      %v1874 = vadd.f32 %v1873, %v1867
      %v1875 = vadd.f32 %v1874, %v1868
      %v1876 = vadd.f32 %v1875, %v1869
      %v1877 = vadd.f32 %v1876, %v1870
      %v1878 = vadd.f32 %v1877, %v1871
      %v1879 = vadd.f32 %v1878, %v1872
      %v1880 = vrot.slane %v1879, 4
      %v1881 = vadd.f32 %v1879, %v1880
      %v1882 = vrot.slane %v1881, 2
      %v1883 = vadd.f32 %v1881, %v1882
      %v1884 = vrot.slane %v1883, 1
      %v1885 = vadd.f32 %v1883, %v1884
      %1886 = vst [vmem:[%s235 + $0x1] sm:$0x1] %v1885
      %p1887 = scmp.lt.s32.totalorder %s17, 1
      %s1888 = scalar_select %p1887, %s17, 1
      %s1889 = smul.addr %s1888, 8
      %s1890 = smul.addr %s1889, 4
      %s1891 = scalar_lea.vmem %s4, %s1890
      %p1892 = scmp.lt.s32.totalorder %s17, 1
      %s1893 = scalar_select %p1892, %s17, 1
      %s1894 = smul.addr %s1893, 2
      %s1895 = scalar_lea.vmem %s5, %s1894
      // Predicated region
      $region37: #{basic_block_forward.4} parent=35 // pred_check
        %p1896 = pneg %p124
      $region38: #{basic_block_forward.4} parent=35 // pred_check_branch
        %1898 = sbr.rel (%p1896) target = $region40
      $region39: #{basic_block_forward.4} parent=35 // pred_region
        _
      $region40: #{basic_block_forward.4} parent=35 // pred_fallthru
        _
      // Predicated region
      $region41: #{basic_block_forward.4} parent=35 // pred_check
        %p1899 = pneg %p150
      $region42: #{basic_block_forward.4} parent=35 // pred_check_branch
        %1901 = sbr.rel (%p1899) target = $region44
      $region43: #{basic_block_forward.4} parent=35 // pred_region
        _
      $region44: #{basic_block_forward.4} parent=35 // pred_fallthru
        _
    $region36: #{basic_block_forward.4} parent=5 // pred_fallthru
      _
    %p1902 = scmp.le.s32.totalorder 2, %s12
    // Predicated region
    $region45: #{basic_block_forward.4} parent=5 // pred_check
      %p1903 = pneg %p1902
    $region46: #{basic_block_forward.4} parent=5 // pred_check_branch
      %1905 = sbr.rel (%p1903) target = $region48
    $region47: #{basic_block_forward.4} parent=5 // pred_region
      %s1906 = ssub.s32 %s12, 2
      // Predicated region
      $region49: #{basic_block_forward.4} parent=47 // pred_check
        %p1907 = pneg %p130
      $region50: #{basic_block_forward.4} parent=47 // pred_check_branch
        %1909 = sbr.rel (%p1907) target = $region52
      $region51: #{basic_block_forward.4} parent=47 // pred_region
        %p1910 = scmp.lt.s32.totalorder %s18, 1
        %s1911 = scalar_select %p1910, %s18, 1
        %s1912 = smul.addr %s1911, 8
        %s1913 = smul.addr %s1912, 4
        %s1914 = scalar_lea.vmem %s4, %s1913
      $region52: #{basic_block_forward.4} parent=47 // pred_fallthru
        _
      // Predicated region
      $region53: #{basic_block_forward.4} parent=47 // pred_check
        %p1915 = pneg %p156
      $region54: #{basic_block_forward.4} parent=47 // pred_check_branch
        %1917 = sbr.rel (%p1915) target = $region56
      $region55: #{basic_block_forward.4} parent=47 // pred_region
        %p1918 = scmp.lt.s32.totalorder %s18, 1
        %s1919 = scalar_select %p1918, %s18, 1
        %s1920 = smul.addr %s1919, 2
        %s1921 = scalar_lea.vmem %s5, %s1920
      $region56: #{basic_block_forward.4} parent=47 // pred_fallthru
        _
    $region48: #{basic_block_forward.4} parent=5 // pred_fallthru
      _
  $region6: #{basic_block_forward.4} parent=0 // loop_footer
    %s16 = sadd.s32 1, %s12
  $region7: #{basic_block_forward.4} parent=0 // loop_footer_branch
    %11 = sbr.rel target = $region3
  $region8: #{basic_block_forward.4} parent=0 // loop_exit
    _

</llo_original>
